<compile_context>
chip_gen: v7x
topology: tpu7x:2x2x1
jax: 0.10.0
libtpu: 0.0.40
codegen_flags: <defaults>
</compile_context>

<pallas_src>
import jax
import jax.numpy as jnp
from jax.experimental import pallas as pl
from jax.experimental.pallas import tpu as pltpu


def _round_up(n, m):
    return ((n + m - 1) // m) * m


# ----------------------------- Pallas kernel --------------------------------
def _autoencoder_kernel(x_ref, eps_ref,
                        w1_ref, b1_ref,
                        wmulv_ref, bmulv_ref,
                        w3_ref, b3_ref,
                        w4_ref, b4_ref,
                        z_ref, xhat_ref):
    bf16 = jnp.bfloat16
    f32 = jnp.float32
    Zp = eps_ref.shape[-1]

    # ---- encoder ----
    h1 = jnp.dot(x_ref[...].astype(bf16), w1_ref[...],
                 preferred_element_type=f32) + b1_ref[...]
    h1 = jnp.maximum(h1, 0.0)                                   # ReLU

    # fused mu | logvar projection: one (H, 2*Zp) matmul instead of two 32-wide ones
    mulv = jnp.dot(h1.astype(bf16), wmulv_ref[...],
                   preferred_element_type=f32) + bmulv_ref[...]
    mu = mulv[:, :Zp]
    logvar = mulv[:, Zp:]
    std = jnp.exp(0.5 * logvar)
    z = mu + std * eps_ref[...]                                 # reparameterization
    z_ref[...] = z

    # ---- decoder ----
    h3 = jnp.dot(z.astype(bf16), w3_ref[...],
                 preferred_element_type=f32) + b3_ref[...]
    h3 = jnp.maximum(h3, 0.0)                                   # ReLU
    logits = jnp.dot(h3.astype(bf16), w4_ref[...],
                     preferred_element_type=f32) + b4_ref[...]
    xhat_ref[...] = jax.nn.sigmoid(logits)


# ------------------------------- wrapper -------------------------------------
def autoencoder_forward(x, eps, params, *, tb=128):
    """Returns (z, xhat), matching the PyTorch module's forward.

    x:   (B, D) float32
    eps: (B, Z) float32 (reparameterization noise)
    """
    B, D = x.shape
    H = params["w1"].shape[1]
    Z = params["wmu"].shape[1]

    bf16 = jnp.bfloat16
    f32 = jnp.float32

    # lane-aligned padded sizes
    Dp = _round_up(D, 128)
    Zp = _round_up(Z, 128)
    Bp = _round_up(B, tb)
    n_tiles = Bp // tb

    # ---- host-side layout plumbing (zero padding, bf16 weights, fused mu|logvar) ----
    xp = jnp.zeros((Bp, Dp), f32).at[:B, :D].set(x)
    epsp = jnp.zeros((Bp, Zp), f32).at[:B, :Z].set(eps)

    w1p = jnp.zeros((Dp, H), bf16).at[:D, :].set(params["w1"].astype(bf16))
    b1 = params["b1"].reshape(1, H).astype(f32)

    wmulv = (jnp.zeros((H, 2 * Zp), bf16)
             .at[:, :Z].set(params["wmu"].astype(bf16))
             .at[:, Zp:Zp + Z].set(params["wlv"].astype(bf16)))
    bmulv = (jnp.zeros((1, 2 * Zp), f32)
             .at[:, :Z].set(params["bmu"].reshape(1, Z))
             .at[:, Zp:Zp + Z].set(params["blv"].reshape(1, Z)))

    w3p = jnp.zeros((Zp, H), bf16).at[:Z, :].set(params["w3"].astype(bf16))
    b3 = params["b3"].reshape(1, H).astype(f32)

    w4p = jnp.zeros((H, Dp), bf16).at[:, :D].set(params["w4"].astype(bf16))
    b4p = jnp.zeros((1, Dp), f32).at[:, :D].set(params["b4"].reshape(1, D))

    # batch-tiled activations / outputs; weights VMEM-resident (constant index_map)
    grid_spec = pltpu.PrefetchScalarGridSpec(
        num_scalar_prefetch=0,
        grid=(n_tiles,),
        in_specs=[
            pl.BlockSpec((tb, Dp), lambda i: (i, 0)),       # x tile
            pl.BlockSpec((tb, Zp), lambda i: (i, 0)),       # eps tile
            pl.BlockSpec((Dp, H), lambda i: (0, 0)),        # w1   (resident)
            pl.BlockSpec((1, H), lambda i: (0, 0)),         # b1
            pl.BlockSpec((H, 2 * Zp), lambda i: (0, 0)),    # wmu|wlv fused
            pl.BlockSpec((1, 2 * Zp), lambda i: (0, 0)),    # bmu|blv fused
            pl.BlockSpec((Zp, H), lambda i: (0, 0)),        # w3
            pl.BlockSpec((1, H), lambda i: (0, 0)),         # b3
            pl.BlockSpec((H, Dp), lambda i: (0, 0)),        # w4
            pl.BlockSpec((1, Dp), lambda i: (0, 0)),        # b4
        ],
        out_specs=(
            pl.BlockSpec((tb, Zp), lambda i: (i, 0)),       # z tile (lane-dense, padded)
            pl.BlockSpec((tb, Dp), lambda i: (i, 0)),       # xhat tile
        ),
    )

    z_full, xhat_full = pl.pallas_call(
        _autoencoder_kernel,
        out_shape=(jax.ShapeDtypeStruct((Bp, Zp), f32),
                   jax.ShapeDtypeStruct((Bp, Dp), f32)),
        grid_spec=grid_spec,
        compiler_params=pltpu.CompilerParams(
            dimension_semantics=("parallel",)),
    )(xp, epsp, w1p, b1, wmulv, bmulv, w3p, b3, w4p, b4p)

    return z_full[:B, :Z], xhat_full[:B, :D]


def init_params(key, D, H, Z):
    """Deterministic small-scale init (weights stored as (in, out))."""
    ks = jax.random.split(key, 6)
    scale = 0.05
    return {
        "w1":  scale * jax.random.normal(ks[0], (D, H), jnp.float32),
        "b1":  jnp.zeros((1, H), jnp.float32),
        "wmu": scale * jax.random.normal(ks[1], (H, Z), jnp.float32),
        "bmu": jnp.zeros((1, Z), jnp.float32),
        "wlv": scale * jax.random.normal(ks[2], (H, Z), jnp.float32),
        "blv": jnp.zeros((1, Z), jnp.float32),
        "w3":  scale * jax.random.normal(ks[3], (Z, H), jnp.float32),
        "b3":  jnp.zeros((1, H), jnp.float32),
        "w4":  scale * jax.random.normal(ks[4], (H, D), jnp.float32),
        "b4":  jnp.zeros((1, D), jnp.float32),
    }


def _reference_forward(x, eps, p):
    """Pure-JAX reference mirroring the kernel numerics (bf16 matmul inputs, f32 accum)."""
    bf = jnp.bfloat16
    f32 = jnp.float32
    h1 = jnp.maximum(
        jnp.dot(x.astype(bf), p["w1"].astype(bf), preferred_element_type=f32) + p["b1"], 0.0)
    mu = jnp.dot(h1.astype(bf), p["wmu"].astype(bf), preferred_element_type=f32) + p["bmu"]
    logvar = jnp.dot(h1.astype(bf), p["wlv"].astype(bf), preferred_element_type=f32) + p["blv"]
    z = mu + jnp.exp(0.5 * logvar) * eps
    h3 = jnp.maximum(
        jnp.dot(z.astype(bf), p["w3"].astype(bf), preferred_element_type=f32) + p["b3"], 0.0)
    xhat = jax.nn.sigmoid(
        jnp.dot(h3.astype(bf), p["w4"].astype(bf), preferred_element_type=f32) + p["b4"])
    return z, xhat


if __name__ == "__main__":
    # MNIST-like shapes: flattened image 784, hidden 256, latent 32; batch 256 tiled by 128.
    B, D, H, Z = 256, 784, 256, 32

    key = jax.random.PRNGKey(0)
    k_x, k_eps, k_p = jax.random.split(key, 3)

    x = jax.nn.sigmoid(jax.random.normal(k_x, (B, D), jnp.float32))  # pixel-like [0,1]
    eps = jax.random.normal(k_eps, (B, Z), jnp.float32)              # fixed reparam noise
    params = init_params(k_p, D, H, Z)

    z, xhat = autoencoder_forward(x, eps, params, tb=128)
    z = jax.block_until_ready(z)
    xhat = jax.block_until_ready(xhat)

    # correctness check against a pure-JAX reference with matching precision
    z_ref, xhat_ref = _reference_forward(x, eps, params)
    assert z.shape == (B, Z) and xhat.shape == (B, D)
    assert jnp.allclose(z, z_ref, atol=2e-3, rtol=2e-3), float(jnp.max(jnp.abs(z - z_ref)))
    assert jnp.allclose(xhat, xhat_ref, atol=2e-3, rtol=2e-3), float(jnp.max(jnp.abs(xhat - xhat_ref)))

    print("KERNEL_OK")
</pallas_src>

<mosaic_0001>
module attributes {stable_mosaic.version = 11 : i64} {
  func.func @_autoencoder_kernel(%arg0: i32, %arg1: memref<128x896xf32, #tpu.memory_space<vmem>>, %arg2: memref<128x128xf32, #tpu.memory_space<vmem>>, %arg3: memref<896x256xbf16, #tpu.memory_space<vmem>>, %arg4: memref<1x256xf32, #tpu.memory_space<vmem>>, %arg5: memref<256x256xbf16, #tpu.memory_space<vmem>>, %arg6: memref<1x256xf32, #tpu.memory_space<vmem>>, %arg7: memref<128x256xbf16, #tpu.memory_space<vmem>>, %arg8: memref<1x256xf32, #tpu.memory_space<vmem>>, %arg9: memref<256x896xbf16, #tpu.memory_space<vmem>>, %arg10: memref<1x896xf32, #tpu.memory_space<vmem>>, %arg11: memref<128x128xf32, #tpu.memory_space<vmem>>, %arg12: memref<128x896xf32, #tpu.memory_space<vmem>>) attributes {dimension_semantics = [#tpu.dimension_semantics<parallel>], iteration_bounds = array<i64: 2>, scalar_prefetch = 0 : i64, scratch_operands = 0 : i64, tpu.core_type = #tpu.core_type<tc>, window_params = [{transform_indices = @transform_0, window_bounds = array<i64: 128, 896>}, {transform_indices = @transform_1, window_bounds = array<i64: 128, 128>}, {pipeline_mode = #tpu.pipeline_mode<synchronous>, transform_indices = @transform_2, window_bounds = array<i64: 896, 256>}, {pipeline_mode = #tpu.pipeline_mode<synchronous>, transform_indices = @transform_3, window_bounds = array<i64: 1, 256>}, {pipeline_mode = #tpu.pipeline_mode<synchronous>, transform_indices = @transform_4, window_bounds = array<i64: 256, 256>}, {pipeline_mode = #tpu.pipeline_mode<synchronous>, transform_indices = @transform_5, window_bounds = array<i64: 1, 256>}, {pipeline_mode = #tpu.pipeline_mode<synchronous>, transform_indices = @transform_6, window_bounds = array<i64: 128, 256>}, {pipeline_mode = #tpu.pipeline_mode<synchronous>, transform_indices = @transform_7, window_bounds = array<i64: 1, 256>}, {pipeline_mode = #tpu.pipeline_mode<synchronous>, transform_indices = @transform_8, window_bounds = array<i64: 256, 896>}, {pipeline_mode = #tpu.pipeline_mode<synchronous>, transform_indices = @transform_9, window_bounds = array<i64: 1, 896>}, {transform_indices = @transform_10, window_bounds = array<i64: 128, 128>}, {transform_indices = @transform_11, window_bounds = array<i64: 128, 896>}]} {
    %c0 = arith.constant 0 : index
    %c0_0 = arith.constant 0 : index
    %0 = vector.load %arg1[%c0, %c0_0] : memref<128x896xf32, #tpu.memory_space<vmem>>, vector<128x896xf32>
    %1 = arith.truncf %0 : vector<128x896xf32> to vector<128x896xbf16>
    %c0_1 = arith.constant 0 : index
    %c0_2 = arith.constant 0 : index
    %2 = vector.load %arg3[%c0_1, %c0_2] : memref<896x256xbf16, #tpu.memory_space<vmem>>, vector<896x256xbf16>
    %cst = arith.constant dense<0.000000e+00> : vector<128x256xf32>
    %3 = tpu.matmul %1, %2, %cst {dimension_numbers = #tpu.dot_dimension_numbers<[1], [0], [0], [1], [0, 0, 1, 1], [], []>} : vector<128x896xbf16>, vector<896x256xbf16>, vector<128x256xf32> -> vector<128x256xf32>
    %c0_3 = arith.constant 0 : index
    %c0_4 = arith.constant 0 : index
    %4 = vector.load %arg4[%c0_3, %c0_4] : memref<1x256xf32, #tpu.memory_space<vmem>>, vector<1x256xf32>
    %5 = vector.broadcast %4 : vector<1x256xf32> to vector<128x256xf32>
    %6 = arith.addf %3, %5 : vector<128x256xf32>
    %cst_5 = arith.constant 0.000000e+00 : f32
    %7 = vector.broadcast %cst_5 : f32 to vector<128x256xf32>
    %8 = arith.maximumf %6, %7 : vector<128x256xf32>
    %9 = arith.truncf %8 : vector<128x256xf32> to vector<128x256xbf16>
    %c0_6 = arith.constant 0 : index
    %c0_7 = arith.constant 0 : index
    %10 = vector.load %arg5[%c0_6, %c0_7] : memref<256x256xbf16, #tpu.memory_space<vmem>>, vector<256x256xbf16>
    %cst_8 = arith.constant dense<0.000000e+00> : vector<128x256xf32>
    %11 = tpu.matmul %9, %10, %cst_8 {dimension_numbers = #tpu.dot_dimension_numbers<[1], [0], [0], [1], [0, 0, 1, 1], [], []>} : vector<128x256xbf16>, vector<256x256xbf16>, vector<128x256xf32> -> vector<128x256xf32>
    %c0_9 = arith.constant 0 : index
    %c0_10 = arith.constant 0 : index
    %12 = vector.load %arg6[%c0_9, %c0_10] : memref<1x256xf32, #tpu.memory_space<vmem>>, vector<1x256xf32>
    %13 = vector.broadcast %12 : vector<1x256xf32> to vector<128x256xf32>
    %14 = arith.addf %11, %13 : vector<128x256xf32>
    %15 = vector.extract_strided_slice %14 {offsets = [0, 0], sizes = [128, 128], strides = [1, 1]} : vector<128x256xf32> to vector<128x128xf32>
    %16 = vector.extract_strided_slice %14 {offsets = [0, 128], sizes = [128, 128], strides = [1, 1]} : vector<128x256xf32> to vector<128x128xf32>
    %cst_11 = arith.constant 5.000000e-01 : f32
    %17 = vector.broadcast %cst_11 : f32 to vector<128x128xf32>
    %18 = arith.mulf %17, %16 : vector<128x128xf32>
    %19 = math.exp %18 : vector<128x128xf32>
    %c0_12 = arith.constant 0 : index
    %c0_13 = arith.constant 0 : index
    %20 = vector.load %arg2[%c0_12, %c0_13] : memref<128x128xf32, #tpu.memory_space<vmem>>, vector<128x128xf32>
    %21 = arith.mulf %19, %20 : vector<128x128xf32>
    %22 = arith.addf %15, %21 : vector<128x128xf32>
    %c0_14 = arith.constant 0 : index
    %c0_15 = arith.constant 0 : index
    %23 = vector.load %arg11[%c0_14, %c0_15] : memref<128x128xf32, #tpu.memory_space<vmem>>, vector<128x128xf32>
    tpu.vector_store %arg11[%c0_14, %c0_15], %22 {strides = array<i32>} : memref<128x128xf32, #tpu.memory_space<vmem>>, vector<128x128xf32>,
    %24 = arith.truncf %22 : vector<128x128xf32> to vector<128x128xbf16>
    %c0_16 = arith.constant 0 : index
    %c0_17 = arith.constant 0 : index
    %25 = vector.load %arg7[%c0_16, %c0_17] : memref<128x256xbf16, #tpu.memory_space<vmem>>, vector<128x256xbf16>
    %cst_18 = arith.constant dense<0.000000e+00> : vector<128x256xf32>
    %26 = tpu.matmul %24, %25, %cst_18 {dimension_numbers = #tpu.dot_dimension_numbers<[1], [0], [0], [1], [0, 0, 1, 1], [], []>} : vector<128x128xbf16>, vector<128x256xbf16>, vector<128x256xf32> -> vector<128x256xf32>
    %c0_19 = arith.constant 0 : index
    %c0_20 = arith.constant 0 : index
    %27 = vector.load %arg8[%c0_19, %c0_20] : memref<1x256xf32, #tpu.memory_space<vmem>>, vector<1x256xf32>
    %28 = vector.broadcast %27 : vector<1x256xf32> to vector<128x256xf32>
    %29 = arith.addf %26, %28 : vector<128x256xf32>
    %cst_21 = arith.constant 0.000000e+00 : f32
    %30 = vector.broadcast %cst_21 : f32 to vector<128x256xf32>
    %31 = arith.maximumf %29, %30 : vector<128x256xf32>
    %32 = arith.truncf %31 : vector<128x256xf32> to vector<128x256xbf16>
    %c0_22 = arith.constant 0 : index
    %c0_23 = arith.constant 0 : index
    %33 = vector.load %arg9[%c0_22, %c0_23] : memref<256x896xbf16, #tpu.memory_space<vmem>>, vector<256x896xbf16>
    %cst_24 = arith.constant dense<0.000000e+00> : vector<128x896xf32>
    %34 = tpu.matmul %32, %33, %cst_24 {dimension_numbers = #tpu.dot_dimension_numbers<[1], [0], [0], [1], [0, 0, 1, 1], [], []>} : vector<128x256xbf16>, vector<256x896xbf16>, vector<128x896xf32> -> vector<128x896xf32>
    %c0_25 = arith.constant 0 : index
    %c0_26 = arith.constant 0 : index
    %35 = vector.load %arg10[%c0_25, %c0_26] : memref<1x896xf32, #tpu.memory_space<vmem>>, vector<1x896xf32>
    %36 = vector.broadcast %35 : vector<1x896xf32> to vector<128x896xf32>
    %37 = arith.addf %34, %36 : vector<128x896xf32>
    %38 = arith.negf %37 : vector<128x896xf32>
    %39 = math.exp %38 : vector<128x896xf32>
    %cst_27 = arith.constant 1.000000e+00 : f32
    %40 = vector.broadcast %cst_27 : f32 to vector<128x896xf32>
    %41 = arith.addf %40, %39 : vector<128x896xf32>
    %42 = arith.divf %40, %41 : vector<128x896xf32>
    %c0_28 = arith.constant 0 : index
    %c0_29 = arith.constant 0 : index
    %43 = vector.load %arg12[%c0_28, %c0_29] : memref<128x896xf32, #tpu.memory_space<vmem>>, vector<128x896xf32>
    tpu.vector_store %arg12[%c0_28, %c0_29], %42 {strides = array<i32>} : memref<128x896xf32, #tpu.memory_space<vmem>>, vector<128x896xf32>,
    return
  }
  func.func @transform_0(%arg0: i32) -> (i32, i32) {
    %c0_i32 = arith.constant 0 : i32
    %c0_i32_0 = arith.constant 0 : i32
    return %arg0, %c0_i32 : i32, i32
  }
  func.func @transform_1(%arg0: i32) -> (i32, i32) {
    %c0_i32 = arith.constant 0 : i32
    %c0_i32_0 = arith.constant 0 : i32
    return %arg0, %c0_i32 : i32, i32
  }
  func.func @transform_2(%arg0: i32) -> (i32, i32) {
    %c0_i32 = arith.constant 0 : i32
    %c0_i32_0 = arith.constant 0 : i32
    %c0_i32_1 = arith.constant 0 : i32
    return %c0_i32, %c0_i32_0 : i32, i32
  }
  func.func @transform_3(%arg0: i32) -> (i32, i32) {
    %c0_i32 = arith.constant 0 : i32
    %c0_i32_0 = arith.constant 0 : i32
    %c0_i32_1 = arith.constant 0 : i32
    return %c0_i32, %c0_i32_0 : i32, i32
  }
  func.func @transform_4(%arg0: i32) -> (i32, i32) {
    %c0_i32 = arith.constant 0 : i32
    %c0_i32_0 = arith.constant 0 : i32
    %c0_i32_1 = arith.constant 0 : i32
    return %c0_i32, %c0_i32_0 : i32, i32
  }
  func.func @transform_5(%arg0: i32) -> (i32, i32) {
    %c0_i32 = arith.constant 0 : i32
    %c0_i32_0 = arith.constant 0 : i32
    %c0_i32_1 = arith.constant 0 : i32
    return %c0_i32, %c0_i32_0 : i32, i32
  }
  func.func @transform_6(%arg0: i32) -> (i32, i32) {
    %c0_i32 = arith.constant 0 : i32
    %c0_i32_0 = arith.constant 0 : i32
    %c0_i32_1 = arith.constant 0 : i32
    return %c0_i32, %c0_i32_0 : i32, i32
  }
  func.func @transform_7(%arg0: i32) -> (i32, i32) {
    %c0_i32 = arith.constant 0 : i32
    %c0_i32_0 = arith.constant 0 : i32
    %c0_i32_1 = arith.constant 0 : i32
    return %c0_i32, %c0_i32_0 : i32, i32
  }
  func.func @transform_8(%arg0: i32) -> (i32, i32) {
    %c0_i32 = arith.constant 0 : i32
    %c0_i32_0 = arith.constant 0 : i32
    %c0_i32_1 = arith.constant 0 : i32
    return %c0_i32, %c0_i32_0 : i32, i32
  }
  func.func @transform_9(%arg0: i32) -> (i32, i32) {
    %c0_i32 = arith.constant 0 : i32
    %c0_i32_0 = arith.constant 0 : i32
    %c0_i32_1 = arith.constant 0 : i32
    return %c0_i32, %c0_i32_0 : i32, i32
  }
  func.func @transform_10(%arg0: i32) -> (i32, i32) {
    %c0_i32 = arith.constant 0 : i32
    %c0_i32_0 = arith.constant 0 : i32
    return %arg0, %c0_i32 : i32, i32
  }
  func.func @transform_11(%arg0: i32) -> (i32, i32) {
    %c0_i32 = arith.constant 0 : i32
    %c0_i32_0 = arith.constant 0 : i32
    return %arg0, %c0_i32 : i32, i32
  }
}

</mosaic_0001>

<llo_original>
// kernel: tpu_custom_call.1
$region0: #{tpu_custom_call.1}
  #allocation0 [shape = 'u32[]', space=smem, size = 0x4, offset = 0x4, fixed_abs, tag = 'smem constant byte address 0x4 - core index']
  #allocation1 [shape = 'u32[144,128]{1,0:T(1,128)}', space=vmem, size = 0x12000, scoped, tag = 'internal scratch']
  %s0 = inlined_call_operand.hbm [shape: f32[256,896], index: 0, kind: input, shape index: {}]
  %s1 = inlined_call_operand.hbm [shape: f32[256,128], index: 1, kind: input, shape index: {}]
  %s2 = inlined_call_operand.hbm [shape: bf16[896,256], index: 2, kind: input, shape index: {}]
  %s3 = inlined_call_operand.vmem [shape: f32[1,256], index: 3, kind: input, shape index: {}]
  %s4 = inlined_call_operand.hbm [shape: bf16[256,256], index: 4, kind: input, shape index: {}]
  %s5 = inlined_call_operand.vmem [shape: f32[1,256], index: 5, kind: input, shape index: {}]
  %s6 = inlined_call_operand.hbm [shape: bf16[128,256], index: 6, kind: input, shape index: {}]
  %s7 = inlined_call_operand.vmem [shape: f32[1,256], index: 7, kind: input, shape index: {}]
  %s8 = inlined_call_operand.hbm [shape: bf16[256,896], index: 8, kind: input, shape index: {}]
  %s9 = inlined_call_operand.vmem [shape: f32[1,896], index: 9, kind: input, shape index: {}]
  %s10 = inlined_call_operand.hbm [shape: f32[256,128], index: 10, kind: output, shape index: {0}]
  %s11 = inlined_call_operand.hbm [shape: f32[256,896], index: 11, kind: output, shape index: {1}]
  %12 = xla_tuple %s10, %s11
  %s13 = sld [smem:[#allocation0]]
  $region105: #{tpu_custom_call.1} parent=0
    _
  %s15 = ssub.s32 1, %s13
  %s16 = scalar_select 0, %s15, %s13
  $region1: #{tpu_custom_call.1} parent=0
    #allocation2 [shape = 'u8[917504]{0}', space=vmem, size = 0xe0000, scoped, tag = 'input window, operand 0']
    #allocation3 [shape = 's32[2]{0}', space=sflag, size = 0x8, scoped, tag = 'scoped memory for tpu_custom_call.1']
    #allocation4 [shape = 's32[2]{0}', space=sflag, size = 0x8, scoped, tag = 'scoped memory for tpu_custom_call.1']
    #allocation5 [shape = 'u8[131072]{0}', space=vmem, size = 0x20000, scoped, tag = 'input window, operand 1']
    #allocation6 [shape = 's32[2]{0}', space=sflag, size = 0x8, scoped, tag = 'scoped memory for tpu_custom_call.1']
    #allocation7 [shape = 'u8[458752]{0}', space=vmem, size = 0x70000, scoped, tag = 'input window, operand 2, single buffered']
    #allocation8 [shape = 'u8[131072]{0}', space=vmem, size = 0x20000, scoped, tag = 'input window, operand 4, single buffered']
    #allocation9 [shape = 's32[1]{0}', space=sflag, size = 0x4, scoped, tag = 'scoped memory for tpu_custom_call.1']
    #allocation10 [shape = 'u8[65536]{0}', space=vmem, size = 0x10000, scoped, tag = 'input window, operand 6, single buffered']
    #allocation11 [shape = 'u8[458752]{0}', space=vmem, size = 0x70000, scoped, tag = 'input window, operand 8, single buffered']
    #allocation12 [shape = 's32[1]{0}', space=sflag, size = 0x4, scoped, tag = 'scoped memory for tpu_custom_call.1']
    #allocation13 [shape = 'u8[131072]{0}', space=vmem, size = 0x20000, scoped, tag = 'output window, operand 0']
    #allocation14 [shape = 'u8[917504]{0}', space=vmem, size = 0xe0000, scoped, tag = 'output window, operand 1']
    #allocation15 [shape = 's32[2]{0}', space=sflag, size = 0x8, scoped, tag = 'scoped memory for tpu_custom_call.1']
    %17 = vsyncpa [#allocation3], 0
    %s18 = scalar_lea.sflag [#allocation3], 1
    %19 = vsyncpa %s18, 0
    %20 = vsyncpa [#allocation6], 0
    %s21 = scalar_lea.sflag [#allocation6], 1
    %22 = vsyncpa %s21, 0
    %23 = vsyncpa [#allocation9], 0
    %24 = vsyncpa [#allocation12], 0
    %25 = vsyncpa [#allocation4], 0
    %s26 = scalar_lea.sflag [#allocation4], 1
    %27 = vsyncpa %s26, 0
    %28 = vsyncpa [#allocation15], 0
    %s29 = scalar_lea.sflag [#allocation15], 1
    %30 = vsyncpa %s29, 0
    loop: start=0, step=1, limit=4
    $region2: #{tpu_custom_call.1} parent=1 // loop_pre_header
      _
    $region3: #{tpu_custom_call.1} parent=1 // loop_header
      %s32 = sphi 0, %s36
      %p33 = scmp.ge.s32.totalorder %s32, 4
      %s42 = sphi 0, %s44
      %s45 = sphi 0, %s42
      %s46 = sphi 0, %s45
      %s62 = sphi 0, %s46
      %s68 = sphi 0, %s70
      %s71 = sphi 0, %s68
      %s72 = sphi 0, %s71
      %s88 = sphi 0, %s72
      %s92 = sphi 0, %s92
      %s94 = sphi 0, %s92
      %s95 = sphi 0, %s94
      %s109 = sphi 0, %s95
      %s113 = sphi 0, %s113
      %s115 = sphi 0, %s113
      %s116 = sphi 0, %s115
      %s130 = sphi 0, %s116
      %s134 = sphi 0, %s134
      %s136 = sphi 0, %s134
      %s137 = sphi 0, %s136
      %s151 = sphi 0, %s137
      %s155 = sphi 0, %s155
      %s157 = sphi 0, %s155
      %s158 = sphi 0, %s157
      %s172 = sphi 0, %s158
      %s176 = sphi 0, %s176
      %s178 = sphi 0, %s176
      %s179 = sphi 0, %s178
      %s193 = sphi 0, %s179
      %s197 = sphi 0, %s197
      %s199 = sphi 0, %s197
      %s200 = sphi 0, %s199
      %s214 = sphi 0, %s200
      %s218 = sphi 0, %s218
      %s220 = sphi 0, %s218
      %s221 = sphi 0, %s220
      %s235 = sphi 0, %s221
      %s239 = sphi 0, %s239
      %s241 = sphi 0, %s239
      %s242 = sphi 0, %s241
      %s256 = sphi 0, %s242
      %s262 = sphi 0, %s264
      %s265 = sphi 0, %s262
      %s266 = sphi 0, %s265
      %s282 = sphi 0, %s266
      %s288 = sphi 0, %s290
      %s291 = sphi 0, %s288
      %s292 = sphi 0, %s291
      %s308 = sphi 0, %s292
    $region4: #{tpu_custom_call.1} parent=1 // loop_header_branch
      %35 = sbr.rel (%p33) target = $region8
    $region5: #{tpu_custom_call.1} parent=1 // loop_body
      %s37 = ssub.s32 %s32, 1
      %s38 = ssub.s32 %s32, 2
      %s39 = sadd.s32 %s32, 1
      %s40 = ssub.s32 %s32, %s39
      %p41 = scmp.eq.s32.totalorder %s40, 0
      %s43 = sadd.s32 %s42, 1
      %s44 = scalar_select %p41, %s42, %s43
      %p47 = pneg %p41
      %p48 = scmp.eq.s32.totalorder %s32, 1
      %p49 = por %p47, %p48
      %p50 = scmp.ne.s32.totalorder %s42, %s45
      %p51 = scmp.eq.s32.totalorder %s32, 0
      %p52 = por %p50, %p51
      %p53 = scmp.ne.s32.totalorder %s42, %s45
      %p54 = scmp.eq.s32.totalorder %s37, 1
      %p55 = por %p53, %p54
      %p56 = scmp.ne.s32.totalorder %s45, %s46
      %p57 = scmp.eq.s32.totalorder %s37, 0
      %p58 = por %p56, %p57
      %p59 = scmp.ne.s32.totalorder %s45, %s46
      %p60 = scmp.eq.s32.totalorder %s38, 1
      %p61 = por %p59, %p60
      %p63 = scmp.ne.s32.totalorder %s46, %s62
      %p64 = scmp.eq.s32.totalorder %s38, 0
      %p65 = por %p63, %p64
      %s66 = ssub.s32 %s32, %s39
      %p67 = scmp.eq.s32.totalorder %s66, 0
      %s69 = sadd.s32 %s68, 1
      %s70 = scalar_select %p67, %s68, %s69
      %p73 = pneg %p67
      %p74 = scmp.eq.s32.totalorder %s32, 1
      %p75 = por %p73, %p74
      %p76 = scmp.ne.s32.totalorder %s68, %s71
      %p77 = scmp.eq.s32.totalorder %s32, 0
      %p78 = por %p76, %p77
      %p79 = scmp.ne.s32.totalorder %s68, %s71
      %p80 = scmp.eq.s32.totalorder %s37, 1
      %p81 = por %p79, %p80
      %p82 = scmp.ne.s32.totalorder %s71, %s72
      %p83 = scmp.eq.s32.totalorder %s37, 0
      %p84 = por %p82, %p83
      %p85 = scmp.ne.s32.totalorder %s71, %s72
      %p86 = scmp.eq.s32.totalorder %s38, 1
      %p87 = por %p85, %p86
      %p89 = scmp.ne.s32.totalorder %s72, %s88
      %p90 = scmp.eq.s32.totalorder %s38, 0
      %p91 = por %p89, %p90
      %s93 = sadd.s32 %s92, 1
      %p96 = scmp.eq.s32.totalorder %s32, 1
      %p97 = scmp.ne.s32.totalorder %s92, %s94
      %p98 = scmp.eq.s32.totalorder %s32, 0
      %p99 = por %p97, %p98
      %p100 = scmp.ne.s32.totalorder %s92, %s94
      %p101 = scmp.eq.s32.totalorder %s37, 1
      %p102 = por %p100, %p101
      %p103 = scmp.ne.s32.totalorder %s94, %s95
      %p104 = scmp.eq.s32.totalorder %s37, 0
      %p105 = por %p103, %p104
      %p106 = scmp.ne.s32.totalorder %s94, %s95
      %p107 = scmp.eq.s32.totalorder %s38, 1
      %p108 = por %p106, %p107
      %p110 = scmp.ne.s32.totalorder %s95, %s109
      %p111 = scmp.eq.s32.totalorder %s38, 0
      %p112 = por %p110, %p111
      %s114 = sadd.s32 %s113, 1
      %p117 = scmp.eq.s32.totalorder %s32, 1
      %p118 = scmp.ne.s32.totalorder %s113, %s115
      %p119 = scmp.eq.s32.totalorder %s32, 0
      %p120 = por %p118, %p119
      %p121 = scmp.ne.s32.totalorder %s113, %s115
      %p122 = scmp.eq.s32.totalorder %s37, 1
      %p123 = por %p121, %p122
      %p124 = scmp.ne.s32.totalorder %s115, %s116
      %p125 = scmp.eq.s32.totalorder %s37, 0
      %p126 = por %p124, %p125
      %p127 = scmp.ne.s32.totalorder %s115, %s116
      %p128 = scmp.eq.s32.totalorder %s38, 1
      %p129 = por %p127, %p128
      %p131 = scmp.ne.s32.totalorder %s116, %s130
      %p132 = scmp.eq.s32.totalorder %s38, 0
      %p133 = por %p131, %p132
      %s135 = sadd.s32 %s134, 1
      %p138 = scmp.eq.s32.totalorder %s32, 1
      %p139 = scmp.ne.s32.totalorder %s134, %s136
      %p140 = scmp.eq.s32.totalorder %s32, 0
      %p141 = por %p139, %p140
      %p142 = scmp.ne.s32.totalorder %s134, %s136
      %p143 = scmp.eq.s32.totalorder %s37, 1
      %p144 = por %p142, %p143
      %p145 = scmp.ne.s32.totalorder %s136, %s137
      %p146 = scmp.eq.s32.totalorder %s37, 0
      %p147 = por %p145, %p146
      %p148 = scmp.ne.s32.totalorder %s136, %s137
      %p149 = scmp.eq.s32.totalorder %s38, 1
      %p150 = por %p148, %p149
      %p152 = scmp.ne.s32.totalorder %s137, %s151
      %p153 = scmp.eq.s32.totalorder %s38, 0
      %p154 = por %p152, %p153
      %s156 = sadd.s32 %s155, 1
      %p159 = scmp.eq.s32.totalorder %s32, 1
      %p160 = scmp.ne.s32.totalorder %s155, %s157
      %p161 = scmp.eq.s32.totalorder %s32, 0
      %p162 = por %p160, %p161
      %p163 = scmp.ne.s32.totalorder %s155, %s157
      %p164 = scmp.eq.s32.totalorder %s37, 1
      %p165 = por %p163, %p164
      %p166 = scmp.ne.s32.totalorder %s157, %s158
      %p167 = scmp.eq.s32.totalorder %s37, 0
      %p168 = por %p166, %p167
      %p169 = scmp.ne.s32.totalorder %s157, %s158
      %p170 = scmp.eq.s32.totalorder %s38, 1
      %p171 = por %p169, %p170
      %p173 = scmp.ne.s32.totalorder %s158, %s172
      %p174 = scmp.eq.s32.totalorder %s38, 0
      %p175 = por %p173, %p174
      %s177 = sadd.s32 %s176, 1
      %p180 = scmp.eq.s32.totalorder %s32, 1
      %p181 = scmp.ne.s32.totalorder %s176, %s178
      %p182 = scmp.eq.s32.totalorder %s32, 0
      %p183 = por %p181, %p182
      %p184 = scmp.ne.s32.totalorder %s176, %s178
      %p185 = scmp.eq.s32.totalorder %s37, 1
      %p186 = por %p184, %p185
      %p187 = scmp.ne.s32.totalorder %s178, %s179
      %p188 = scmp.eq.s32.totalorder %s37, 0
      %p189 = por %p187, %p188
      %p190 = scmp.ne.s32.totalorder %s178, %s179
      %p191 = scmp.eq.s32.totalorder %s38, 1
      %p192 = por %p190, %p191
      %p194 = scmp.ne.s32.totalorder %s179, %s193
      %p195 = scmp.eq.s32.totalorder %s38, 0
      %p196 = por %p194, %p195
      %s198 = sadd.s32 %s197, 1
      %p201 = scmp.eq.s32.totalorder %s32, 1
      %p202 = scmp.ne.s32.totalorder %s197, %s199
      %p203 = scmp.eq.s32.totalorder %s32, 0
      %p204 = por %p202, %p203
      %p205 = scmp.ne.s32.totalorder %s197, %s199
      %p206 = scmp.eq.s32.totalorder %s37, 1
      %p207 = por %p205, %p206
      %p208 = scmp.ne.s32.totalorder %s199, %s200
      %p209 = scmp.eq.s32.totalorder %s37, 0
      %p210 = por %p208, %p209
      %p211 = scmp.ne.s32.totalorder %s199, %s200
      %p212 = scmp.eq.s32.totalorder %s38, 1
      %p213 = por %p211, %p212
      %p215 = scmp.ne.s32.totalorder %s200, %s214
      %p216 = scmp.eq.s32.totalorder %s38, 0
      %p217 = por %p215, %p216
      %s219 = sadd.s32 %s218, 1
      %p222 = scmp.eq.s32.totalorder %s32, 1
      %p223 = scmp.ne.s32.totalorder %s218, %s220
      %p224 = scmp.eq.s32.totalorder %s32, 0
      %p225 = por %p223, %p224
      %p226 = scmp.ne.s32.totalorder %s218, %s220
      %p227 = scmp.eq.s32.totalorder %s37, 1
      %p228 = por %p226, %p227
      %p229 = scmp.ne.s32.totalorder %s220, %s221
      %p230 = scmp.eq.s32.totalorder %s37, 0
      %p231 = por %p229, %p230
      %p232 = scmp.ne.s32.totalorder %s220, %s221
      %p233 = scmp.eq.s32.totalorder %s38, 1
      %p234 = por %p232, %p233
      %p236 = scmp.ne.s32.totalorder %s221, %s235
      %p237 = scmp.eq.s32.totalorder %s38, 0
      %p238 = por %p236, %p237
      %s240 = sadd.s32 %s239, 1
      %p243 = scmp.eq.s32.totalorder %s32, 1
      %p244 = scmp.ne.s32.totalorder %s239, %s241
      %p245 = scmp.eq.s32.totalorder %s32, 0
      %p246 = por %p244, %p245
      %p247 = scmp.ne.s32.totalorder %s239, %s241
      %p248 = scmp.eq.s32.totalorder %s37, 1
      %p249 = por %p247, %p248
      %p250 = scmp.ne.s32.totalorder %s241, %s242
      %p251 = scmp.eq.s32.totalorder %s37, 0
      %p252 = por %p250, %p251
      %p253 = scmp.ne.s32.totalorder %s241, %s242
      %p254 = scmp.eq.s32.totalorder %s38, 1
      %p255 = por %p253, %p254
      %p257 = scmp.ne.s32.totalorder %s242, %s256
      %p258 = scmp.eq.s32.totalorder %s38, 0
      %p259 = por %p257, %p258
      %s260 = ssub.s32 %s32, %s39
      %p261 = scmp.eq.s32.totalorder %s260, 0
      %s263 = sadd.s32 %s262, 1
      %s264 = scalar_select %p261, %s262, %s263
      %p267 = pneg %p261
      %p268 = scmp.eq.s32.totalorder %s32, 1
      %p269 = por %p267, %p268
      %p270 = scmp.ne.s32.totalorder %s262, %s265
      %p271 = scmp.eq.s32.totalorder %s32, 0
      %p272 = por %p270, %p271
      %p273 = scmp.ne.s32.totalorder %s262, %s265
      %p274 = scmp.eq.s32.totalorder %s37, 1
      %p275 = por %p273, %p274
      %p276 = scmp.ne.s32.totalorder %s265, %s266
      %p277 = scmp.eq.s32.totalorder %s37, 0
      %p278 = por %p276, %p277
      %p279 = scmp.ne.s32.totalorder %s265, %s266
      %p280 = scmp.eq.s32.totalorder %s38, 1
      %p281 = por %p279, %p280
      %p283 = scmp.ne.s32.totalorder %s266, %s282
      %p284 = scmp.eq.s32.totalorder %s38, 0
      %p285 = por %p283, %p284
      %s286 = ssub.s32 %s32, %s39
      %p287 = scmp.eq.s32.totalorder %s286, 0
      %s289 = sadd.s32 %s288, 1
      %s290 = scalar_select %p287, %s288, %s289
      %p293 = pneg %p287
      %p294 = scmp.eq.s32.totalorder %s32, 1
      %p295 = por %p293, %p294
      %p296 = scmp.ne.s32.totalorder %s288, %s291
      %p297 = scmp.eq.s32.totalorder %s32, 0
      %p298 = por %p296, %p297
      %p299 = scmp.ne.s32.totalorder %s288, %s291
      %p300 = scmp.eq.s32.totalorder %s37, 1
      %p301 = por %p299, %p300
      %p302 = scmp.ne.s32.totalorder %s291, %s292
      %p303 = scmp.eq.s32.totalorder %s37, 0
      %p304 = por %p302, %p303
      %p305 = scmp.ne.s32.totalorder %s291, %s292
      %p306 = scmp.eq.s32.totalorder %s38, 1
      %p307 = por %p305, %p306
      %p309 = scmp.ne.s32.totalorder %s292, %s308
      %p310 = scmp.eq.s32.totalorder %s38, 0
      %p311 = por %p309, %p310
      %p312 = scmp.le.s32.totalorder 1, %s32
      %p313 = scmp.lt.s32.totalorder %s32, 3
      %p314 = pnand %p312, %p313
      %p315 = pneg %p314
      // Predicated region
      $region9: #{tpu_custom_call.1} parent=5 // pred_check
        _
      $region10: #{tpu_custom_call.1} parent=5 // pred_check_branch
        %317 = sbr.rel (%p314) target = $region12
      $region11: #{tpu_custom_call.1} parent=5 // pred_region
        %s318 = ssub.s32 %s32, 1
        // Predicated region
        $region13: #{tpu_custom_call.1} parent=11 // pred_check
          %p319 = pneg %p105
        $region14: #{tpu_custom_call.1} parent=11 // pred_check_branch
          %321 = sbr.rel (%p319) target = $region16
        $region15: #{tpu_custom_call.1} parent=11 // pred_region
          %s323 = ssub.s32 14336, 14336
          %324 = vsyncadd [#allocation6], %s323
          %s325 = sshll.u32 [#allocation7], 4
          %s326 = int_to_ptr.vmem [resolvable:$true] %s325
          %331 = dma.hbm_to_vmem [thread:$0]  %s2, 14336, %s326, [#allocation6], 128, 128, 8
        $region16: #{tpu_custom_call.1} parent=11 // pred_fallthru
          _
        // Predicated region
        $region17: #{tpu_custom_call.1} parent=11 // pred_check
          %p332 = pneg %p126
        $region18: #{tpu_custom_call.1} parent=11 // pred_check_branch
          %334 = sbr.rel (%p332) target = $region20
        $region19: #{tpu_custom_call.1} parent=11 // pred_region
          _
        $region20: #{tpu_custom_call.1} parent=11 // pred_fallthru
          _
        // Predicated region
        $region21: #{tpu_custom_call.1} parent=11 // pred_check
          %p335 = pneg %p147
        $region22: #{tpu_custom_call.1} parent=11 // pred_check_branch
          %337 = sbr.rel (%p335) target = $region24
        $region23: #{tpu_custom_call.1} parent=11 // pred_region
          %s339 = ssub.s32 4096, 4096
          %340 = vsyncadd [#allocation9], %s339
          %s341 = sshll.u32 [#allocation8], 4
          %s342 = int_to_ptr.vmem [resolvable:$true] %s341
          %347 = dma.hbm_to_vmem [thread:$0]  %s4, 4096, %s342, [#allocation9], 128, 128, 8
        $region24: #{tpu_custom_call.1} parent=11 // pred_fallthru
          _
        // Predicated region
        $region25: #{tpu_custom_call.1} parent=11 // pred_check
          %p348 = pneg %p168
        $region26: #{tpu_custom_call.1} parent=11 // pred_check_branch
          %350 = sbr.rel (%p348) target = $region28
        $region27: #{tpu_custom_call.1} parent=11 // pred_region
          _
        $region28: #{tpu_custom_call.1} parent=11 // pred_fallthru
          _
        // Predicated region
        $region29: #{tpu_custom_call.1} parent=11 // pred_check
          %p351 = pneg %p189
        $region30: #{tpu_custom_call.1} parent=11 // pred_check_branch
          %353 = sbr.rel (%p351) target = $region32
        $region31: #{tpu_custom_call.1} parent=11 // pred_region
          %s355 = ssub.s32 2048, 2048
          %356 = vsyncadd [#allocation9], %s355
          %s357 = sshll.u32 [#allocation10], 4
          %s358 = int_to_ptr.vmem [resolvable:$true] %s357
          %363 = dma.hbm_to_vmem [thread:$0]  %s6, 2048, %s358, [#allocation9], 128, 128, 8
        $region32: #{tpu_custom_call.1} parent=11 // pred_fallthru
          _
        // Predicated region
        $region33: #{tpu_custom_call.1} parent=11 // pred_check
          %p364 = pneg %p210
        $region34: #{tpu_custom_call.1} parent=11 // pred_check_branch
          %366 = sbr.rel (%p364) target = $region36
        $region35: #{tpu_custom_call.1} parent=11 // pred_region
          _
        $region36: #{tpu_custom_call.1} parent=11 // pred_fallthru
          _
        // Predicated region
        $region37: #{tpu_custom_call.1} parent=11 // pred_check
          %p367 = pneg %p231
        $region38: #{tpu_custom_call.1} parent=11 // pred_check_branch
          %369 = sbr.rel (%p367) target = $region40
        $region39: #{tpu_custom_call.1} parent=11 // pred_region
          %s371 = ssub.s32 14336, 14336
          %372 = vsyncadd [#allocation12], %s371
          %s373 = sshll.u32 [#allocation11], 4
          %s374 = int_to_ptr.vmem [resolvable:$true] %s373
          %379 = dma.hbm_to_vmem [thread:$0]  %s8, 14336, %s374, [#allocation12], 448, 448, 28
        $region40: #{tpu_custom_call.1} parent=11 // pred_fallthru
          _
        // Predicated region
        $region41: #{tpu_custom_call.1} parent=11 // pred_check
          %p380 = pneg %p252
        $region42: #{tpu_custom_call.1} parent=11 // pred_check_branch
          %382 = sbr.rel (%p380) target = $region44
        $region43: #{tpu_custom_call.1} parent=11 // pred_region
          _
        $region44: #{tpu_custom_call.1} parent=11 // pred_fallthru
          _
      $region12: #{tpu_custom_call.1} parent=5 // pred_fallthru
        _
      %p383 = scmp.lt.s32.totalorder %s32, 2
      // Predicated region
      $region45: #{tpu_custom_call.1} parent=5 // pred_check
        %p384 = pneg %p383
      $region46: #{tpu_custom_call.1} parent=5 // pred_check_branch
        %386 = sbr.rel (%p384) target = $region48
      $region47: #{tpu_custom_call.1} parent=5 // pred_region
        // Predicated region
        $region49: #{tpu_custom_call.1} parent=47 // pred_check
          %p387 = pneg %p52
        $region50: #{tpu_custom_call.1} parent=47 // pred_check_branch
          %389 = sbr.rel (%p387) target = $region52
        $region51: #{tpu_custom_call.1} parent=47 // pred_region
          %s390 = sand.u32 %s42, 1
          %s391 = scalar_lea.sflag [#allocation3], %s390
          %s392 = sand.u32 %s42, 1
          %s393 = smul.addr %s392, 896
          %s394 = scalar_lea.vmem [#allocation2], %s393
          %s395 = smul.u32 16, %s32
          %s397 = ssub.s32 14336, 14336
          %398 = vsyncadd %s391, %s397
          %s399 = smul.addr %s395, 7
          %s400 = smul.addr %s399, 128
          %s401 = scalar_lea.hbm %s0, %s400
          %s402 = sshll.u32 %s394, 4
          %s403 = int_to_ptr.vmem [resolvable:$true] %s402
          %408 = dma.hbm_to_vmem [thread:$0]  %s401, 14336, %s403, %s391, 896, 896, 56
        $region52: #{tpu_custom_call.1} parent=47 // pred_fallthru
          _
        // Predicated region
        $region53: #{tpu_custom_call.1} parent=47 // pred_check
          %p409 = pneg %p78
        $region54: #{tpu_custom_call.1} parent=47 // pred_check_branch
          %411 = sbr.rel (%p409) target = $region56
        $region55: #{tpu_custom_call.1} parent=47 // pred_region
          %s412 = sand.u32 %s32, 1
          %s413 = scalar_lea.sflag [#allocation6], %s412
          %s414 = sand.u32 %s68, 1
          %s415 = smul.addr %s414, 128
          %s416 = scalar_lea.vmem [#allocation5], %s415
          %s417 = smul.u32 16, %s32
          %s419 = ssub.s32 2048, 2048
          %420 = vsyncadd %s413, %s419
          %s421 = smul.addr %s417, 128
          %s422 = scalar_lea.hbm %s1, %s421
          %s423 = sshll.u32 %s416, 4
          %s424 = int_to_ptr.vmem [resolvable:$true] %s423
          %429 = dma.hbm_to_vmem [thread:$0]  %s422, 2048, %s424, %s413, 128, 128, 8
        $region56: #{tpu_custom_call.1} parent=47 // pred_fallthru
          _
      $region48: #{tpu_custom_call.1} parent=5 // pred_fallthru
        _
      %p430 = scmp.le.s32.totalorder 1, %s32
      %p431 = scmp.lt.s32.totalorder %s32, 3
      %p432 = pnand %p430, %p431
      %p433 = pneg %p432
      // Predicated region
      $region57: #{tpu_custom_call.1} parent=5 // pred_check
        _
      $region58: #{tpu_custom_call.1} parent=5 // pred_check_branch
        %435 = sbr.rel (%p432) target = $region60
      $region59: #{tpu_custom_call.1} parent=5 // pred_region
        %s436 = ssub.s32 %s32, 1
        %s437 = sand.u32 %s45, 1
        %s438 = scalar_lea.sflag [#allocation3], %s437
        %s439 = sand.u32 %s45, 1
        %s440 = smul.addr %s439, 896
        %s441 = scalar_lea.vmem [#allocation2], %s440
        // Predicated region
        $region61: #{tpu_custom_call.1} parent=59 // pred_check
          %p442 = pneg %p58
        $region62: #{tpu_custom_call.1} parent=59 // pred_check_branch
          %444 = sbr.rel (%p442) target = $region64
        $region63: #{tpu_custom_call.1} parent=59 // pred_region
          %445 = dma.done %s438, 14336
        $region64: #{tpu_custom_call.1} parent=59 // pred_fallthru
          _
        %s446 = sand.u32 %s37, 1
        %s447 = scalar_lea.sflag [#allocation6], %s446
        %s448 = sand.u32 %s71, 1
        %s449 = smul.addr %s448, 128
        %s450 = scalar_lea.vmem [#allocation5], %s449
        // Predicated region
        $region65: #{tpu_custom_call.1} parent=59 // pred_check
          %p451 = pneg %p84
        $region66: #{tpu_custom_call.1} parent=59 // pred_check_branch
          %453 = sbr.rel (%p451) target = $region68
        $region67: #{tpu_custom_call.1} parent=59 // pred_region
          %454 = dma.done %s447, 2048
        $region68: #{tpu_custom_call.1} parent=59 // pred_fallthru
          _
        // Predicated region
        $region69: #{tpu_custom_call.1} parent=59 // pred_check
          %p455 = pneg %p105
        $region70: #{tpu_custom_call.1} parent=59 // pred_check_branch
          %457 = sbr.rel (%p455) target = $region72
        $region71: #{tpu_custom_call.1} parent=59 // pred_region
          %458 = dma.done [#allocation6], 14336
        $region72: #{tpu_custom_call.1} parent=59 // pred_fallthru
          _
        // Predicated region
        $region73: #{tpu_custom_call.1} parent=59 // pred_check
          %p459 = pneg %p147
        $region74: #{tpu_custom_call.1} parent=59 // pred_check_branch
          %461 = sbr.rel (%p459) target = $region76
        $region75: #{tpu_custom_call.1} parent=59 // pred_region
          %462 = dma.done [#allocation9], 4096
        $region76: #{tpu_custom_call.1} parent=59 // pred_fallthru
          _
        // Predicated region
        $region77: #{tpu_custom_call.1} parent=59 // pred_check
          %p463 = pneg %p189
        $region78: #{tpu_custom_call.1} parent=59 // pred_check_branch
          %465 = sbr.rel (%p463) target = $region80
        $region79: #{tpu_custom_call.1} parent=59 // pred_region
          %466 = dma.done [#allocation9], 2048
        $region80: #{tpu_custom_call.1} parent=59 // pred_fallthru
          _
        // Predicated region
        $region81: #{tpu_custom_call.1} parent=59 // pred_check
          %p467 = pneg %p231
        $region82: #{tpu_custom_call.1} parent=59 // pred_check_branch
          %469 = sbr.rel (%p467) target = $region84
        $region83: #{tpu_custom_call.1} parent=59 // pred_region
          %470 = dma.done [#allocation12], 14336
        $region84: #{tpu_custom_call.1} parent=59 // pred_fallthru
          _
        %s471 = sand.u32 %s45, 1
        %s472 = scalar_lea.sflag [#allocation3], %s471
        %s473 = sand.u32 %s45, 1
        %s474 = smul.addr %s473, 896
        %s475 = scalar_lea.vmem [#allocation2], %s474
        %p476 = pneg %p58
        %p477 = pneg %p55
        %s478 = sand.u32 %s37, 1
        %s479 = scalar_lea.sflag [#allocation6], %s478
        %s480 = sand.u32 %s71, 1
        %s481 = smul.addr %s480, 128
        %s482 = scalar_lea.vmem [#allocation5], %s481
        %p483 = pneg %p84
        %p484 = pneg %p81
        %p485 = pneg %p105
        %p486 = pneg %p102
        %p487 = pneg %p126
        %p488 = pneg %p123
        %p489 = pneg %p147
        %p490 = pneg %p144
        %p491 = pneg %p168
        %p492 = pneg %p165
        %p493 = pneg %p189
        %p494 = pneg %p186
        %p495 = pneg %p210
        %p496 = pneg %p207
        %p497 = pneg %p231
        %p498 = pneg %p228
        %p499 = pneg %p252
        %p500 = pneg %p249
        %p501 = pneg %p278
        %p502 = pneg %p275
        %s503 = sand.u32 %s265, 1
        %s504 = scalar_lea.sflag [#allocation4], %s503
        %s505 = sand.u32 %s265, 1
        %s506 = smul.addr %s505, 128
        %s507 = scalar_lea.vmem [#allocation13], %s506
        %p508 = pneg %p304
        %p509 = pneg %p301
        %s510 = sand.u32 %s291, 1
        %s511 = scalar_lea.sflag [#allocation15], %s510
        %s512 = sand.u32 %s291, 1
        %s513 = smul.addr %s512, 896
        %s514 = scalar_lea.vmem [#allocation14], %s513
        %s515 = smul.u32 16, %s37
        %s516 = smul.u32 16, %s37
        %s517 = smul.u32 16, %s37
        %s518 = smul.u32 16, %s37
        %v520 = vld [vmem:[%s441] sm:$0xff]
        %v521 = vld [vmem:[%s441 + $0x8] sm:$0xff]
        %v522 = vld [vmem:[%s441 + $0x10] sm:$0xff]
        %v523 = vld [vmem:[%s441 + $0x18] sm:$0xff]
        %v524 = vld [vmem:[%s441 + $0x20] sm:$0xff]
        %v525 = vld [vmem:[%s441 + $0x28] sm:$0xff]
        %v526 = vld [vmem:[%s441 + $0x30] sm:$0xff]
        %v527 = vld [vmem:[%s441 + $0x38] sm:$0xff]
        %v528 = vld [vmem:[%s441 + $0x40] sm:$0xff]
        %v529 = vld [vmem:[%s441 + $0x48] sm:$0xff]
        %v530 = vld [vmem:[%s441 + $0x50] sm:$0xff]
        %v531 = vld [vmem:[%s441 + $0x58] sm:$0xff]
        %v532 = vld [vmem:[%s441 + $0x60] sm:$0xff]
        %v533 = vld [vmem:[%s441 + $0x68] sm:$0xff]
        %v534 = vld [vmem:[%s441 + $0x70] sm:$0xff]
        %v535 = vld [vmem:[%s441 + $0x78] sm:$0xff]
        %v536 = vld [vmem:[%s441 + $0x80] sm:$0xff]
        %v537 = vld [vmem:[%s441 + $0x88] sm:$0xff]
        %v538 = vld [vmem:[%s441 + $0x90] sm:$0xff]
        %v539 = vld [vmem:[%s441 + $0x98] sm:$0xff]
        %v540 = vld [vmem:[%s441 + $0xa0] sm:$0xff]
        %v541 = vld [vmem:[%s441 + $0xa8] sm:$0xff]
        %v542 = vld [vmem:[%s441 + $0xb0] sm:$0xff]
        %v543 = vld [vmem:[%s441 + $0xb8] sm:$0xff]
        %v544 = vld [vmem:[%s441 + $0xc0] sm:$0xff]
        %v545 = vld [vmem:[%s441 + $0xc8] sm:$0xff]
        %v546 = vld [vmem:[%s441 + $0xd0] sm:$0xff]
        %v547 = vld [vmem:[%s441 + $0xd8] sm:$0xff]
        %v548 = vld [vmem:[%s441 + $0xe0] sm:$0xff]
        %v549 = vld [vmem:[%s441 + $0xe8] sm:$0xff]
        %v550 = vld [vmem:[%s441 + $0xf0] sm:$0xff]
        %v551 = vld [vmem:[%s441 + $0xf8] sm:$0xff]
        %v552 = vld [vmem:[%s441 + $0x100] sm:$0xff]
        %v553 = vld [vmem:[%s441 + $0x108] sm:$0xff]
        %v554 = vld [vmem:[%s441 + $0x110] sm:$0xff]
        %v555 = vld [vmem:[%s441 + $0x118] sm:$0xff]
        %v556 = vld [vmem:[%s441 + $0x120] sm:$0xff]
        %v557 = vld [vmem:[%s441 + $0x128] sm:$0xff]
        %v558 = vld [vmem:[%s441 + $0x130] sm:$0xff]
        %v559 = vld [vmem:[%s441 + $0x138] sm:$0xff]
        %v560 = vld [vmem:[%s441 + $0x140] sm:$0xff]
        %v561 = vld [vmem:[%s441 + $0x148] sm:$0xff]
        %v562 = vld [vmem:[%s441 + $0x150] sm:$0xff]
        %v563 = vld [vmem:[%s441 + $0x158] sm:$0xff]
        %v564 = vld [vmem:[%s441 + $0x160] sm:$0xff]
        %v565 = vld [vmem:[%s441 + $0x168] sm:$0xff]
        %v566 = vld [vmem:[%s441 + $0x170] sm:$0xff]
        %v567 = vld [vmem:[%s441 + $0x178] sm:$0xff]
        %v568 = vld [vmem:[%s441 + $0x180] sm:$0xff]
        %v569 = vld [vmem:[%s441 + $0x188] sm:$0xff]
        %v570 = vld [vmem:[%s441 + $0x190] sm:$0xff]
        %v571 = vld [vmem:[%s441 + $0x198] sm:$0xff]
        %v572 = vld [vmem:[%s441 + $0x1a0] sm:$0xff]
        %v573 = vld [vmem:[%s441 + $0x1a8] sm:$0xff]
        %v574 = vld [vmem:[%s441 + $0x1b0] sm:$0xff]
        %v575 = vld [vmem:[%s441 + $0x1b8] sm:$0xff]
        %v576 = vld [vmem:[%s441 + $0x1c0] sm:$0xff]
        %v577 = vld [vmem:[%s441 + $0x1c8] sm:$0xff]
        %v578 = vld [vmem:[%s441 + $0x1d0] sm:$0xff]
        %v579 = vld [vmem:[%s441 + $0x1d8] sm:$0xff]
        %v580 = vld [vmem:[%s441 + $0x1e0] sm:$0xff]
        %v581 = vld [vmem:[%s441 + $0x1e8] sm:$0xff]
        %v582 = vld [vmem:[%s441 + $0x1f0] sm:$0xff]
        %v583 = vld [vmem:[%s441 + $0x1f8] sm:$0xff]
        %v584 = vld [vmem:[%s441 + $0x200] sm:$0xff]
        %v585 = vld [vmem:[%s441 + $0x208] sm:$0xff]
        %v586 = vld [vmem:[%s441 + $0x210] sm:$0xff]
        %v587 = vld [vmem:[%s441 + $0x218] sm:$0xff]
        %v588 = vld [vmem:[%s441 + $0x220] sm:$0xff]
        %v589 = vld [vmem:[%s441 + $0x228] sm:$0xff]
        %v590 = vld [vmem:[%s441 + $0x230] sm:$0xff]
        %v591 = vld [vmem:[%s441 + $0x238] sm:$0xff]
        %v592 = vld [vmem:[%s441 + $0x240] sm:$0xff]
        %v593 = vld [vmem:[%s441 + $0x248] sm:$0xff]
        %v594 = vld [vmem:[%s441 + $0x250] sm:$0xff]
        %v595 = vld [vmem:[%s441 + $0x258] sm:$0xff]
        %v596 = vld [vmem:[%s441 + $0x260] sm:$0xff]
        %v597 = vld [vmem:[%s441 + $0x268] sm:$0xff]
        %v598 = vld [vmem:[%s441 + $0x270] sm:$0xff]
        %v599 = vld [vmem:[%s441 + $0x278] sm:$0xff]
        %v600 = vld [vmem:[%s441 + $0x280] sm:$0xff]
        %v601 = vld [vmem:[%s441 + $0x288] sm:$0xff]
        %v602 = vld [vmem:[%s441 + $0x290] sm:$0xff]
        %v603 = vld [vmem:[%s441 + $0x298] sm:$0xff]
        %v604 = vld [vmem:[%s441 + $0x2a0] sm:$0xff]
        %v605 = vld [vmem:[%s441 + $0x2a8] sm:$0xff]
        %v606 = vld [vmem:[%s441 + $0x2b0] sm:$0xff]
        %v607 = vld [vmem:[%s441 + $0x2b8] sm:$0xff]
        %v608 = vld [vmem:[%s441 + $0x2c0] sm:$0xff]
        %v609 = vld [vmem:[%s441 + $0x2c8] sm:$0xff]
        %v610 = vld [vmem:[%s441 + $0x2d0] sm:$0xff]
        %v611 = vld [vmem:[%s441 + $0x2d8] sm:$0xff]
        %v612 = vld [vmem:[%s441 + $0x2e0] sm:$0xff]
        %v613 = vld [vmem:[%s441 + $0x2e8] sm:$0xff]
        %v614 = vld [vmem:[%s441 + $0x2f0] sm:$0xff]
        %v615 = vld [vmem:[%s441 + $0x2f8] sm:$0xff]
        %v616 = vld [vmem:[%s441 + $0x300] sm:$0xff]
        %v617 = vld [vmem:[%s441 + $0x308] sm:$0xff]
        %v618 = vld [vmem:[%s441 + $0x310] sm:$0xff]
        %v619 = vld [vmem:[%s441 + $0x318] sm:$0xff]
        %v620 = vld [vmem:[%s441 + $0x320] sm:$0xff]
        %v621 = vld [vmem:[%s441 + $0x328] sm:$0xff]
        %v622 = vld [vmem:[%s441 + $0x330] sm:$0xff]
        %v623 = vld [vmem:[%s441 + $0x338] sm:$0xff]
        %v624 = vld [vmem:[%s441 + $0x340] sm:$0xff]
        %v625 = vld [vmem:[%s441 + $0x348] sm:$0xff]
        %v626 = vld [vmem:[%s441 + $0x350] sm:$0xff]
        %v627 = vld [vmem:[%s441 + $0x358] sm:$0xff]
        %v628 = vld [vmem:[%s441 + $0x360] sm:$0xff]
        %v629 = vld [vmem:[%s441 + $0x368] sm:$0xff]
        %v630 = vld [vmem:[%s441 + $0x370] sm:$0xff]
        %v631 = vld [vmem:[%s441 + $0x378] sm:$0xff]
        %v632 = vpack.c.bf16 %v527, %v520
        %v633 = vpack.c.bf16 %v528, %v521
        %v634 = vpack.c.bf16 %v529, %v522
        %v635 = vpack.c.bf16 %v530, %v523
        %v636 = vpack.c.bf16 %v531, %v524
        %v637 = vpack.c.bf16 %v532, %v525
        %v638 = vpack.c.bf16 %v533, %v526
        %v639 = vpack.c.bf16 %v541, %v534
        %v640 = vpack.c.bf16 %v542, %v535
        %v641 = vpack.c.bf16 %v543, %v536
        %v642 = vpack.c.bf16 %v544, %v537
        %v643 = vpack.c.bf16 %v545, %v538
        %v644 = vpack.c.bf16 %v546, %v539
        %v645 = vpack.c.bf16 %v547, %v540
        %v646 = vpack.c.bf16 %v555, %v548
        %v647 = vpack.c.bf16 %v556, %v549
        %v648 = vpack.c.bf16 %v557, %v550
        %v649 = vpack.c.bf16 %v558, %v551
        %v650 = vpack.c.bf16 %v559, %v552
        %v651 = vpack.c.bf16 %v560, %v553
        %v652 = vpack.c.bf16 %v561, %v554
        %v653 = vpack.c.bf16 %v569, %v562
        %v654 = vpack.c.bf16 %v570, %v563
        %v655 = vpack.c.bf16 %v571, %v564
        %v656 = vpack.c.bf16 %v572, %v565
        %v657 = vpack.c.bf16 %v573, %v566
        %v658 = vpack.c.bf16 %v574, %v567
        %v659 = vpack.c.bf16 %v575, %v568
        %v660 = vpack.c.bf16 %v583, %v576
        %v661 = vpack.c.bf16 %v584, %v577
        %v662 = vpack.c.bf16 %v585, %v578
        %v663 = vpack.c.bf16 %v586, %v579
        %v664 = vpack.c.bf16 %v587, %v580
        %v665 = vpack.c.bf16 %v588, %v581
        %v666 = vpack.c.bf16 %v589, %v582
        %v667 = vpack.c.bf16 %v597, %v590
        %v668 = vpack.c.bf16 %v598, %v591
        %v669 = vpack.c.bf16 %v599, %v592
        %v670 = vpack.c.bf16 %v600, %v593
        %v671 = vpack.c.bf16 %v601, %v594
        %v672 = vpack.c.bf16 %v602, %v595
        %v673 = vpack.c.bf16 %v603, %v596
        %v674 = vpack.c.bf16 %v611, %v604
        %v675 = vpack.c.bf16 %v612, %v605
        %v676 = vpack.c.bf16 %v613, %v606
        %v677 = vpack.c.bf16 %v614, %v607
        %v678 = vpack.c.bf16 %v615, %v608
        %v679 = vpack.c.bf16 %v616, %v609
        %v680 = vpack.c.bf16 %v617, %v610
        %v681 = vpack.c.bf16 %v625, %v618
        %v682 = vpack.c.bf16 %v626, %v619
        %v683 = vpack.c.bf16 %v627, %v620
        %v684 = vpack.c.bf16 %v628, %v621
        %v685 = vpack.c.bf16 %v629, %v622
        %v686 = vpack.c.bf16 %v630, %v623
        %v687 = vpack.c.bf16 %v631, %v624
        %v688 = vld [vmem:[#allocation7] sm:$0xff]
        %v689 = vld [vmem:[#allocation7 + $0x8] sm:$0xff]
        %v690 = vld [vmem:[#allocation7 + $0x10] sm:$0xff]
        %v691 = vld [vmem:[#allocation7 + $0x18] sm:$0xff]
        %v692 = vld [vmem:[#allocation7 + $0x20] sm:$0xff]
        %v693 = vld [vmem:[#allocation7 + $0x28] sm:$0xff]
        %v694 = vld [vmem:[#allocation7 + $0x30] sm:$0xff]
        %v695 = vld [vmem:[#allocation7 + $0x38] sm:$0xff]
        %v696 = vld [vmem:[#allocation7 + $0x40] sm:$0xff]
        %v697 = vld [vmem:[#allocation7 + $0x48] sm:$0xff]
        %v698 = vld [vmem:[#allocation7 + $0x50] sm:$0xff]
        %v699 = vld [vmem:[#allocation7 + $0x58] sm:$0xff]
        %v700 = vld [vmem:[#allocation7 + $0x60] sm:$0xff]
        %v701 = vld [vmem:[#allocation7 + $0x68] sm:$0xff]
        %v702 = vld [vmem:[#allocation7 + $0x70] sm:$0xff]
        %v703 = vld [vmem:[#allocation7 + $0x78] sm:$0xff]
        %v704 = vld [vmem:[#allocation7 + $0x80] sm:$0xff]
        %v705 = vld [vmem:[#allocation7 + $0x88] sm:$0xff]
        %v706 = vld [vmem:[#allocation7 + $0x90] sm:$0xff]
        %v707 = vld [vmem:[#allocation7 + $0x98] sm:$0xff]
        %v708 = vld [vmem:[#allocation7 + $0xa0] sm:$0xff]
        %v709 = vld [vmem:[#allocation7 + $0xa8] sm:$0xff]
        %v710 = vld [vmem:[#allocation7 + $0xb0] sm:$0xff]
        %v711 = vld [vmem:[#allocation7 + $0xb8] sm:$0xff]
        %v712 = vld [vmem:[#allocation7 + $0xc0] sm:$0xff]
        %v713 = vld [vmem:[#allocation7 + $0xc8] sm:$0xff]
        %v714 = vld [vmem:[#allocation7 + $0xd0] sm:$0xff]
        %v715 = vld [vmem:[#allocation7 + $0xd8] sm:$0xff]
        %v716 = vld [vmem:[#allocation7 + $0xe0] sm:$0xff]
        %v717 = vld [vmem:[#allocation7 + $0xe8] sm:$0xff]
        %v718 = vld [vmem:[#allocation7 + $0xf0] sm:$0xff]
        %v719 = vld [vmem:[#allocation7 + $0xf8] sm:$0xff]
        %v720 = vld [vmem:[#allocation7 + $0x100] sm:$0xff]
        %v721 = vld [vmem:[#allocation7 + $0x108] sm:$0xff]
        %v722 = vld [vmem:[#allocation7 + $0x110] sm:$0xff]
        %v723 = vld [vmem:[#allocation7 + $0x118] sm:$0xff]
        %v724 = vld [vmem:[#allocation7 + $0x120] sm:$0xff]
        %v725 = vld [vmem:[#allocation7 + $0x128] sm:$0xff]
        %v726 = vld [vmem:[#allocation7 + $0x130] sm:$0xff]
        %v727 = vld [vmem:[#allocation7 + $0x138] sm:$0xff]
        %v728 = vld [vmem:[#allocation7 + $0x140] sm:$0xff]
        %v729 = vld [vmem:[#allocation7 + $0x148] sm:$0xff]
        %v730 = vld [vmem:[#allocation7 + $0x150] sm:$0xff]
        %v731 = vld [vmem:[#allocation7 + $0x158] sm:$0xff]
        %v732 = vld [vmem:[#allocation7 + $0x160] sm:$0xff]
        %v733 = vld [vmem:[#allocation7 + $0x168] sm:$0xff]
        %v734 = vld [vmem:[#allocation7 + $0x170] sm:$0xff]
        %v735 = vld [vmem:[#allocation7 + $0x178] sm:$0xff]
        %v736 = vld [vmem:[#allocation7 + $0x180] sm:$0xff]
        %v737 = vld [vmem:[#allocation7 + $0x188] sm:$0xff]
        %v738 = vld [vmem:[#allocation7 + $0x190] sm:$0xff]
        %v739 = vld [vmem:[#allocation7 + $0x198] sm:$0xff]
        %v740 = vld [vmem:[#allocation7 + $0x1a0] sm:$0xff]
        %v741 = vld [vmem:[#allocation7 + $0x1a8] sm:$0xff]
        %v742 = vld [vmem:[#allocation7 + $0x1b0] sm:$0xff]
        %v743 = vld [vmem:[#allocation7 + $0x1b8] sm:$0xff]
        %v744 = vld [vmem:[#allocation7 + $0x1c0] sm:$0xff]
        %v745 = vld [vmem:[#allocation7 + $0x1c8] sm:$0xff]
        %v746 = vld [vmem:[#allocation7 + $0x1d0] sm:$0xff]
        %v747 = vld [vmem:[#allocation7 + $0x1d8] sm:$0xff]
        %v748 = vld [vmem:[#allocation7 + $0x1e0] sm:$0xff]
        %v749 = vld [vmem:[#allocation7 + $0x1e8] sm:$0xff]
        %v750 = vld [vmem:[#allocation7 + $0x1f0] sm:$0xff]
        %v751 = vld [vmem:[#allocation7 + $0x1f8] sm:$0xff]
        %v752 = vld [vmem:[#allocation7 + $0x200] sm:$0xff]
        %v753 = vld [vmem:[#allocation7 + $0x208] sm:$0xff]
        %v754 = vld [vmem:[#allocation7 + $0x210] sm:$0xff]
        %v755 = vld [vmem:[#allocation7 + $0x218] sm:$0xff]
        %v756 = vld [vmem:[#allocation7 + $0x220] sm:$0xff]
        %v757 = vld [vmem:[#allocation7 + $0x228] sm:$0xff]
        %v758 = vld [vmem:[#allocation7 + $0x230] sm:$0xff]
        %v759 = vld [vmem:[#allocation7 + $0x238] sm:$0xff]
        %v760 = vld [vmem:[#allocation7 + $0x240] sm:$0xff]
        %v761 = vld [vmem:[#allocation7 + $0x248] sm:$0xff]
        %v762 = vld [vmem:[#allocation7 + $0x250] sm:$0xff]
        %v763 = vld [vmem:[#allocation7 + $0x258] sm:$0xff]
        %v764 = vld [vmem:[#allocation7 + $0x260] sm:$0xff]
        %v765 = vld [vmem:[#allocation7 + $0x268] sm:$0xff]
        %v766 = vld [vmem:[#allocation7 + $0x270] sm:$0xff]
        %v767 = vld [vmem:[#allocation7 + $0x278] sm:$0xff]
        %v768 = vld [vmem:[#allocation7 + $0x280] sm:$0xff]
        %v769 = vld [vmem:[#allocation7 + $0x288] sm:$0xff]
        %v770 = vld [vmem:[#allocation7 + $0x290] sm:$0xff]
        %v771 = vld [vmem:[#allocation7 + $0x298] sm:$0xff]
        %v772 = vld [vmem:[#allocation7 + $0x2a0] sm:$0xff]
        %v773 = vld [vmem:[#allocation7 + $0x2a8] sm:$0xff]
        %v774 = vld [vmem:[#allocation7 + $0x2b0] sm:$0xff]
        %v775 = vld [vmem:[#allocation7 + $0x2b8] sm:$0xff]
        %v776 = vld [vmem:[#allocation7 + $0x2c0] sm:$0xff]
        %v777 = vld [vmem:[#allocation7 + $0x2c8] sm:$0xff]
        %v778 = vld [vmem:[#allocation7 + $0x2d0] sm:$0xff]
        %v779 = vld [vmem:[#allocation7 + $0x2d8] sm:$0xff]
        %v780 = vld [vmem:[#allocation7 + $0x2e0] sm:$0xff]
        %v781 = vld [vmem:[#allocation7 + $0x2e8] sm:$0xff]
        %v782 = vld [vmem:[#allocation7 + $0x2f0] sm:$0xff]
        %v783 = vld [vmem:[#allocation7 + $0x2f8] sm:$0xff]
        %v784 = vld [vmem:[#allocation7 + $0x300] sm:$0xff]
        %v785 = vld [vmem:[#allocation7 + $0x308] sm:$0xff]
        %v786 = vld [vmem:[#allocation7 + $0x310] sm:$0xff]
        %v787 = vld [vmem:[#allocation7 + $0x318] sm:$0xff]
        %v788 = vld [vmem:[#allocation7 + $0x320] sm:$0xff]
        %v789 = vld [vmem:[#allocation7 + $0x328] sm:$0xff]
        %v790 = vld [vmem:[#allocation7 + $0x330] sm:$0xff]
        %v791 = vld [vmem:[#allocation7 + $0x338] sm:$0xff]
        %v792 = vld [vmem:[#allocation7 + $0x340] sm:$0xff]
        %v793 = vld [vmem:[#allocation7 + $0x348] sm:$0xff]
        %v794 = vld [vmem:[#allocation7 + $0x350] sm:$0xff]
        %v795 = vld [vmem:[#allocation7 + $0x358] sm:$0xff]
        %v796 = vld [vmem:[#allocation7 + $0x360] sm:$0xff]
        %v797 = vld [vmem:[#allocation7 + $0x368] sm:$0xff]
        %v798 = vld [vmem:[#allocation7 + $0x370] sm:$0xff]
        %v799 = vld [vmem:[#allocation7 + $0x378] sm:$0xff]
        %v800 = vld [vmem:[%s3] sm:$0x3]
        %v802 = vlaneseq
        %v803 = vshrl.u32 %v802, 7
        %v804 = vsub.s32 0, %v803
        %v805 = vrot.slane %v800, %v804
        %v806 = vlaneseq
        %v807 = vshrl.u32 %v806, 7
        %v808 = vsub.s32 1, %v807
        %v809 = vrot.slane %v800, %v808
        %v924 = vunpack.c.l.b16 %v688
        %v925 = vunpack.c.h.b16 %v688
        %v926 = vunpack.c.l.b16 %v689
        %v927 = vunpack.c.h.b16 %v689
        %v928 = vunpack.c.l.b16 %v690
        %v929 = vunpack.c.h.b16 %v690
        %v930 = vunpack.c.l.b16 %v691
        %v931 = vunpack.c.h.b16 %v691
        %v932 = vunpack.c.l.b16 %v692
        %v933 = vunpack.c.h.b16 %v692
        %v934 = vunpack.c.l.b16 %v693
        %v935 = vunpack.c.h.b16 %v693
        %v936 = vunpack.c.l.b16 %v694
        %v937 = vunpack.c.h.b16 %v694
        %v938 = vunpack.c.l.b16 %v695
        %v939 = vunpack.c.h.b16 %v695
        %v940 = vunpack.c.l.b16 %v696
        %v941 = vunpack.c.h.b16 %v696
        %v942 = vunpack.c.l.b16 %v697
        %v943 = vunpack.c.h.b16 %v697
        %v944 = vunpack.c.l.b16 %v698
        %v945 = vunpack.c.h.b16 %v698
        %v946 = vunpack.c.l.b16 %v699
        %v947 = vunpack.c.h.b16 %v699
        %v948 = vunpack.c.l.b16 %v700
        %v949 = vunpack.c.h.b16 %v700
        %v950 = vunpack.c.l.b16 %v701
        %v951 = vunpack.c.h.b16 %v701
        %v952 = vunpack.c.l.b16 %v702
        %v953 = vunpack.c.h.b16 %v702
        %v954 = vunpack.c.l.b16 %v703
        %v955 = vunpack.c.h.b16 %v703
        %v956 = vunpack.c.l.b16 %v704
        %v957 = vunpack.c.h.b16 %v704
        %v958 = vunpack.c.l.b16 %v705
        %v959 = vunpack.c.h.b16 %v705
        %v960 = vunpack.c.l.b16 %v706
        %v961 = vunpack.c.h.b16 %v706
        %v962 = vunpack.c.l.b16 %v707
        %v963 = vunpack.c.h.b16 %v707
        %v964 = vunpack.c.l.b16 %v708
        %v965 = vunpack.c.h.b16 %v708
        %v966 = vunpack.c.l.b16 %v709
        %v967 = vunpack.c.h.b16 %v709
        %v968 = vunpack.c.l.b16 %v710
        %v969 = vunpack.c.h.b16 %v710
        %v970 = vunpack.c.l.b16 %v711
        %v971 = vunpack.c.h.b16 %v711
        %v972 = vunpack.c.l.b16 %v712
        %v973 = vunpack.c.h.b16 %v712
        %v974 = vunpack.c.l.b16 %v713
        %v975 = vunpack.c.h.b16 %v713
        %v976 = vunpack.c.l.b16 %v714
        %v977 = vunpack.c.h.b16 %v714
        %v978 = vunpack.c.l.b16 %v715
        %v979 = vunpack.c.h.b16 %v715
        %v980 = vunpack.c.l.b16 %v716
        %v981 = vunpack.c.h.b16 %v716
        %v982 = vunpack.c.l.b16 %v717
        %v983 = vunpack.c.h.b16 %v717
        %v984 = vunpack.c.l.b16 %v718
        %v985 = vunpack.c.h.b16 %v718
        %v986 = vunpack.c.l.b16 %v719
        %v987 = vunpack.c.h.b16 %v719
        %v988 = vunpack.c.l.b16 %v720
        %v989 = vunpack.c.h.b16 %v720
        %v990 = vunpack.c.l.b16 %v721
        %v991 = vunpack.c.h.b16 %v721
        %v992 = vunpack.c.l.b16 %v722
        %v993 = vunpack.c.h.b16 %v722
        %v994 = vunpack.c.l.b16 %v723
        %v995 = vunpack.c.h.b16 %v723
        %v996 = vunpack.c.l.b16 %v724
        %v997 = vunpack.c.h.b16 %v724
        %v998 = vunpack.c.l.b16 %v725
        %v999 = vunpack.c.h.b16 %v725
        %v1000 = vunpack.c.l.b16 %v726
        %v1001 = vunpack.c.h.b16 %v726
        %v1002 = vunpack.c.l.b16 %v727
        %v1003 = vunpack.c.h.b16 %v727
        %v1004 = vunpack.c.l.b16 %v728
        %v1005 = vunpack.c.h.b16 %v728
        %v1006 = vunpack.c.l.b16 %v729
        %v1007 = vunpack.c.h.b16 %v729
        %v1008 = vunpack.c.l.b16 %v730
        %v1009 = vunpack.c.h.b16 %v730
        %v1010 = vunpack.c.l.b16 %v731
        %v1011 = vunpack.c.h.b16 %v731
        %v1012 = vunpack.c.l.b16 %v732
        %v1013 = vunpack.c.h.b16 %v732
        %v1014 = vunpack.c.l.b16 %v733
        %v1015 = vunpack.c.h.b16 %v733
        %v1016 = vunpack.c.l.b16 %v734
        %v1017 = vunpack.c.h.b16 %v734
        %v1018 = vunpack.c.l.b16 %v735
        %v1019 = vunpack.c.h.b16 %v735
        %v1020 = vunpack.c.l.b16 %v736
        %v1021 = vunpack.c.h.b16 %v736
        %v1022 = vunpack.c.l.b16 %v737
        %v1023 = vunpack.c.h.b16 %v737
        %v1024 = vunpack.c.l.b16 %v738
        %v1025 = vunpack.c.h.b16 %v738
        %v1026 = vunpack.c.l.b16 %v739
        %v1027 = vunpack.c.h.b16 %v739
        %v1028 = vunpack.c.l.b16 %v740
        %v1029 = vunpack.c.h.b16 %v740
        %v1030 = vunpack.c.l.b16 %v741
        %v1031 = vunpack.c.h.b16 %v741
        %v1032 = vunpack.c.l.b16 %v742
        %v1033 = vunpack.c.h.b16 %v742
        %v1034 = vunpack.c.l.b16 %v743
        %v1035 = vunpack.c.h.b16 %v743
        %v1036 = vunpack.c.l.b16 %v744
        %v1037 = vunpack.c.h.b16 %v744
        %v1038 = vunpack.c.l.b16 %v745
        %v1039 = vunpack.c.h.b16 %v745
        %v1040 = vunpack.c.l.b16 %v746
        %v1041 = vunpack.c.h.b16 %v746
        %v1042 = vunpack.c.l.b16 %v747
        %v1043 = vunpack.c.h.b16 %v747
        %v1044 = vunpack.c.l.b16 %v748
        %v1045 = vunpack.c.h.b16 %v748
        %v1046 = vunpack.c.l.b16 %v749
        %v1047 = vunpack.c.h.b16 %v749
        %v1048 = vunpack.c.l.b16 %v750
        %v1049 = vunpack.c.h.b16 %v750
        %v1050 = vunpack.c.l.b16 %v751
        %v1051 = vunpack.c.h.b16 %v751
        %v1052 = vunpack.c.l.b16 %v752
        %v1053 = vunpack.c.h.b16 %v752
        %v1054 = vunpack.c.l.b16 %v753
        %v1055 = vunpack.c.h.b16 %v753
        %v1056 = vunpack.c.l.b16 %v754
        %v1057 = vunpack.c.h.b16 %v754
        %v1058 = vunpack.c.l.b16 %v755
        %v1059 = vunpack.c.h.b16 %v755
        %v1060 = vunpack.c.l.b16 %v756
        %v1061 = vunpack.c.h.b16 %v756
        %v1062 = vunpack.c.l.b16 %v757
        %v1063 = vunpack.c.h.b16 %v757
        %v1064 = vunpack.c.l.b16 %v758
        %v1065 = vunpack.c.h.b16 %v758
        %v1066 = vunpack.c.l.b16 %v759
        %v1067 = vunpack.c.h.b16 %v759
        %v1068 = vunpack.c.l.b16 %v760
        %v1069 = vunpack.c.h.b16 %v760
        %v1070 = vunpack.c.l.b16 %v761
        %v1071 = vunpack.c.h.b16 %v761
        %v1072 = vunpack.c.l.b16 %v762
        %v1073 = vunpack.c.h.b16 %v762
        %v1074 = vunpack.c.l.b16 %v763
        %v1075 = vunpack.c.h.b16 %v763
        %v1076 = vunpack.c.l.b16 %v764
        %v1077 = vunpack.c.h.b16 %v764
        %v1078 = vunpack.c.l.b16 %v765
        %v1079 = vunpack.c.h.b16 %v765
        %v1080 = vunpack.c.l.b16 %v766
        %v1081 = vunpack.c.h.b16 %v766
        %v1082 = vunpack.c.l.b16 %v767
        %v1083 = vunpack.c.h.b16 %v767
        %v1084 = vunpack.c.l.b16 %v768
        %v1085 = vunpack.c.h.b16 %v768
        %v1086 = vunpack.c.l.b16 %v769
        %v1087 = vunpack.c.h.b16 %v769
        %v1088 = vunpack.c.l.b16 %v770
        %v1089 = vunpack.c.h.b16 %v770
        %v1090 = vunpack.c.l.b16 %v771
        %v1091 = vunpack.c.h.b16 %v771
        %v1092 = vunpack.c.l.b16 %v772
        %v1093 = vunpack.c.h.b16 %v772
        %v1094 = vunpack.c.l.b16 %v773
        %v1095 = vunpack.c.h.b16 %v773
        %v1096 = vunpack.c.l.b16 %v774
        %v1097 = vunpack.c.h.b16 %v774
        %v1098 = vunpack.c.l.b16 %v775
        %v1099 = vunpack.c.h.b16 %v775
        %v1100 = vunpack.c.l.b16 %v776
        %v1101 = vunpack.c.h.b16 %v776
        %v1102 = vunpack.c.l.b16 %v777
        %v1103 = vunpack.c.h.b16 %v777
        %v1104 = vunpack.c.l.b16 %v778
        %v1105 = vunpack.c.h.b16 %v778
        %v1106 = vunpack.c.l.b16 %v779
        %v1107 = vunpack.c.h.b16 %v779
        %v1108 = vunpack.c.l.b16 %v780
        %v1109 = vunpack.c.h.b16 %v780
        %v1110 = vunpack.c.l.b16 %v781
        %v1111 = vunpack.c.h.b16 %v781
        %v1112 = vunpack.c.l.b16 %v782
        %v1113 = vunpack.c.h.b16 %v782
        %v1114 = vunpack.c.l.b16 %v783
        %v1115 = vunpack.c.h.b16 %v783
        %v1116 = vunpack.c.l.b16 %v784
        %v1117 = vunpack.c.h.b16 %v784
        %v1118 = vunpack.c.l.b16 %v785
        %v1119 = vunpack.c.h.b16 %v785
        %v1120 = vunpack.c.l.b16 %v786
        %v1121 = vunpack.c.h.b16 %v786
        %v1122 = vunpack.c.l.b16 %v787
        %v1123 = vunpack.c.h.b16 %v787
        %v1124 = vunpack.c.l.b16 %v788
        %v1125 = vunpack.c.h.b16 %v788
        %v1126 = vunpack.c.l.b16 %v789
        %v1127 = vunpack.c.h.b16 %v789
        %v1128 = vunpack.c.l.b16 %v790
        %v1129 = vunpack.c.h.b16 %v790
        %v1130 = vunpack.c.l.b16 %v791
        %v1131 = vunpack.c.h.b16 %v791
        %v1132 = vunpack.c.l.b16 %v792
        %v1133 = vunpack.c.h.b16 %v792
        %v1134 = vunpack.c.l.b16 %v793
        %v1135 = vunpack.c.h.b16 %v793
        %v1136 = vunpack.c.l.b16 %v794
        %v1137 = vunpack.c.h.b16 %v794
        %v1138 = vunpack.c.l.b16 %v795
        %v1139 = vunpack.c.h.b16 %v795
        %v1140 = vunpack.c.l.b16 %v796
        %v1141 = vunpack.c.h.b16 %v796
        %v1142 = vunpack.c.l.b16 %v797
        %v1143 = vunpack.c.h.b16 %v797
        %v1144 = vunpack.c.l.b16 %v798
        %v1145 = vunpack.c.h.b16 %v798
        %v1146 = vunpack.c.l.b16 %v799
        %v1147 = vunpack.c.h.b16 %v799
        %v1148 = vpack.c.b16 %v926, %v924
        %v1149 = vpack.c.b16 %v927, %v925
        %v1150 = vpack.c.b16 %v930, %v928
        %v1151 = vpack.c.b16 %v931, %v929
        %v1152 = vpack.c.b16 %v934, %v932
        %v1153 = vpack.c.b16 %v935, %v933
        %v1154 = vpack.c.b16 %v938, %v936
        %v1155 = vpack.c.b16 %v939, %v937
        %v1156 = vpack.c.b16 %v942, %v940
        %v1157 = vpack.c.b16 %v943, %v941
        %v1158 = vpack.c.b16 %v946, %v944
        %v1159 = vpack.c.b16 %v947, %v945
        %v1160 = vpack.c.b16 %v950, %v948
        %v1161 = vpack.c.b16 %v951, %v949
        %v1162 = vpack.c.b16 %v954, %v952
        %v1163 = vpack.c.b16 %v955, %v953
        %v1164 = vpack.c.b16 %v958, %v956
        %v1165 = vpack.c.b16 %v959, %v957
        %v1166 = vpack.c.b16 %v962, %v960
        %v1167 = vpack.c.b16 %v963, %v961
        %v1168 = vpack.c.b16 %v966, %v964
        %v1169 = vpack.c.b16 %v967, %v965
        %v1170 = vpack.c.b16 %v970, %v968
        %v1171 = vpack.c.b16 %v971, %v969
        %v1172 = vpack.c.b16 %v974, %v972
        %v1173 = vpack.c.b16 %v975, %v973
        %v1174 = vpack.c.b16 %v978, %v976
        %v1175 = vpack.c.b16 %v979, %v977
        %v1176 = vpack.c.b16 %v982, %v980
        %v1177 = vpack.c.b16 %v983, %v981
        %v1178 = vpack.c.b16 %v986, %v984
        %v1179 = vpack.c.b16 %v987, %v985
        %v1180 = vpack.c.b16 %v990, %v988
        %v1181 = vpack.c.b16 %v991, %v989
        %v1182 = vpack.c.b16 %v994, %v992
        %v1183 = vpack.c.b16 %v995, %v993
        %v1184 = vpack.c.b16 %v998, %v996
        %v1185 = vpack.c.b16 %v999, %v997
        %v1186 = vpack.c.b16 %v1002, %v1000
        %v1187 = vpack.c.b16 %v1003, %v1001
        %v1188 = vpack.c.b16 %v1006, %v1004
        %v1189 = vpack.c.b16 %v1007, %v1005
        %v1190 = vpack.c.b16 %v1010, %v1008
        %v1191 = vpack.c.b16 %v1011, %v1009
        %v1192 = vpack.c.b16 %v1014, %v1012
        %v1193 = vpack.c.b16 %v1015, %v1013
        %v1194 = vpack.c.b16 %v1018, %v1016
        %v1195 = vpack.c.b16 %v1019, %v1017
        %v1196 = vpack.c.b16 %v1022, %v1020
        %v1197 = vpack.c.b16 %v1023, %v1021
        %v1198 = vpack.c.b16 %v1026, %v1024
        %v1199 = vpack.c.b16 %v1027, %v1025
        %v1200 = vpack.c.b16 %v1030, %v1028
        %v1201 = vpack.c.b16 %v1031, %v1029
        %v1202 = vpack.c.b16 %v1034, %v1032
        %v1203 = vpack.c.b16 %v1035, %v1033
        %v1204 = vpack.c.b16 %v1038, %v1036
        %v1205 = vpack.c.b16 %v1039, %v1037
        %v1206 = vpack.c.b16 %v1042, %v1040
        %v1207 = vpack.c.b16 %v1043, %v1041
        %v1208 = vpack.c.b16 %v1046, %v1044
        %v1209 = vpack.c.b16 %v1047, %v1045
        %v1210 = vpack.c.b16 %v1050, %v1048
        %v1211 = vpack.c.b16 %v1051, %v1049
        %v1212 = vpack.c.b16 %v1054, %v1052
        %v1213 = vpack.c.b16 %v1055, %v1053
        %v1214 = vpack.c.b16 %v1058, %v1056
        %v1215 = vpack.c.b16 %v1059, %v1057
        %v1216 = vpack.c.b16 %v1062, %v1060
        %v1217 = vpack.c.b16 %v1063, %v1061
        %v1218 = vpack.c.b16 %v1066, %v1064
        %v1219 = vpack.c.b16 %v1067, %v1065
        %v1220 = vpack.c.b16 %v1070, %v1068
        %v1221 = vpack.c.b16 %v1071, %v1069
        %v1222 = vpack.c.b16 %v1074, %v1072
        %v1223 = vpack.c.b16 %v1075, %v1073
        %v1224 = vpack.c.b16 %v1078, %v1076
        %v1225 = vpack.c.b16 %v1079, %v1077
        %v1226 = vpack.c.b16 %v1082, %v1080
        %v1227 = vpack.c.b16 %v1083, %v1081
        %v1228 = vpack.c.b16 %v1086, %v1084
        %v1229 = vpack.c.b16 %v1087, %v1085
        %v1230 = vpack.c.b16 %v1090, %v1088
        %v1231 = vpack.c.b16 %v1091, %v1089
        %v1232 = vpack.c.b16 %v1094, %v1092
        %v1233 = vpack.c.b16 %v1095, %v1093
        %v1234 = vpack.c.b16 %v1098, %v1096
        %v1235 = vpack.c.b16 %v1099, %v1097
        %v1236 = vpack.c.b16 %v1102, %v1100
        %v1237 = vpack.c.b16 %v1103, %v1101
        %v1238 = vpack.c.b16 %v1106, %v1104
        %v1239 = vpack.c.b16 %v1107, %v1105
        %v1240 = vpack.c.b16 %v1110, %v1108
        %v1241 = vpack.c.b16 %v1111, %v1109
        %v1242 = vpack.c.b16 %v1114, %v1112
        %v1243 = vpack.c.b16 %v1115, %v1113
        %v1244 = vpack.c.b16 %v1118, %v1116
        %v1245 = vpack.c.b16 %v1119, %v1117
        %v1246 = vpack.c.b16 %v1122, %v1120
        %v1247 = vpack.c.b16 %v1123, %v1121
        %v1248 = vpack.c.b16 %v1126, %v1124
        %v1249 = vpack.c.b16 %v1127, %v1125
        %v1250 = vpack.c.b16 %v1130, %v1128
        %v1251 = vpack.c.b16 %v1131, %v1129
        %v1252 = vpack.c.b16 %v1134, %v1132
        %v1253 = vpack.c.b16 %v1135, %v1133
        %v1254 = vpack.c.b16 %v1138, %v1136
        %v1255 = vpack.c.b16 %v1139, %v1137
        %v1256 = vpack.c.b16 %v1142, %v1140
        %v1257 = vpack.c.b16 %v1143, %v1141
        %v1258 = vpack.c.b16 %v1146, %v1144
        %v1259 = vpack.c.b16 %v1147, %v1145
        %1372 = vmatprep.subr.bf16.mxu0 %v1149
        %1373 = vmatpush1.bf16.msra.mxu0 %v1148
        %1374 = vmatprep.subr.bf16.mxu0 %v1151
        %1375 = vmatpush1.bf16.msra.mxu0 %v1150
        %1376 = vmatprep.subr.bf16.mxu0 %v1153
        %1377 = vmatpush1.bf16.msra.mxu0 %v1152
        %1378 = vmatprep.subr.bf16.mxu0 %v1155
        %1379 = vmatpush1.bf16.msra.mxu0 %v1154
        %1380 = vmatprep.subr.bf16.mxu0 %v1157
        %1381 = vmatpush1.bf16.msra.mxu0 %v1156
        %1382 = vmatprep.subr.bf16.mxu0 %v1159
        %1383 = vmatpush1.bf16.msra.mxu0 %v1158
        %1384 = vmatprep.subr.bf16.mxu0 %v1161
        %1385 = vmatpush1.bf16.msra.mxu0 %v1160
        %1386 = vmatprep.subr.bf16.mxu0 %v1163
        %1387 = vmatpush1.bf16.msra.mxu0 %v1162
        %1388 = vmatprep.subr.bf16.mxu0 %v1165
        %1389 = vmatpush1.bf16.msra.mxu0 %v1164
        %1390 = vmatprep.subr.bf16.mxu0 %v1167
        %1391 = vmatpush1.bf16.msra.mxu0 %v1166
        %1392 = vmatprep.subr.bf16.mxu0 %v1169
        %1393 = vmatpush1.bf16.msra.mxu0 %v1168
        %1394 = vmatprep.subr.bf16.mxu0 %v1171
        %1395 = vmatpush1.bf16.msra.mxu0 %v1170
        %1396 = vmatprep.subr.bf16.mxu0 %v1173
        %1397 = vmatpush1.bf16.msra.mxu0 %v1172
        %1398 = vmatprep.subr.bf16.mxu0 %v1175
        %1399 = vmatpush1.bf16.msra.mxu0 %v1174
        %1400 = vmatprep.subr.bf16.mxu0 %v1177
        %1401 = vmatpush1.bf16.msra.mxu0 %v1176
        %1402 = vmatprep.subr.bf16.mxu0 %v1179
        %1403 = vmatpush1.bf16.msra.mxu0 %v1178
        %1404 = vmatprep.mubr.bf16.mxu0 %v633
        %1405 = vmatmul.mubr.bf16.gmra.mrb[0].mxu0 %v632
        %v1406 = vpop.f32.mrb[0].mxu0
        %v1407 = vadd.f32 %v805, %v1406
        %v1408 = vpop.f32.mrb[0].mxu0
        %v1409 = vadd.f32 %v809, %v1408
        %v1410 = vpop.f32.mrb[0].mxu0
        %v1411 = vadd.f32 %v805, %v1410
        %v1412 = vpop.f32.mrb[0].mxu0
        %v1413 = vadd.f32 %v809, %v1412
        %1414 = vmatprep.mubr.bf16.mxu0 %v640
        %1415 = vmatmul.mubr.bf16.gmra.mrb[0].mxu0 %v639
        %v1416 = vpop.f32.mrb[0].mxu0
        %v1417 = vadd.f32 %v805, %v1416
        %v1418 = vpop.f32.mrb[0].mxu0
        %v1419 = vadd.f32 %v809, %v1418
        %v1420 = vpop.f32.mrb[0].mxu0
        %v1421 = vadd.f32 %v805, %v1420
        %v1422 = vpop.f32.mrb[0].mxu0
        %v1423 = vadd.f32 %v809, %v1422
        %1424 = vmatprep.mubr.bf16.mxu0 %v647
        %1425 = vmatmul.mubr.bf16.gmra.mrb[0].mxu0 %v646
        %v1426 = vpop.f32.mrb[0].mxu0
        %v1427 = vadd.f32 %v805, %v1426
        %v1428 = vpop.f32.mrb[0].mxu0
        %v1429 = vadd.f32 %v809, %v1428
        %v1430 = vpop.f32.mrb[0].mxu0
        %v1431 = vadd.f32 %v805, %v1430
        %v1432 = vpop.f32.mrb[0].mxu0
        %v1433 = vadd.f32 %v809, %v1432
        %1434 = vmatprep.mubr.bf16.mxu0 %v654
        %1435 = vmatmul.mubr.bf16.gmra.mrb[0].mxu0 %v653
        %v1436 = vpop.f32.mrb[0].mxu0
        %v1437 = vadd.f32 %v805, %v1436
        %v1438 = vpop.f32.mrb[0].mxu0
        %v1439 = vadd.f32 %v809, %v1438
        %v1440 = vpop.f32.mrb[0].mxu0
        %v1441 = vadd.f32 %v805, %v1440
        %v1442 = vpop.f32.mrb[0].mxu0
        %v1443 = vadd.f32 %v809, %v1442
        %1444 = vmatprep.mubr.bf16.mxu0 %v661
        %1445 = vmatmul.mubr.bf16.gmra.mrb[0].mxu0 %v660
        %v1446 = vpop.f32.mrb[0].mxu0
        %v1447 = vadd.f32 %v805, %v1446
        %v1448 = vpop.f32.mrb[0].mxu0
        %v1449 = vadd.f32 %v809, %v1448
        %v1450 = vpop.f32.mrb[0].mxu0
        %v1451 = vadd.f32 %v805, %v1450
        %v1452 = vpop.f32.mrb[0].mxu0
        %v1453 = vadd.f32 %v809, %v1452
        %1454 = vmatprep.mubr.bf16.mxu0 %v668
        %1455 = vmatmul.mubr.bf16.gmra.mrb[0].mxu0 %v667
        %v1456 = vpop.f32.mrb[0].mxu0
        %v1457 = vadd.f32 %v805, %v1456
        %v1458 = vpop.f32.mrb[0].mxu0
        %v1459 = vadd.f32 %v809, %v1458
        %v1460 = vpop.f32.mrb[0].mxu0
        %v1461 = vadd.f32 %v805, %v1460
        %v1462 = vpop.f32.mrb[0].mxu0
        %v1463 = vadd.f32 %v809, %v1462
        %1464 = vmatprep.mubr.bf16.mxu0 %v675
        %1465 = vmatmul.mubr.bf16.gmra.mrb[0].mxu0 %v674
        %v1466 = vpop.f32.mrb[0].mxu0
        %v1467 = vadd.f32 %v805, %v1466
        %v1468 = vpop.f32.mrb[0].mxu0
        %v1469 = vadd.f32 %v809, %v1468
        %v1470 = vpop.f32.mrb[0].mxu0
        %v1471 = vadd.f32 %v805, %v1470
        %v1472 = vpop.f32.mrb[0].mxu0
        %v1473 = vadd.f32 %v809, %v1472
        %1474 = vmatprep.mubr.bf16.mxu0 %v682
        %1475 = vmatmul.mubr.bf16.gmra.mrb[0].mxu0 %v681
        %v1476 = vpop.f32.mrb[0].mxu0
        %v1477 = vadd.f32 %v805, %v1476
        %v1478 = vpop.f32.mrb[0].mxu0
        %v1479 = vadd.f32 %v809, %v1478
        %v1480 = vpop.f32.mrb[0].mxu0
        %v1481 = vadd.f32 %v805, %v1480
        %v1482 = vpop.f32.mrb[0].mxu0
        %v1483 = vadd.f32 %v809, %v1482
        %1484 = vdwg.mxu0
        %1485 = vmatprep.subr.bf16.mxu0 %v1181
        %1486 = vmatpush1.bf16.msra.mxu0 %v1180
        %1487 = vmatprep.subr.bf16.mxu0 %v1183
        %1488 = vmatpush1.bf16.msra.mxu0 %v1182
        %1489 = vmatprep.subr.bf16.mxu0 %v1185
        %1490 = vmatpush1.bf16.msra.mxu0 %v1184
        %1491 = vmatprep.subr.bf16.mxu0 %v1187
        %1492 = vmatpush1.bf16.msra.mxu0 %v1186
        %1493 = vmatprep.subr.bf16.mxu0 %v1189
        %1494 = vmatpush1.bf16.msra.mxu0 %v1188
        %1495 = vmatprep.subr.bf16.mxu0 %v1191
        %1496 = vmatpush1.bf16.msra.mxu0 %v1190
        %1497 = vmatprep.subr.bf16.mxu0 %v1193
        %1498 = vmatpush1.bf16.msra.mxu0 %v1192
        %1499 = vmatprep.subr.bf16.mxu0 %v1195
        %1500 = vmatpush1.bf16.msra.mxu0 %v1194
        %1501 = vmatprep.subr.bf16.mxu0 %v1197
        %1502 = vmatpush1.bf16.msra.mxu0 %v1196
        %1503 = vmatprep.subr.bf16.mxu0 %v1199
        %1504 = vmatpush1.bf16.msra.mxu0 %v1198
        %1505 = vmatprep.subr.bf16.mxu0 %v1201
        %1506 = vmatpush1.bf16.msra.mxu0 %v1200
        %1507 = vmatprep.subr.bf16.mxu0 %v1203
        %1508 = vmatpush1.bf16.msra.mxu0 %v1202
        %1509 = vmatprep.subr.bf16.mxu0 %v1205
        %1510 = vmatpush1.bf16.msra.mxu0 %v1204
        %1511 = vmatprep.subr.bf16.mxu0 %v1207
        %1512 = vmatpush1.bf16.msra.mxu0 %v1206
        %1513 = vmatprep.subr.bf16.mxu0 %v1209
        %1514 = vmatpush1.bf16.msra.mxu0 %v1208
        %1515 = vmatprep.subr.bf16.mxu0 %v1211
        %1516 = vmatpush1.bf16.msra.mxu0 %v1210
        %1517 = vmatprep.mubr.bf16.mxu0 %v635
        %1518 = vmatmul.mubr.bf16.gmra.mrb[0].mxu0 %v634
        %v1519 = vpop.f32.mrb[0].mxu0
        %v1520 = vadd.f32 %v1407, %v1519
        %v1521 = vpop.f32.mrb[0].mxu0
        %v1522 = vadd.f32 %v1409, %v1521
        %v1523 = vpop.f32.mrb[0].mxu0
        %v1524 = vadd.f32 %v1411, %v1523
        %v1525 = vpop.f32.mrb[0].mxu0
        %v1526 = vadd.f32 %v1413, %v1525
        %1527 = vmatprep.mubr.bf16.mxu0 %v642
        %1528 = vmatmul.mubr.bf16.gmra.mrb[0].mxu0 %v641
        %v1529 = vpop.f32.mrb[0].mxu0
        %v1530 = vadd.f32 %v1417, %v1529
        %v1531 = vpop.f32.mrb[0].mxu0
        %v1532 = vadd.f32 %v1419, %v1531
        %v1533 = vpop.f32.mrb[0].mxu0
        %v1534 = vadd.f32 %v1421, %v1533
        %v1535 = vpop.f32.mrb[0].mxu0
        %v1536 = vadd.f32 %v1423, %v1535
        %1537 = vmatprep.mubr.bf16.mxu0 %v649
        %1538 = vmatmul.mubr.bf16.gmra.mrb[0].mxu0 %v648
        %v1539 = vpop.f32.mrb[0].mxu0
        %v1540 = vadd.f32 %v1427, %v1539
        %v1541 = vpop.f32.mrb[0].mxu0
        %v1542 = vadd.f32 %v1429, %v1541
        %v1543 = vpop.f32.mrb[0].mxu0
        %v1544 = vadd.f32 %v1431, %v1543
        %v1545 = vpop.f32.mrb[0].mxu0
        %v1546 = vadd.f32 %v1433, %v1545
        %1547 = vmatprep.mubr.bf16.mxu0 %v656
        %1548 = vmatmul.mubr.bf16.gmra.mrb[0].mxu0 %v655
        %v1549 = vpop.f32.mrb[0].mxu0
        %v1550 = vadd.f32 %v1437, %v1549
        %v1551 = vpop.f32.mrb[0].mxu0
        %v1552 = vadd.f32 %v1439, %v1551
        %v1553 = vpop.f32.mrb[0].mxu0
        %v1554 = vadd.f32 %v1441, %v1553
        %v1555 = vpop.f32.mrb[0].mxu0
        %v1556 = vadd.f32 %v1443, %v1555
        %1557 = vmatprep.mubr.bf16.mxu0 %v663
        %1558 = vmatmul.mubr.bf16.gmra.mrb[0].mxu0 %v662
        %v1559 = vpop.f32.mrb[0].mxu0
        %v1560 = vadd.f32 %v1447, %v1559
        %v1561 = vpop.f32.mrb[0].mxu0
        %v1562 = vadd.f32 %v1449, %v1561
        %v1563 = vpop.f32.mrb[0].mxu0
        %v1564 = vadd.f32 %v1451, %v1563
        %v1565 = vpop.f32.mrb[0].mxu0
        %v1566 = vadd.f32 %v1453, %v1565
        %1567 = vmatprep.mubr.bf16.mxu0 %v670
        %1568 = vmatmul.mubr.bf16.gmra.mrb[0].mxu0 %v669
        %v1569 = vpop.f32.mrb[0].mxu0
        %v1570 = vadd.f32 %v1457, %v1569
        %v1571 = vpop.f32.mrb[0].mxu0
        %v1572 = vadd.f32 %v1459, %v1571
        %v1573 = vpop.f32.mrb[0].mxu0
        %v1574 = vadd.f32 %v1461, %v1573
        %v1575 = vpop.f32.mrb[0].mxu0
        %v1576 = vadd.f32 %v1463, %v1575
        %1577 = vmatprep.mubr.bf16.mxu0 %v677
        %1578 = vmatmul.mubr.bf16.gmra.mrb[0].mxu0 %v676
        %v1579 = vpop.f32.mrb[0].mxu0
        %v1580 = vadd.f32 %v1467, %v1579
        %v1581 = vpop.f32.mrb[0].mxu0
        %v1582 = vadd.f32 %v1469, %v1581
        %v1583 = vpop.f32.mrb[0].mxu0
        %v1584 = vadd.f32 %v1471, %v1583
        %v1585 = vpop.f32.mrb[0].mxu0
        %v1586 = vadd.f32 %v1473, %v1585
        %1587 = vmatprep.mubr.bf16.mxu0 %v684
        %1588 = vmatmul.mubr.bf16.gmra.mrb[0].mxu0 %v683
        %v1589 = vpop.f32.mrb[0].mxu0
        %v1590 = vadd.f32 %v1477, %v1589
        %v1591 = vpop.f32.mrb[0].mxu0
        %v1592 = vadd.f32 %v1479, %v1591
        %v1593 = vpop.f32.mrb[0].mxu0
        %v1594 = vadd.f32 %v1481, %v1593
        %v1595 = vpop.f32.mrb[0].mxu0
        %v1596 = vadd.f32 %v1483, %v1595
        %1597 = vdwg.mxu0
        %1598 = vmatprep.subr.bf16.mxu0 %v1213
        %1599 = vmatpush1.bf16.msra.mxu0 %v1212
        %1600 = vmatprep.subr.bf16.mxu0 %v1215
        %1601 = vmatpush1.bf16.msra.mxu0 %v1214
        %1602 = vmatprep.subr.bf16.mxu0 %v1217
        %1603 = vmatpush1.bf16.msra.mxu0 %v1216
        %1604 = vmatprep.subr.bf16.mxu0 %v1219
        %1605 = vmatpush1.bf16.msra.mxu0 %v1218
        %1606 = vmatprep.subr.bf16.mxu0 %v1221
        %1607 = vmatpush1.bf16.msra.mxu0 %v1220
        %1608 = vmatprep.subr.bf16.mxu0 %v1223
        %1609 = vmatpush1.bf16.msra.mxu0 %v1222
        %1610 = vmatprep.subr.bf16.mxu0 %v1225
        %1611 = vmatpush1.bf16.msra.mxu0 %v1224
        %1612 = vmatprep.subr.bf16.mxu0 %v1227
        %1613 = vmatpush1.bf16.msra.mxu0 %v1226
        %1614 = vmatprep.subr.bf16.mxu0 %v1229
        %1615 = vmatpush1.bf16.msra.mxu0 %v1228
        %1616 = vmatprep.subr.bf16.mxu0 %v1231
        %1617 = vmatpush1.bf16.msra.mxu0 %v1230
        %1618 = vmatprep.subr.bf16.mxu0 %v1233
        %1619 = vmatpush1.bf16.msra.mxu0 %v1232
        %1620 = vmatprep.subr.bf16.mxu0 %v1235
        %1621 = vmatpush1.bf16.msra.mxu0 %v1234
        %1622 = vmatprep.subr.bf16.mxu0 %v1237
        %1623 = vmatpush1.bf16.msra.mxu0 %v1236
        %1624 = vmatprep.subr.bf16.mxu0 %v1239
        %1625 = vmatpush1.bf16.msra.mxu0 %v1238
        %1626 = vmatprep.subr.bf16.mxu0 %v1241
        %1627 = vmatpush1.bf16.msra.mxu0 %v1240
        %1628 = vmatprep.subr.bf16.mxu0 %v1243
        %1629 = vmatpush1.bf16.msra.mxu0 %v1242
        %1630 = vmatprep.mubr.bf16.mxu0 %v637
        %1631 = vmatmul.mubr.bf16.gmra.mrb[0].mxu0 %v636
        %v1632 = vpop.f32.mrb[0].mxu0
        %v1633 = vadd.f32 %v1520, %v1632
        %v1634 = vpop.f32.mrb[0].mxu0
        %v1635 = vadd.f32 %v1522, %v1634
        %v1636 = vpop.f32.mrb[0].mxu0
        %v1637 = vadd.f32 %v1524, %v1636
        %v1638 = vpop.f32.mrb[0].mxu0
        %v1639 = vadd.f32 %v1526, %v1638
        %1640 = vmatprep.mubr.bf16.mxu0 %v644
        %1641 = vmatmul.mubr.bf16.gmra.mrb[0].mxu0 %v643
        %v1642 = vpop.f32.mrb[0].mxu0
        %v1643 = vadd.f32 %v1530, %v1642
        %v1644 = vpop.f32.mrb[0].mxu0
        %v1645 = vadd.f32 %v1532, %v1644
        %v1646 = vpop.f32.mrb[0].mxu0
        %v1647 = vadd.f32 %v1534, %v1646
        %v1648 = vpop.f32.mrb[0].mxu0
        %v1649 = vadd.f32 %v1536, %v1648
        %1650 = vmatprep.mubr.bf16.mxu0 %v651
        %1651 = vmatmul.mubr.bf16.gmra.mrb[0].mxu0 %v650
        %v1652 = vpop.f32.mrb[0].mxu0
        %v1653 = vadd.f32 %v1540, %v1652
        %v1654 = vpop.f32.mrb[0].mxu0
        %v1655 = vadd.f32 %v1542, %v1654
        %v1656 = vpop.f32.mrb[0].mxu0
        %v1657 = vadd.f32 %v1544, %v1656
        %v1658 = vpop.f32.mrb[0].mxu0
        %v1659 = vadd.f32 %v1546, %v1658
        %1660 = vmatprep.mubr.bf16.mxu0 %v658
        %1661 = vmatmul.mubr.bf16.gmra.mrb[0].mxu0 %v657
        %v1662 = vpop.f32.mrb[0].mxu0
        %v1663 = vadd.f32 %v1550, %v1662
        %v1664 = vpop.f32.mrb[0].mxu0
        %v1665 = vadd.f32 %v1552, %v1664
        %v1666 = vpop.f32.mrb[0].mxu0
        %v1667 = vadd.f32 %v1554, %v1666
        %v1668 = vpop.f32.mrb[0].mxu0
        %v1669 = vadd.f32 %v1556, %v1668
        %1670 = vmatprep.mubr.bf16.mxu0 %v665
        %1671 = vmatmul.mubr.bf16.gmra.mrb[0].mxu0 %v664
        %v1672 = vpop.f32.mrb[0].mxu0
        %v1673 = vadd.f32 %v1560, %v1672
        %v1674 = vpop.f32.mrb[0].mxu0
        %v1675 = vadd.f32 %v1562, %v1674
        %v1676 = vpop.f32.mrb[0].mxu0
        %v1677 = vadd.f32 %v1564, %v1676
        %v1678 = vpop.f32.mrb[0].mxu0
        %v1679 = vadd.f32 %v1566, %v1678
        %1680 = vmatprep.mubr.bf16.mxu0 %v672
        %1681 = vmatmul.mubr.bf16.gmra.mrb[0].mxu0 %v671
        %v1682 = vpop.f32.mrb[0].mxu0
        %v1683 = vadd.f32 %v1570, %v1682
        %v1684 = vpop.f32.mrb[0].mxu0
        %v1685 = vadd.f32 %v1572, %v1684
        %v1686 = vpop.f32.mrb[0].mxu0
        %v1687 = vadd.f32 %v1574, %v1686
        %v1688 = vpop.f32.mrb[0].mxu0
        %v1689 = vadd.f32 %v1576, %v1688
        %1690 = vmatprep.mubr.bf16.mxu0 %v679
        %1691 = vmatmul.mubr.bf16.gmra.mrb[0].mxu0 %v678
        %v1692 = vpop.f32.mrb[0].mxu0
        %v1693 = vadd.f32 %v1580, %v1692
        %v1694 = vpop.f32.mrb[0].mxu0
        %v1695 = vadd.f32 %v1582, %v1694
        %v1696 = vpop.f32.mrb[0].mxu0
        %v1697 = vadd.f32 %v1584, %v1696
        %v1698 = vpop.f32.mrb[0].mxu0
        %v1699 = vadd.f32 %v1586, %v1698
        %1700 = vmatprep.mubr.bf16.mxu0 %v686
        %1701 = vmatmul.mubr.bf16.gmra.mrb[0].mxu0 %v685
        %v1702 = vpop.f32.mrb[0].mxu0
        %v1703 = vadd.f32 %v1590, %v1702
        %v1704 = vpop.f32.mrb[0].mxu0
        %v1705 = vadd.f32 %v1592, %v1704
        %v1706 = vpop.f32.mrb[0].mxu0
        %v1707 = vadd.f32 %v1594, %v1706
        %v1708 = vpop.f32.mrb[0].mxu0
        %v1709 = vadd.f32 %v1596, %v1708
        %1710 = vdwg.mxu0
        %1711 = vmatprep.subr.bf16.mxu0 %v1245
        %1712 = vmatpush1.bf16.msra.mxu0 %v1244
        %1713 = vmatprep.subr.bf16.mxu0 %v1247
        %1714 = vmatpush1.bf16.msra.mxu0 %v1246
        %1715 = vmatprep.subr.bf16.mxu0 %v1249
        %1716 = vmatpush1.bf16.msra.mxu0 %v1248
        %1717 = vmatprep.subr.bf16.mxu0 %v1251
        %1718 = vmatpush1.bf16.msra.mxu0 %v1250
        %1719 = vmatprep.subr.bf16.mxu0 %v1253
        %1720 = vmatpush1.bf16.msra.mxu0 %v1252
        %1721 = vmatprep.subr.bf16.mxu0 %v1255
        %1722 = vmatpush1.bf16.msra.mxu0 %v1254
        %1723 = vmatprep.subr.bf16.mxu0 %v1257
        %1724 = vmatpush1.bf16.msra.mxu0 %v1256
        %1725 = vmatprep.subr.bf16.mxu0 %v1259
        %1726 = vmatpush1.bf16.msra.mxu0 %v1258
        %1727 = vmatprep.subr.bf16.mxu0 0
        %1728 = vmatpush1.bf16.msra.mxu0 0
        %1729 = vmatprep.subr.bf16.mxu0 0
        %1730 = vmatpush1.bf16.msra.mxu0 0
        %1731 = vmatprep.subr.bf16.mxu0 0
        %1732 = vmatpush1.bf16.msra.mxu0 0
        %1733 = vmatprep.subr.bf16.mxu0 0
        %1734 = vmatpush1.bf16.msra.mxu0 0
        %1735 = vmatprep.subr.bf16.mxu0 0
        %1736 = vmatpush1.bf16.msra.mxu0 0
        %1737 = vmatprep.subr.bf16.mxu0 0
        %1738 = vmatpush1.bf16.msra.mxu0 0
        %1739 = vmatprep.subr.bf16.mxu0 0
        %1740 = vmatpush1.bf16.msra.mxu0 0
        %1741 = vmatprep.subr.bf16.mxu0 0
        %1742 = vmatpush1.bf16.msra.mxu0 0
        %1743 = vmatprep.mubr.bf16.mxu0 0
        %1744 = vmatmul.mubr.bf16.gmra.mrb[0].mxu0 %v638
        %v1745 = vpop.f32.mrb[0].mxu0
        %v1746 = vadd.f32 %v1633, %v1745
        %v1747 = vpop.f32.mrb[0].mxu0
        %v1748 = vadd.f32 %v1635, %v1747
        %v1749 = vpop.f32.mrb[0].mxu0
        %v1750 = vadd.f32 %v1637, %v1749
        %v1751 = vpop.f32.mrb[0].mxu0
        %v1752 = vadd.f32 %v1639, %v1751
        %1753 = vmatprep.mubr.bf16.mxu0 0
        %1754 = vmatmul.mubr.bf16.gmra.mrb[0].mxu0 %v645
        %v1755 = vpop.f32.mrb[0].mxu0
        %v1756 = vadd.f32 %v1643, %v1755
        %v1757 = vpop.f32.mrb[0].mxu0
        %v1758 = vadd.f32 %v1645, %v1757
        %v1759 = vpop.f32.mrb[0].mxu0
        %v1760 = vadd.f32 %v1647, %v1759
        %v1761 = vpop.f32.mrb[0].mxu0
        %v1762 = vadd.f32 %v1649, %v1761
        %1763 = vmatprep.mubr.bf16.mxu0 0
        %1764 = vmatmul.mubr.bf16.gmra.mrb[0].mxu0 %v652
        %v1765 = vpop.f32.mrb[0].mxu0
        %v1766 = vadd.f32 %v1653, %v1765
        %v1767 = vpop.f32.mrb[0].mxu0
        %v1768 = vadd.f32 %v1655, %v1767
        %v1769 = vpop.f32.mrb[0].mxu0
        %v1770 = vadd.f32 %v1657, %v1769
        %v1771 = vpop.f32.mrb[0].mxu0
        %v1772 = vadd.f32 %v1659, %v1771
        %1773 = vmatprep.mubr.bf16.mxu0 0
        %1774 = vmatmul.mubr.bf16.gmra.mrb[0].mxu0 %v659
        %v1775 = vpop.f32.mrb[0].mxu0
        %v1776 = vadd.f32 %v1663, %v1775
        %v1777 = vpop.f32.mrb[0].mxu0
        %v1778 = vadd.f32 %v1665, %v1777
        %v1779 = vpop.f32.mrb[0].mxu0
        %v1780 = vadd.f32 %v1667, %v1779
        %v1781 = vpop.f32.mrb[0].mxu0
        %v1782 = vadd.f32 %v1669, %v1781
        %1783 = vmatprep.mubr.bf16.mxu0 0
        %1784 = vmatmul.mubr.bf16.gmra.mrb[0].mxu0 %v666
        %v1785 = vpop.f32.mrb[0].mxu0
        %v1786 = vadd.f32 %v1673, %v1785
        %v1787 = vpop.f32.mrb[0].mxu0
        %v1788 = vadd.f32 %v1675, %v1787
        %v1789 = vpop.f32.mrb[0].mxu0
        %v1790 = vadd.f32 %v1677, %v1789
        %v1791 = vpop.f32.mrb[0].mxu0
        %v1792 = vadd.f32 %v1679, %v1791
        %1793 = vmatprep.mubr.bf16.mxu0 0
        %1794 = vmatmul.mubr.bf16.gmra.mrb[0].mxu0 %v673
        %v1795 = vpop.f32.mrb[0].mxu0
        %v1796 = vadd.f32 %v1683, %v1795
        %v1797 = vpop.f32.mrb[0].mxu0
        %v1798 = vadd.f32 %v1685, %v1797
        %v1799 = vpop.f32.mrb[0].mxu0
        %v1800 = vadd.f32 %v1687, %v1799
        %v1801 = vpop.f32.mrb[0].mxu0
        %v1802 = vadd.f32 %v1689, %v1801
        %1803 = vmatprep.mubr.bf16.mxu0 0
        %1804 = vmatmul.mubr.bf16.gmra.mrb[0].mxu0 %v680
        %v1805 = vpop.f32.mrb[0].mxu0
        %v1806 = vadd.f32 %v1693, %v1805
        %v1807 = vpop.f32.mrb[0].mxu0
        %v1808 = vadd.f32 %v1695, %v1807
        %v1809 = vpop.f32.mrb[0].mxu0
        %v1810 = vadd.f32 %v1697, %v1809
        %v1811 = vpop.f32.mrb[0].mxu0
        %v1812 = vadd.f32 %v1699, %v1811
        %1813 = vmatprep.mubr.bf16.mxu0 0
        %1814 = vmatmul.mubr.bf16.gmra.mrb[0].mxu0 %v687
        %v1815 = vpop.f32.mrb[0].mxu0
        %v1816 = vadd.f32 %v1703, %v1815
        %v1817 = vpop.f32.mrb[0].mxu0
        %v1818 = vadd.f32 %v1705, %v1817
        %v1819 = vpop.f32.mrb[0].mxu0
        %v1820 = vadd.f32 %v1707, %v1819
        %v1821 = vpop.f32.mrb[0].mxu0
        %v1822 = vadd.f32 %v1709, %v1821
        %1823 = vdwg.mxu0
        %v1824 = vmax.f32 %v1746, 0.0
        %v1825 = vmax.f32 %v1748, 0.0
        %v1826 = vmax.f32 %v1750, 0.0
        %v1827 = vmax.f32 %v1752, 0.0
        %v1828 = vmax.f32 %v1756, 0.0
        %v1829 = vmax.f32 %v1758, 0.0
        %v1830 = vmax.f32 %v1760, 0.0
        %v1831 = vmax.f32 %v1762, 0.0
        %v1832 = vmax.f32 %v1766, 0.0
        %v1833 = vmax.f32 %v1768, 0.0
        %v1834 = vmax.f32 %v1770, 0.0
        %v1835 = vmax.f32 %v1772, 0.0
        %v1836 = vmax.f32 %v1776, 0.0
        %v1837 = vmax.f32 %v1778, 0.0
        %v1838 = vmax.f32 %v1780, 0.0
        %v1839 = vmax.f32 %v1782, 0.0
        %v1840 = vmax.f32 %v1786, 0.0
        %v1841 = vmax.f32 %v1788, 0.0
        %v1842 = vmax.f32 %v1790, 0.0
        %v1843 = vmax.f32 %v1792, 0.0
        %v1844 = vmax.f32 %v1796, 0.0
        %v1845 = vmax.f32 %v1798, 0.0
        %v1846 = vmax.f32 %v1800, 0.0
        %v1847 = vmax.f32 %v1802, 0.0
        %v1848 = vmax.f32 %v1806, 0.0
        %v1849 = vmax.f32 %v1808, 0.0
        %v1850 = vmax.f32 %v1810, 0.0
        %v1851 = vmax.f32 %v1812, 0.0
        %v1852 = vmax.f32 %v1816, 0.0
        %v1853 = vmax.f32 %v1818, 0.0
        %v1854 = vmax.f32 %v1820, 0.0
        %v1855 = vmax.f32 %v1822, 0.0
        %v1856 = vpack.c.bf16 %v1826, %v1824
        %v1857 = vpack.c.bf16 %v1827, %v1825
        %v1858 = vpack.c.bf16 %v1830, %v1828
        %v1859 = vpack.c.bf16 %v1831, %v1829
        %v1860 = vpack.c.bf16 %v1834, %v1832
        %v1861 = vpack.c.bf16 %v1835, %v1833
        %v1862 = vpack.c.bf16 %v1838, %v1836
        %v1863 = vpack.c.bf16 %v1839, %v1837
        %v1864 = vpack.c.bf16 %v1842, %v1840
        %v1865 = vpack.c.bf16 %v1843, %v1841
        %v1866 = vpack.c.bf16 %v1846, %v1844
        %v1867 = vpack.c.bf16 %v1847, %v1845
        %v1868 = vpack.c.bf16 %v1850, %v1848
        %v1869 = vpack.c.bf16 %v1851, %v1849
        %v1870 = vpack.c.bf16 %v1854, %v1852
        %v1871 = vpack.c.bf16 %v1855, %v1853
        %v1872 = vld [vmem:[#allocation8] sm:$0xff]
        %v1873 = vld [vmem:[#allocation8 + $0x8] sm:$0xff]
        %v1874 = vld [vmem:[#allocation8 + $0x10] sm:$0xff]
        %v1875 = vld [vmem:[#allocation8 + $0x18] sm:$0xff]
        %v1876 = vld [vmem:[#allocation8 + $0x20] sm:$0xff]
        %v1877 = vld [vmem:[#allocation8 + $0x28] sm:$0xff]
        %v1878 = vld [vmem:[#allocation8 + $0x30] sm:$0xff]
        %v1879 = vld [vmem:[#allocation8 + $0x38] sm:$0xff]
        %v1880 = vld [vmem:[#allocation8 + $0x40] sm:$0xff]
        %v1881 = vld [vmem:[#allocation8 + $0x48] sm:$0xff]
        %v1882 = vld [vmem:[#allocation8 + $0x50] sm:$0xff]
        %v1883 = vld [vmem:[#allocation8 + $0x58] sm:$0xff]
        %v1884 = vld [vmem:[#allocation8 + $0x60] sm:$0xff]
        %v1885 = vld [vmem:[#allocation8 + $0x68] sm:$0xff]
        %v1886 = vld [vmem:[#allocation8 + $0x70] sm:$0xff]
        %v1887 = vld [vmem:[#allocation8 + $0x78] sm:$0xff]
        %v1888 = vld [vmem:[#allocation8 + $0x80] sm:$0xff]
        %v1889 = vld [vmem:[#allocation8 + $0x88] sm:$0xff]
        %v1890 = vld [vmem:[#allocation8 + $0x90] sm:$0xff]
        %v1891 = vld [vmem:[#allocation8 + $0x98] sm:$0xff]
        %v1892 = vld [vmem:[#allocation8 + $0xa0] sm:$0xff]
        %v1893 = vld [vmem:[#allocation8 + $0xa8] sm:$0xff]
        %v1894 = vld [vmem:[#allocation8 + $0xb0] sm:$0xff]
        %v1895 = vld [vmem:[#allocation8 + $0xb8] sm:$0xff]
        %v1896 = vld [vmem:[#allocation8 + $0xc0] sm:$0xff]
        %v1897 = vld [vmem:[#allocation8 + $0xc8] sm:$0xff]
        %v1898 = vld [vmem:[#allocation8 + $0xd0] sm:$0xff]
        %v1899 = vld [vmem:[#allocation8 + $0xd8] sm:$0xff]
        %v1900 = vld [vmem:[#allocation8 + $0xe0] sm:$0xff]
        %v1901 = vld [vmem:[#allocation8 + $0xe8] sm:$0xff]
        %v1902 = vld [vmem:[#allocation8 + $0xf0] sm:$0xff]
        %v1903 = vld [vmem:[#allocation8 + $0xf8] sm:$0xff]
        %v1904 = vld [vmem:[%s5] sm:$0x3]
        %v1906 = vlaneseq
        %v1907 = vshrl.u32 %v1906, 7
        %v1908 = vsub.s32 0, %v1907
        %v1909 = vrot.slane %v1904, %v1908
        %v1910 = vlaneseq
        %v1911 = vshrl.u32 %v1910, 7
        %v1912 = vsub.s32 1, %v1911
        %v1913 = vrot.slane %v1904, %v1912
        %v1948 = vunpack.c.l.b16 %v1872
        %v1949 = vunpack.c.h.b16 %v1872
        %v1950 = vunpack.c.l.b16 %v1873
        %v1951 = vunpack.c.h.b16 %v1873
        %v1952 = vunpack.c.l.b16 %v1874
        %v1953 = vunpack.c.h.b16 %v1874
        %v1954 = vunpack.c.l.b16 %v1875
        %v1955 = vunpack.c.h.b16 %v1875
        %v1956 = vunpack.c.l.b16 %v1876
        %v1957 = vunpack.c.h.b16 %v1876
        %v1958 = vunpack.c.l.b16 %v1877
        %v1959 = vunpack.c.h.b16 %v1877
        %v1960 = vunpack.c.l.b16 %v1878
        %v1961 = vunpack.c.h.b16 %v1878
        %v1962 = vunpack.c.l.b16 %v1879
        %v1963 = vunpack.c.h.b16 %v1879
        %v1964 = vunpack.c.l.b16 %v1880
        %v1965 = vunpack.c.h.b16 %v1880
        %v1966 = vunpack.c.l.b16 %v1881
        %v1967 = vunpack.c.h.b16 %v1881
        %v1968 = vunpack.c.l.b16 %v1882
        %v1969 = vunpack.c.h.b16 %v1882
        %v1970 = vunpack.c.l.b16 %v1883
        %v1971 = vunpack.c.h.b16 %v1883
        %v1972 = vunpack.c.l.b16 %v1884
        %v1973 = vunpack.c.h.b16 %v1884
        %v1974 = vunpack.c.l.b16 %v1885
        %v1975 = vunpack.c.h.b16 %v1885
        %v1976 = vunpack.c.l.b16 %v1886
        %v1977 = vunpack.c.h.b16 %v1886
        %v1978 = vunpack.c.l.b16 %v1887
        %v1979 = vunpack.c.h.b16 %v1887
        %v1980 = vunpack.c.l.b16 %v1888
        %v1981 = vunpack.c.h.b16 %v1888
        %v1982 = vunpack.c.l.b16 %v1889
        %v1983 = vunpack.c.h.b16 %v1889
        %v1984 = vunpack.c.l.b16 %v1890
        %v1985 = vunpack.c.h.b16 %v1890
        %v1986 = vunpack.c.l.b16 %v1891
        %v1987 = vunpack.c.h.b16 %v1891
        %v1988 = vunpack.c.l.b16 %v1892
        %v1989 = vunpack.c.h.b16 %v1892
        %v1990 = vunpack.c.l.b16 %v1893
        %v1991 = vunpack.c.h.b16 %v1893
        %v1992 = vunpack.c.l.b16 %v1894
        %v1993 = vunpack.c.h.b16 %v1894
        %v1994 = vunpack.c.l.b16 %v1895
        %v1995 = vunpack.c.h.b16 %v1895
        %v1996 = vunpack.c.l.b16 %v1896
        %v1997 = vunpack.c.h.b16 %v1896
        %v1998 = vunpack.c.l.b16 %v1897
        %v1999 = vunpack.c.h.b16 %v1897
        %v2000 = vunpack.c.l.b16 %v1898
        %v2001 = vunpack.c.h.b16 %v1898
        %v2002 = vunpack.c.l.b16 %v1899
        %v2003 = vunpack.c.h.b16 %v1899
        %v2004 = vunpack.c.l.b16 %v1900
        %v2005 = vunpack.c.h.b16 %v1900
        %v2006 = vunpack.c.l.b16 %v1901
        %v2007 = vunpack.c.h.b16 %v1901
        %v2008 = vunpack.c.l.b16 %v1902
        %v2009 = vunpack.c.h.b16 %v1902
        %v2010 = vunpack.c.l.b16 %v1903
        %v2011 = vunpack.c.h.b16 %v1903
        %v2012 = vpack.c.b16 %v1950, %v1948
        %v2013 = vpack.c.b16 %v1951, %v1949
        %v2014 = vpack.c.b16 %v1954, %v1952
        %v2015 = vpack.c.b16 %v1955, %v1953
        %v2016 = vpack.c.b16 %v1958, %v1956
        %v2017 = vpack.c.b16 %v1959, %v1957
        %v2018 = vpack.c.b16 %v1962, %v1960
        %v2019 = vpack.c.b16 %v1963, %v1961
        %v2020 = vpack.c.b16 %v1966, %v1964
        %v2021 = vpack.c.b16 %v1967, %v1965
        %v2022 = vpack.c.b16 %v1970, %v1968
        %v2023 = vpack.c.b16 %v1971, %v1969
        %v2024 = vpack.c.b16 %v1974, %v1972
        %v2025 = vpack.c.b16 %v1975, %v1973
        %v2026 = vpack.c.b16 %v1978, %v1976
        %v2027 = vpack.c.b16 %v1979, %v1977
        %v2028 = vpack.c.b16 %v1982, %v1980
        %v2029 = vpack.c.b16 %v1983, %v1981
        %v2030 = vpack.c.b16 %v1986, %v1984
        %v2031 = vpack.c.b16 %v1987, %v1985
        %v2032 = vpack.c.b16 %v1990, %v1988
        %v2033 = vpack.c.b16 %v1991, %v1989
        %v2034 = vpack.c.b16 %v1994, %v1992
        %v2035 = vpack.c.b16 %v1995, %v1993
        %v2036 = vpack.c.b16 %v1998, %v1996
        %v2037 = vpack.c.b16 %v1999, %v1997
        %v2038 = vpack.c.b16 %v2002, %v2000
        %v2039 = vpack.c.b16 %v2003, %v2001
        %v2040 = vpack.c.b16 %v2006, %v2004
        %v2041 = vpack.c.b16 %v2007, %v2005
        %v2042 = vpack.c.b16 %v2010, %v2008
        %v2043 = vpack.c.b16 %v2011, %v2009
        %2076 = vmatprep.subr.bf16.mxu0 %v2013
        %2077 = vmatpush1.bf16.msra.mxu0 %v2012
        %2078 = vmatprep.subr.bf16.mxu0 %v2015
        %2079 = vmatpush1.bf16.msra.mxu0 %v2014
        %2080 = vmatprep.subr.bf16.mxu0 %v2017
        %2081 = vmatpush1.bf16.msra.mxu0 %v2016
        %2082 = vmatprep.subr.bf16.mxu0 %v2019
        %2083 = vmatpush1.bf16.msra.mxu0 %v2018
        %2084 = vmatprep.subr.bf16.mxu0 %v2021
        %2085 = vmatpush1.bf16.msra.mxu0 %v2020
        %2086 = vmatprep.subr.bf16.mxu0 %v2023
        %2087 = vmatpush1.bf16.msra.mxu0 %v2022
        %2088 = vmatprep.subr.bf16.mxu0 %v2025
        %2089 = vmatpush1.bf16.msra.mxu0 %v2024
        %2090 = vmatprep.subr.bf16.mxu0 %v2027
        %2091 = vmatpush1.bf16.msra.mxu0 %v2026
        %2092 = vmatprep.subr.bf16.mxu0 %v2029
        %2093 = vmatpush1.bf16.msra.mxu0 %v2028
        %2094 = vmatprep.subr.bf16.mxu0 %v2031
        %2095 = vmatpush1.bf16.msra.mxu0 %v2030
        %2096 = vmatprep.subr.bf16.mxu0 %v2033
        %2097 = vmatpush1.bf16.msra.mxu0 %v2032
        %2098 = vmatprep.subr.bf16.mxu0 %v2035
        %2099 = vmatpush1.bf16.msra.mxu0 %v2034
        %2100 = vmatprep.subr.bf16.mxu0 %v2037
        %2101 = vmatpush1.bf16.msra.mxu0 %v2036
        %2102 = vmatprep.subr.bf16.mxu0 %v2039
        %2103 = vmatpush1.bf16.msra.mxu0 %v2038
        %2104 = vmatprep.subr.bf16.mxu0 %v2041
        %2105 = vmatpush1.bf16.msra.mxu0 %v2040
        %2106 = vmatprep.subr.bf16.mxu0 %v2043
        %2107 = vmatpush1.bf16.msra.mxu0 %v2042
        %2108 = vmatprep.mubr.bf16.mxu0 %v1857
        %2109 = vmatmul.mubr.bf16.gmra.mrb[0].mxu0 %v1856
        %v2110 = vpop.f32.mrb[0].mxu0
        %v2111 = vadd.f32 %v1909, %v2110
        %v2112 = vpop.f32.mrb[0].mxu0
        %v2113 = vadd.f32 %v1913, %v2112
        %v2114 = vpop.f32.mrb[0].mxu0
        %v2115 = vadd.f32 %v1909, %v2114
        %v2116 = vpop.f32.mrb[0].mxu0
        %v2117 = vadd.f32 %v1913, %v2116
        %2118 = vmatprep.mubr.bf16.mxu0 %v1859
        %2119 = vmatmul.mubr.bf16.gmra.mrb[0].mxu0 %v1858
        %v2120 = vpop.f32.mrb[0].mxu0
        %v2121 = vadd.f32 %v1909, %v2120
        %v2122 = vpop.f32.mrb[0].mxu0
        %v2123 = vadd.f32 %v1913, %v2122
        %v2124 = vpop.f32.mrb[0].mxu0
        %v2125 = vadd.f32 %v1909, %v2124
        %v2126 = vpop.f32.mrb[0].mxu0
        %v2127 = vadd.f32 %v1913, %v2126
        %2128 = vmatprep.mubr.bf16.mxu0 %v1861
        %2129 = vmatmul.mubr.bf16.gmra.mrb[0].mxu0 %v1860
        %v2130 = vpop.f32.mrb[0].mxu0
        %v2131 = vadd.f32 %v1909, %v2130
        %v2132 = vpop.f32.mrb[0].mxu0
        %v2133 = vadd.f32 %v1913, %v2132
        %v2134 = vpop.f32.mrb[0].mxu0
        %v2135 = vadd.f32 %v1909, %v2134
        %v2136 = vpop.f32.mrb[0].mxu0
        %v2137 = vadd.f32 %v1913, %v2136
        %2138 = vmatprep.mubr.bf16.mxu0 %v1863
        %2139 = vmatmul.mubr.bf16.gmra.mrb[0].mxu0 %v1862
        %v2140 = vpop.f32.mrb[0].mxu0
        %v2141 = vadd.f32 %v1909, %v2140
        %v2142 = vpop.f32.mrb[0].mxu0
        %v2143 = vadd.f32 %v1913, %v2142
        %v2144 = vpop.f32.mrb[0].mxu0
        %v2145 = vadd.f32 %v1909, %v2144
        %v2146 = vpop.f32.mrb[0].mxu0
        %v2147 = vadd.f32 %v1913, %v2146
        %2148 = vmatprep.mubr.bf16.mxu0 %v1865
        %2149 = vmatmul.mubr.bf16.gmra.mrb[0].mxu0 %v1864
        %v2150 = vpop.f32.mrb[0].mxu0
        %v2151 = vadd.f32 %v1909, %v2150
        %v2152 = vpop.f32.mrb[0].mxu0
        %v2153 = vadd.f32 %v1913, %v2152
        %v2154 = vpop.f32.mrb[0].mxu0
        %v2155 = vadd.f32 %v1909, %v2154
        %v2156 = vpop.f32.mrb[0].mxu0
        %v2157 = vadd.f32 %v1913, %v2156
        %2158 = vmatprep.mubr.bf16.mxu0 %v1867
        %2159 = vmatmul.mubr.bf16.gmra.mrb[0].mxu0 %v1866
        %v2160 = vpop.f32.mrb[0].mxu0
        %v2161 = vadd.f32 %v1909, %v2160
        %v2162 = vpop.f32.mrb[0].mxu0
        %v2163 = vadd.f32 %v1913, %v2162
        %v2164 = vpop.f32.mrb[0].mxu0
        %v2165 = vadd.f32 %v1909, %v2164
        %v2166 = vpop.f32.mrb[0].mxu0
        %v2167 = vadd.f32 %v1913, %v2166
        %2168 = vmatprep.mubr.bf16.mxu0 %v1869
        %2169 = vmatmul.mubr.bf16.gmra.mrb[0].mxu0 %v1868
        %v2170 = vpop.f32.mrb[0].mxu0
        %v2171 = vadd.f32 %v1909, %v2170
        %v2172 = vpop.f32.mrb[0].mxu0
        %v2173 = vadd.f32 %v1913, %v2172
        %v2174 = vpop.f32.mrb[0].mxu0
        %v2175 = vadd.f32 %v1909, %v2174
        %v2176 = vpop.f32.mrb[0].mxu0
        %v2177 = vadd.f32 %v1913, %v2176
        %2178 = vmatprep.mubr.bf16.mxu0 %v1871
        %2179 = vmatmul.mubr.bf16.gmra.mrb[0].mxu0 %v1870
        %v2180 = vpop.f32.mrb[0].mxu0
        %v2181 = vadd.f32 %v1909, %v2180
        %v2182 = vpop.f32.mrb[0].mxu0
        %v2183 = vadd.f32 %v1913, %v2182
        %v2184 = vpop.f32.mrb[0].mxu0
        %v2185 = vadd.f32 %v1909, %v2184
        %v2186 = vpop.f32.mrb[0].mxu0
        %v2187 = vadd.f32 %v1913, %v2186
        %2188 = vdwg.mxu0
        %v2189 = vmul.f32 %v2113, 0.5
        %v2190 = vmul.f32 %v2117, 0.5
        %v2191 = vmul.f32 %v2123, 0.5
        %v2192 = vmul.f32 %v2127, 0.5
        %v2193 = vmul.f32 %v2133, 0.5
        %v2194 = vmul.f32 %v2137, 0.5
        %v2195 = vmul.f32 %v2143, 0.5
        %v2196 = vmul.f32 %v2147, 0.5
        %v2197 = vmul.f32 %v2153, 0.5
        %v2198 = vmul.f32 %v2157, 0.5
        %v2199 = vmul.f32 %v2163, 0.5
        %v2200 = vmul.f32 %v2167, 0.5
        %v2201 = vmul.f32 %v2173, 0.5
        %v2202 = vmul.f32 %v2177, 0.5
        %v2203 = vmul.f32 %v2183, 0.5
        %v2204 = vmul.f32 %v2187, 0.5
        %v2205 = vmul.f32 %v2189, 1.442695
        %v2206 = vpow.pop %v2205
        %v2207 = vmul.f32 %v2190, 1.442695
        %v2208 = vpow.pop %v2207
        %v2209 = vmul.f32 %v2191, 1.442695
        %v2210 = vpow.pop %v2209
        %v2211 = vmul.f32 %v2192, 1.442695
        %v2212 = vpow.pop %v2211
        %v2213 = vmul.f32 %v2193, 1.442695
        %v2214 = vpow.pop %v2213
        %v2215 = vmul.f32 %v2194, 1.442695
        %v2216 = vpow.pop %v2215
        %v2217 = vmul.f32 %v2195, 1.442695
        %v2218 = vpow.pop %v2217
        %v2219 = vmul.f32 %v2196, 1.442695
        %v2220 = vpow.pop %v2219
        %v2221 = vmul.f32 %v2197, 1.442695
        %v2222 = vpow.pop %v2221
        %v2223 = vmul.f32 %v2198, 1.442695
        %v2224 = vpow.pop %v2223
        %v2225 = vmul.f32 %v2199, 1.442695
        %v2226 = vpow.pop %v2225
        %v2227 = vmul.f32 %v2200, 1.442695
        %v2228 = vpow.pop %v2227
        %v2229 = vmul.f32 %v2201, 1.442695
        %v2230 = vpow.pop %v2229
        %v2231 = vmul.f32 %v2202, 1.442695
        %v2232 = vpow.pop %v2231
        %v2233 = vmul.f32 %v2203, 1.442695
        %v2234 = vpow.pop %v2233
        %v2235 = vmul.f32 %v2204, 1.442695
        %v2236 = vpow.pop %v2235
        %v2237 = vld [vmem:[%s450] sm:$0xff]
        %v2238 = vld [vmem:[%s450 + $0x8] sm:$0xff]
        %v2239 = vld [vmem:[%s450 + $0x10] sm:$0xff]
        %v2240 = vld [vmem:[%s450 + $0x18] sm:$0xff]
        %v2241 = vld [vmem:[%s450 + $0x20] sm:$0xff]
        %v2242 = vld [vmem:[%s450 + $0x28] sm:$0xff]
        %v2243 = vld [vmem:[%s450 + $0x30] sm:$0xff]
        %v2244 = vld [vmem:[%s450 + $0x38] sm:$0xff]
        %v2245 = vld [vmem:[%s450 + $0x40] sm:$0xff]
        %v2246 = vld [vmem:[%s450 + $0x48] sm:$0xff]
        %v2247 = vld [vmem:[%s450 + $0x50] sm:$0xff]
        %v2248 = vld [vmem:[%s450 + $0x58] sm:$0xff]
        %v2249 = vld [vmem:[%s450 + $0x60] sm:$0xff]
        %v2250 = vld [vmem:[%s450 + $0x68] sm:$0xff]
        %v2251 = vld [vmem:[%s450 + $0x70] sm:$0xff]
        %v2252 = vld [vmem:[%s450 + $0x78] sm:$0xff]
        %v2253 = vmul.f32 %v2206, %v2237
        %v2254 = vmul.f32 %v2208, %v2238
        %v2255 = vmul.f32 %v2210, %v2239
        %v2256 = vmul.f32 %v2212, %v2240
        %v2257 = vmul.f32 %v2214, %v2241
        %v2258 = vmul.f32 %v2216, %v2242
        %v2259 = vmul.f32 %v2218, %v2243
        %v2260 = vmul.f32 %v2220, %v2244
        %v2261 = vmul.f32 %v2222, %v2245
        %v2262 = vmul.f32 %v2224, %v2246
        %v2263 = vmul.f32 %v2226, %v2247
        %v2264 = vmul.f32 %v2228, %v2248
        %v2265 = vmul.f32 %v2230, %v2249
        %v2266 = vmul.f32 %v2232, %v2250
        %v2267 = vmul.f32 %v2234, %v2251
        %v2268 = vmul.f32 %v2236, %v2252
        %v2269 = vadd.f32 %v2111, %v2253
        %v2270 = vadd.f32 %v2115, %v2254
        %v2271 = vadd.f32 %v2121, %v2255
        %v2272 = vadd.f32 %v2125, %v2256
        %v2273 = vadd.f32 %v2131, %v2257
        %v2274 = vadd.f32 %v2135, %v2258
        %v2275 = vadd.f32 %v2141, %v2259
        %v2276 = vadd.f32 %v2145, %v2260
        %v2277 = vadd.f32 %v2151, %v2261
        %v2278 = vadd.f32 %v2155, %v2262
        %v2279 = vadd.f32 %v2161, %v2263
        %v2280 = vadd.f32 %v2165, %v2264
        %v2281 = vadd.f32 %v2171, %v2265
        %v2282 = vadd.f32 %v2175, %v2266
        %v2283 = vadd.f32 %v2181, %v2267
        %v2284 = vadd.f32 %v2185, %v2268
        %2285 = vst [vmem:[%s507] sm:$0xff] %v2269
        %2286 = vst [vmem:[%s507 + $0x8] sm:$0xff] %v2270
        %2287 = vst [vmem:[%s507 + $0x10] sm:$0xff] %v2271
        %2288 = vst [vmem:[%s507 + $0x18] sm:$0xff] %v2272
        %2289 = vst [vmem:[%s507 + $0x20] sm:$0xff] %v2273
        %2290 = vst [vmem:[%s507 + $0x28] sm:$0xff] %v2274
        %2291 = vst [vmem:[%s507 + $0x30] sm:$0xff] %v2275
        %2292 = vst [vmem:[%s507 + $0x38] sm:$0xff] %v2276
        %2293 = vst [vmem:[%s507 + $0x40] sm:$0xff] %v2277
        %2294 = vst [vmem:[%s507 + $0x48] sm:$0xff] %v2278
        %2295 = vst [vmem:[%s507 + $0x50] sm:$0xff] %v2279
        %2296 = vst [vmem:[%s507 + $0x58] sm:$0xff] %v2280
        %2297 = vst [vmem:[%s507 + $0x60] sm:$0xff] %v2281
        %2298 = vst [vmem:[%s507 + $0x68] sm:$0xff] %v2282
        %2299 = vst [vmem:[%s507 + $0x70] sm:$0xff] %v2283
        %2300 = vst [vmem:[%s507 + $0x78] sm:$0xff] %v2284
        %v2301 = vpack.c.bf16 %v2270, %v2269
        %v2302 = vpack.c.bf16 %v2272, %v2271
        %v2303 = vpack.c.bf16 %v2274, %v2273
        %v2304 = vpack.c.bf16 %v2276, %v2275
        %v2305 = vpack.c.bf16 %v2278, %v2277
        %v2306 = vpack.c.bf16 %v2280, %v2279
        %v2307 = vpack.c.bf16 %v2282, %v2281
        %v2308 = vpack.c.bf16 %v2284, %v2283
        %v2309 = vld [vmem:[#allocation10] sm:$0xff]
        %v2310 = vld [vmem:[#allocation10 + $0x8] sm:$0xff]
        %v2311 = vld [vmem:[#allocation10 + $0x10] sm:$0xff]
        %v2312 = vld [vmem:[#allocation10 + $0x18] sm:$0xff]
        %v2313 = vld [vmem:[#allocation10 + $0x20] sm:$0xff]
        %v2314 = vld [vmem:[#allocation10 + $0x28] sm:$0xff]
        %v2315 = vld [vmem:[#allocation10 + $0x30] sm:$0xff]
        %v2316 = vld [vmem:[#allocation10 + $0x38] sm:$0xff]
        %v2317 = vld [vmem:[#allocation10 + $0x40] sm:$0xff]
        %v2318 = vld [vmem:[#allocation10 + $0x48] sm:$0xff]
        %v2319 = vld [vmem:[#allocation10 + $0x50] sm:$0xff]
        %v2320 = vld [vmem:[#allocation10 + $0x58] sm:$0xff]
        %v2321 = vld [vmem:[#allocation10 + $0x60] sm:$0xff]
        %v2322 = vld [vmem:[#allocation10 + $0x68] sm:$0xff]
        %v2323 = vld [vmem:[#allocation10 + $0x70] sm:$0xff]
        %v2324 = vld [vmem:[#allocation10 + $0x78] sm:$0xff]
        %v2325 = vld [vmem:[%s7] sm:$0x3]
        %v2327 = vlaneseq
        %v2328 = vshrl.u32 %v2327, 7
        %v2329 = vsub.s32 0, %v2328
        %v2330 = vrot.slane %v2325, %v2329
        %v2331 = vlaneseq
        %v2332 = vshrl.u32 %v2331, 7
        %v2333 = vsub.s32 1, %v2332
        %v2334 = vrot.slane %v2325, %v2333
        %v2353 = vunpack.c.l.b16 %v2309
        %v2354 = vunpack.c.h.b16 %v2309
        %v2355 = vunpack.c.l.b16 %v2310
        %v2356 = vunpack.c.h.b16 %v2310
        %v2357 = vunpack.c.l.b16 %v2311
        %v2358 = vunpack.c.h.b16 %v2311
        %v2359 = vunpack.c.l.b16 %v2312
        %v2360 = vunpack.c.h.b16 %v2312
        %v2361 = vunpack.c.l.b16 %v2313
        %v2362 = vunpack.c.h.b16 %v2313
        %v2363 = vunpack.c.l.b16 %v2314
        %v2364 = vunpack.c.h.b16 %v2314
        %v2365 = vunpack.c.l.b16 %v2315
        %v2366 = vunpack.c.h.b16 %v2315
        %v2367 = vunpack.c.l.b16 %v2316
        %v2368 = vunpack.c.h.b16 %v2316
        %v2369 = vunpack.c.l.b16 %v2317
        %v2370 = vunpack.c.h.b16 %v2317
        %v2371 = vunpack.c.l.b16 %v2318
        %v2372 = vunpack.c.h.b16 %v2318
        %v2373 = vunpack.c.l.b16 %v2319
        %v2374 = vunpack.c.h.b16 %v2319
        %v2375 = vunpack.c.l.b16 %v2320
        %v2376 = vunpack.c.h.b16 %v2320
        %v2377 = vunpack.c.l.b16 %v2321
        %v2378 = vunpack.c.h.b16 %v2321
        %v2379 = vunpack.c.l.b16 %v2322
        %v2380 = vunpack.c.h.b16 %v2322
        %v2381 = vunpack.c.l.b16 %v2323
        %v2382 = vunpack.c.h.b16 %v2323
        %v2383 = vunpack.c.l.b16 %v2324
        %v2384 = vunpack.c.h.b16 %v2324
        %v2385 = vpack.c.b16 %v2355, %v2353
        %v2386 = vpack.c.b16 %v2356, %v2354
        %v2387 = vpack.c.b16 %v2359, %v2357
        %v2388 = vpack.c.b16 %v2360, %v2358
        %v2389 = vpack.c.b16 %v2363, %v2361
        %v2390 = vpack.c.b16 %v2364, %v2362
        %v2391 = vpack.c.b16 %v2367, %v2365
        %v2392 = vpack.c.b16 %v2368, %v2366
        %v2393 = vpack.c.b16 %v2371, %v2369
        %v2394 = vpack.c.b16 %v2372, %v2370
        %v2395 = vpack.c.b16 %v2375, %v2373
        %v2396 = vpack.c.b16 %v2376, %v2374
        %v2397 = vpack.c.b16 %v2379, %v2377
        %v2398 = vpack.c.b16 %v2380, %v2378
        %v2399 = vpack.c.b16 %v2383, %v2381
        %v2400 = vpack.c.b16 %v2384, %v2382
        %2417 = vmatprep.subr.bf16.mxu0 %v2386
        %2418 = vmatpush1.bf16.msra.mxu0 %v2385
        %2419 = vmatprep.subr.bf16.mxu0 %v2388
        %2420 = vmatpush1.bf16.msra.mxu0 %v2387
        %2421 = vmatprep.subr.bf16.mxu0 %v2390
        %2422 = vmatpush1.bf16.msra.mxu0 %v2389
        %2423 = vmatprep.subr.bf16.mxu0 %v2392
        %2424 = vmatpush1.bf16.msra.mxu0 %v2391
        %2425 = vmatprep.subr.bf16.mxu0 %v2394
        %2426 = vmatpush1.bf16.msra.mxu0 %v2393
        %2427 = vmatprep.subr.bf16.mxu0 %v2396
        %2428 = vmatpush1.bf16.msra.mxu0 %v2395
        %2429 = vmatprep.subr.bf16.mxu0 %v2398
        %2430 = vmatpush1.bf16.msra.mxu0 %v2397
        %2431 = vmatprep.subr.bf16.mxu0 %v2400
        %2432 = vmatpush1.bf16.msra.mxu0 %v2399
        %2433 = vmatprep.subr.bf16.mxu0 0
        %2434 = vmatpush1.bf16.msra.mxu0 0
        %2435 = vmatprep.subr.bf16.mxu0 0
        %2436 = vmatpush1.bf16.msra.mxu0 0
        %2437 = vmatprep.subr.bf16.mxu0 0
        %2438 = vmatpush1.bf16.msra.mxu0 0
        %2439 = vmatprep.subr.bf16.mxu0 0
        %2440 = vmatpush1.bf16.msra.mxu0 0
        %2441 = vmatprep.subr.bf16.mxu0 0
        %2442 = vmatpush1.bf16.msra.mxu0 0
        %2443 = vmatprep.subr.bf16.mxu0 0
        %2444 = vmatpush1.bf16.msra.mxu0 0
        %2445 = vmatprep.subr.bf16.mxu0 0
        %2446 = vmatpush1.bf16.msra.mxu0 0
        %2447 = vmatprep.subr.bf16.mxu0 0
        %2448 = vmatpush1.bf16.msra.mxu0 0
        %2449 = vmatprep.mubr.bf16.mxu0 0
        %2450 = vmatmul.mubr.bf16.gmra.mrb[0].mxu0 %v2301
        %v2451 = vpop.f32.mrb[0].mxu0
        %v2452 = vadd.f32 %v2330, %v2451
        %v2453 = vpop.f32.mrb[0].mxu0
        %v2454 = vadd.f32 %v2334, %v2453
        %v2455 = vpop.f32.mrb[0].mxu0
        %v2456 = vadd.f32 %v2330, %v2455
        %v2457 = vpop.f32.mrb[0].mxu0
        %v2458 = vadd.f32 %v2334, %v2457
        %2459 = vmatprep.mubr.bf16.mxu0 0
        %2460 = vmatmul.mubr.bf16.gmra.mrb[0].mxu0 %v2302
        %v2461 = vpop.f32.mrb[0].mxu0
        %v2462 = vadd.f32 %v2330, %v2461
        %v2463 = vpop.f32.mrb[0].mxu0
        %v2464 = vadd.f32 %v2334, %v2463
        %v2465 = vpop.f32.mrb[0].mxu0
        %v2466 = vadd.f32 %v2330, %v2465
        %v2467 = vpop.f32.mrb[0].mxu0
        %v2468 = vadd.f32 %v2334, %v2467
        %2469 = vmatprep.mubr.bf16.mxu0 0
        %2470 = vmatmul.mubr.bf16.gmra.mrb[0].mxu0 %v2303
        %v2471 = vpop.f32.mrb[0].mxu0
        %v2472 = vadd.f32 %v2330, %v2471
        %v2473 = vpop.f32.mrb[0].mxu0
        %v2474 = vadd.f32 %v2334, %v2473
        %v2475 = vpop.f32.mrb[0].mxu0
        %v2476 = vadd.f32 %v2330, %v2475
        %v2477 = vpop.f32.mrb[0].mxu0
        %v2478 = vadd.f32 %v2334, %v2477
        %2479 = vmatprep.mubr.bf16.mxu0 0
        %2480 = vmatmul.mubr.bf16.gmra.mrb[0].mxu0 %v2304
        %v2481 = vpop.f32.mrb[0].mxu0
        %v2482 = vadd.f32 %v2330, %v2481
        %v2483 = vpop.f32.mrb[0].mxu0
        %v2484 = vadd.f32 %v2334, %v2483
        %v2485 = vpop.f32.mrb[0].mxu0
        %v2486 = vadd.f32 %v2330, %v2485
        %v2487 = vpop.f32.mrb[0].mxu0
        %v2488 = vadd.f32 %v2334, %v2487
        %2489 = vmatprep.mubr.bf16.mxu0 0
        %2490 = vmatmul.mubr.bf16.gmra.mrb[0].mxu0 %v2305
        %v2491 = vpop.f32.mrb[0].mxu0
        %v2492 = vadd.f32 %v2330, %v2491
        %v2493 = vpop.f32.mrb[0].mxu0
        %v2494 = vadd.f32 %v2334, %v2493
        %v2495 = vpop.f32.mrb[0].mxu0
        %v2496 = vadd.f32 %v2330, %v2495
        %v2497 = vpop.f32.mrb[0].mxu0
        %v2498 = vadd.f32 %v2334, %v2497
        %2499 = vmatprep.mubr.bf16.mxu0 0
        %2500 = vmatmul.mubr.bf16.gmra.mrb[0].mxu0 %v2306
        %v2501 = vpop.f32.mrb[0].mxu0
        %v2502 = vadd.f32 %v2330, %v2501
        %v2503 = vpop.f32.mrb[0].mxu0
        %v2504 = vadd.f32 %v2334, %v2503
        %v2505 = vpop.f32.mrb[0].mxu0
        %v2506 = vadd.f32 %v2330, %v2505
        %v2507 = vpop.f32.mrb[0].mxu0
        %v2508 = vadd.f32 %v2334, %v2507
        %2509 = vmatprep.mubr.bf16.mxu0 0
        %2510 = vmatmul.mubr.bf16.gmra.mrb[0].mxu0 %v2307
        %v2511 = vpop.f32.mrb[0].mxu0
        %v2512 = vadd.f32 %v2330, %v2511
        %v2513 = vpop.f32.mrb[0].mxu0
        %v2514 = vadd.f32 %v2334, %v2513
        %v2515 = vpop.f32.mrb[0].mxu0
        %v2516 = vadd.f32 %v2330, %v2515
        %v2517 = vpop.f32.mrb[0].mxu0
        %v2518 = vadd.f32 %v2334, %v2517
        %2519 = vmatprep.mubr.bf16.mxu0 0
        %2520 = vmatmul.mubr.bf16.gmra.mrb[0].mxu0 %v2308
        %v2521 = vpop.f32.mrb[0].mxu0
        %v2522 = vadd.f32 %v2330, %v2521
        %v2523 = vpop.f32.mrb[0].mxu0
        %v2524 = vadd.f32 %v2334, %v2523
        %v2525 = vpop.f32.mrb[0].mxu0
        %v2526 = vadd.f32 %v2330, %v2525
        %v2527 = vpop.f32.mrb[0].mxu0
        %v2528 = vadd.f32 %v2334, %v2527
        %2529 = vdwg.mxu0
        %v2530 = vmax.f32 %v2452, 0.0
        %v2531 = vmax.f32 %v2454, 0.0
        %v2532 = vmax.f32 %v2456, 0.0
        %v2533 = vmax.f32 %v2458, 0.0
        %v2534 = vmax.f32 %v2462, 0.0
        %v2535 = vmax.f32 %v2464, 0.0
        %v2536 = vmax.f32 %v2466, 0.0
        %v2537 = vmax.f32 %v2468, 0.0
        %v2538 = vmax.f32 %v2472, 0.0
        %v2539 = vmax.f32 %v2474, 0.0
        %v2540 = vmax.f32 %v2476, 0.0
        %v2541 = vmax.f32 %v2478, 0.0
        %v2542 = vmax.f32 %v2482, 0.0
        %v2543 = vmax.f32 %v2484, 0.0
        %v2544 = vmax.f32 %v2486, 0.0
        %v2545 = vmax.f32 %v2488, 0.0
        %v2546 = vmax.f32 %v2492, 0.0
        %v2547 = vmax.f32 %v2494, 0.0
        %v2548 = vmax.f32 %v2496, 0.0
        %v2549 = vmax.f32 %v2498, 0.0
        %v2550 = vmax.f32 %v2502, 0.0
        %v2551 = vmax.f32 %v2504, 0.0
        %v2552 = vmax.f32 %v2506, 0.0
        %v2553 = vmax.f32 %v2508, 0.0
        %v2554 = vmax.f32 %v2512, 0.0
        %v2555 = vmax.f32 %v2514, 0.0
        %v2556 = vmax.f32 %v2516, 0.0
        %v2557 = vmax.f32 %v2518, 0.0
        %v2558 = vmax.f32 %v2522, 0.0
        %v2559 = vmax.f32 %v2524, 0.0
        %v2560 = vmax.f32 %v2526, 0.0
        %v2561 = vmax.f32 %v2528, 0.0
        %v2562 = vpack.c.bf16 %v2532, %v2530
        %v2563 = vpack.c.bf16 %v2533, %v2531
        %v2564 = vpack.c.bf16 %v2536, %v2534
        %v2565 = vpack.c.bf16 %v2537, %v2535
        %v2566 = vpack.c.bf16 %v2540, %v2538
        %v2567 = vpack.c.bf16 %v2541, %v2539
        %v2568 = vpack.c.bf16 %v2544, %v2542
        %v2569 = vpack.c.bf16 %v2545, %v2543
        %v2570 = vpack.c.bf16 %v2548, %v2546
        %v2571 = vpack.c.bf16 %v2549, %v2547
        %v2572 = vpack.c.bf16 %v2552, %v2550
        %v2573 = vpack.c.bf16 %v2553, %v2551
        %v2574 = vpack.c.bf16 %v2556, %v2554
        %v2575 = vpack.c.bf16 %v2557, %v2555
        %v2576 = vpack.c.bf16 %v2560, %v2558
        %v2577 = vpack.c.bf16 %v2561, %v2559
        %v2578 = vld [vmem:[#allocation11] sm:$0xff]
        %v2579 = vld [vmem:[#allocation11 + $0x8] sm:$0xff]
        %v2580 = vld [vmem:[#allocation11 + $0x10] sm:$0xff]
        %v2581 = vld [vmem:[#allocation11 + $0x18] sm:$0xf]
        %v2582 = vld [vmem:[#allocation11 + $0x1c] sm:$0xff]
        %v2583 = vld [vmem:[#allocation11 + $0x24] sm:$0xff]
        %v2584 = vld [vmem:[#allocation11 + $0x2c] sm:$0xff]
        %v2585 = vld [vmem:[#allocation11 + $0x34] sm:$0xf]
        %v2586 = vld [vmem:[#allocation11 + $0x38] sm:$0xff]
        %v2587 = vld [vmem:[#allocation11 + $0x40] sm:$0xff]
        %v2588 = vld [vmem:[#allocation11 + $0x48] sm:$0xff]
        %v2589 = vld [vmem:[#allocation11 + $0x50] sm:$0xf]
        %v2590 = vld [vmem:[#allocation11 + $0x54] sm:$0xff]
        %v2591 = vld [vmem:[#allocation11 + $0x5c] sm:$0xff]
        %v2592 = vld [vmem:[#allocation11 + $0x64] sm:$0xff]
        %v2593 = vld [vmem:[#allocation11 + $0x6c] sm:$0xf]
        %v2594 = vld [vmem:[#allocation11 + $0x70] sm:$0xff]
        %v2595 = vld [vmem:[#allocation11 + $0x78] sm:$0xff]
        %v2596 = vld [vmem:[#allocation11 + $0x80] sm:$0xff]
        %v2597 = vld [vmem:[#allocation11 + $0x88] sm:$0xf]
        %v2598 = vld [vmem:[#allocation11 + $0x8c] sm:$0xff]
        %v2599 = vld [vmem:[#allocation11 + $0x94] sm:$0xff]
        %v2600 = vld [vmem:[#allocation11 + $0x9c] sm:$0xff]
        %v2601 = vld [vmem:[#allocation11 + $0xa4] sm:$0xf]
        %v2602 = vld [vmem:[#allocation11 + $0xa8] sm:$0xff]
        %v2603 = vld [vmem:[#allocation11 + $0xb0] sm:$0xff]
        %v2604 = vld [vmem:[#allocation11 + $0xb8] sm:$0xff]
        %v2605 = vld [vmem:[#allocation11 + $0xc0] sm:$0xf]
        %v2606 = vld [vmem:[#allocation11 + $0xc4] sm:$0xff]
        %v2607 = vld [vmem:[#allocation11 + $0xcc] sm:$0xff]
        %v2608 = vld [vmem:[#allocation11 + $0xd4] sm:$0xff]
        %v2609 = vld [vmem:[#allocation11 + $0xdc] sm:$0xf]
        %v2610 = vld [vmem:[#allocation11 + $0xe0] sm:$0xff]
        %v2611 = vld [vmem:[#allocation11 + $0xe8] sm:$0xff]
        %v2612 = vld [vmem:[#allocation11 + $0xf0] sm:$0xff]
        %v2613 = vld [vmem:[#allocation11 + $0xf8] sm:$0xf]
        %v2614 = vld [vmem:[#allocation11 + $0xfc] sm:$0xff]
        %v2615 = vld [vmem:[#allocation11 + $0x104] sm:$0xff]
        %v2616 = vld [vmem:[#allocation11 + $0x10c] sm:$0xff]
        %v2617 = vld [vmem:[#allocation11 + $0x114] sm:$0xf]
        %v2618 = vld [vmem:[#allocation11 + $0x118] sm:$0xff]
        %v2619 = vld [vmem:[#allocation11 + $0x120] sm:$0xff]
        %v2620 = vld [vmem:[#allocation11 + $0x128] sm:$0xff]
        %v2621 = vld [vmem:[#allocation11 + $0x130] sm:$0xf]
        %v2622 = vld [vmem:[#allocation11 + $0x134] sm:$0xff]
        %v2623 = vld [vmem:[#allocation11 + $0x13c] sm:$0xff]
        %v2624 = vld [vmem:[#allocation11 + $0x144] sm:$0xff]
        %v2625 = vld [vmem:[#allocation11 + $0x14c] sm:$0xf]
        %v2626 = vld [vmem:[#allocation11 + $0x150] sm:$0xff]
        %v2627 = vld [vmem:[#allocation11 + $0x158] sm:$0xff]
        %v2628 = vld [vmem:[#allocation11 + $0x160] sm:$0xff]
        %v2629 = vld [vmem:[#allocation11 + $0x168] sm:$0xf]
        %v2630 = vld [vmem:[#allocation11 + $0x16c] sm:$0xff]
        %v2631 = vld [vmem:[#allocation11 + $0x174] sm:$0xff]
        %v2632 = vld [vmem:[#allocation11 + $0x17c] sm:$0xff]
        %v2633 = vld [vmem:[#allocation11 + $0x184] sm:$0xf]
        %v2634 = vld [vmem:[#allocation11 + $0x188] sm:$0xff]
        %v2635 = vld [vmem:[#allocation11 + $0x190] sm:$0xff]
        %v2636 = vld [vmem:[#allocation11 + $0x198] sm:$0xff]
        %v2637 = vld [vmem:[#allocation11 + $0x1a0] sm:$0xf]
        %v2638 = vld [vmem:[#allocation11 + $0x1a4] sm:$0xff]
        %v2639 = vld [vmem:[#allocation11 + $0x1ac] sm:$0xff]
        %v2640 = vld [vmem:[#allocation11 + $0x1b4] sm:$0xff]
        %v2641 = vld [vmem:[#allocation11 + $0x1bc] sm:$0xf]
        %v2642 = vld [vmem:[#allocation11 + $0x1c0] sm:$0xff]
        %v2643 = vld [vmem:[#allocation11 + $0x1c8] sm:$0xff]
        %v2644 = vld [vmem:[#allocation11 + $0x1d0] sm:$0xff]
        %v2645 = vld [vmem:[#allocation11 + $0x1d8] sm:$0xf]
        %v2646 = vld [vmem:[#allocation11 + $0x1dc] sm:$0xff]
        %v2647 = vld [vmem:[#allocation11 + $0x1e4] sm:$0xff]
        %v2648 = vld [vmem:[#allocation11 + $0x1ec] sm:$0xff]
        %v2649 = vld [vmem:[#allocation11 + $0x1f4] sm:$0xf]
        %v2650 = vld [vmem:[#allocation11 + $0x1f8] sm:$0xff]
        %v2651 = vld [vmem:[#allocation11 + $0x200] sm:$0xff]
        %v2652 = vld [vmem:[#allocation11 + $0x208] sm:$0xff]
        %v2653 = vld [vmem:[#allocation11 + $0x210] sm:$0xf]
        %v2654 = vld [vmem:[#allocation11 + $0x214] sm:$0xff]
        %v2655 = vld [vmem:[#allocation11 + $0x21c] sm:$0xff]
        %v2656 = vld [vmem:[#allocation11 + $0x224] sm:$0xff]
        %v2657 = vld [vmem:[#allocation11 + $0x22c] sm:$0xf]
        %v2658 = vld [vmem:[#allocation11 + $0x230] sm:$0xff]
        %v2659 = vld [vmem:[#allocation11 + $0x238] sm:$0xff]
        %v2660 = vld [vmem:[#allocation11 + $0x240] sm:$0xff]
        %v2661 = vld [vmem:[#allocation11 + $0x248] sm:$0xf]
        %v2662 = vld [vmem:[#allocation11 + $0x24c] sm:$0xff]
        %v2663 = vld [vmem:[#allocation11 + $0x254] sm:$0xff]
        %v2664 = vld [vmem:[#allocation11 + $0x25c] sm:$0xff]
        %v2665 = vld [vmem:[#allocation11 + $0x264] sm:$0xf]
        %v2666 = vld [vmem:[#allocation11 + $0x268] sm:$0xff]
        %v2667 = vld [vmem:[#allocation11 + $0x270] sm:$0xff]
        %v2668 = vld [vmem:[#allocation11 + $0x278] sm:$0xff]
        %v2669 = vld [vmem:[#allocation11 + $0x280] sm:$0xf]
        %v2670 = vld [vmem:[#allocation11 + $0x284] sm:$0xff]
        %v2671 = vld [vmem:[#allocation11 + $0x28c] sm:$0xff]
        %v2672 = vld [vmem:[#allocation11 + $0x294] sm:$0xff]
        %v2673 = vld [vmem:[#allocation11 + $0x29c] sm:$0xf]
        %v2674 = vld [vmem:[#allocation11 + $0x2a0] sm:$0xff]
        %v2675 = vld [vmem:[#allocation11 + $0x2a8] sm:$0xff]
        %v2676 = vld [vmem:[#allocation11 + $0x2b0] sm:$0xff]
        %v2677 = vld [vmem:[#allocation11 + $0x2b8] sm:$0xf]
        %v2678 = vld [vmem:[#allocation11 + $0x2bc] sm:$0xff]
        %v2679 = vld [vmem:[#allocation11 + $0x2c4] sm:$0xff]
        %v2680 = vld [vmem:[#allocation11 + $0x2cc] sm:$0xff]
        %v2681 = vld [vmem:[#allocation11 + $0x2d4] sm:$0xf]
        %v2682 = vld [vmem:[#allocation11 + $0x2d8] sm:$0xff]
        %v2683 = vld [vmem:[#allocation11 + $0x2e0] sm:$0xff]
        %v2684 = vld [vmem:[#allocation11 + $0x2e8] sm:$0xff]
        %v2685 = vld [vmem:[#allocation11 + $0x2f0] sm:$0xf]
        %v2686 = vld [vmem:[#allocation11 + $0x2f4] sm:$0xff]
        %v2687 = vld [vmem:[#allocation11 + $0x2fc] sm:$0xff]
        %v2688 = vld [vmem:[#allocation11 + $0x304] sm:$0xff]
        %v2689 = vld [vmem:[#allocation11 + $0x30c] sm:$0xf]
        %v2690 = vld [vmem:[#allocation11 + $0x310] sm:$0xff]
        %v2691 = vld [vmem:[#allocation11 + $0x318] sm:$0xff]
        %v2692 = vld [vmem:[#allocation11 + $0x320] sm:$0xff]
        %v2693 = vld [vmem:[#allocation11 + $0x328] sm:$0xf]
        %v2694 = vld [vmem:[#allocation11 + $0x32c] sm:$0xff]
        %v2695 = vld [vmem:[#allocation11 + $0x334] sm:$0xff]
        %v2696 = vld [vmem:[#allocation11 + $0x33c] sm:$0xff]
        %v2697 = vld [vmem:[#allocation11 + $0x344] sm:$0xf]
        %v2698 = vld [vmem:[#allocation11 + $0x348] sm:$0xff]
        %v2699 = vld [vmem:[#allocation11 + $0x350] sm:$0xff]
        %v2700 = vld [vmem:[#allocation11 + $0x358] sm:$0xff]
        %v2701 = vld [vmem:[#allocation11 + $0x360] sm:$0xf]
        %v2702 = vld [vmem:[#allocation11 + $0x364] sm:$0xff]
        %v2703 = vld [vmem:[#allocation11 + $0x36c] sm:$0xff]
        %v2704 = vld [vmem:[#allocation11 + $0x374] sm:$0xff]
        %v2705 = vld [vmem:[#allocation11 + $0x37c] sm:$0xf]
        %v2706 = vld [vmem:[%s9] sm:$0xff]
        %v2708 = vlaneseq
        %v2709 = vshrl.u32 %v2708, 7
        %v2710 = vsub.s32 0, %v2709
        %v2711 = vrot.slane %v2706, %v2710
        %v2712 = vlaneseq
        %v2713 = vshrl.u32 %v2712, 7
        %v2714 = vsub.s32 1, %v2713
        %v2715 = vrot.slane %v2706, %v2714
        %v2716 = vlaneseq
        %v2717 = vshrl.u32 %v2716, 7
        %v2718 = vsub.s32 2, %v2717
        %v2719 = vrot.slane %v2706, %v2718
        %v2720 = vlaneseq
        %v2721 = vshrl.u32 %v2720, 7
        %v2722 = vsub.s32 3, %v2721
        %v2723 = vrot.slane %v2706, %v2722
        %v2724 = vlaneseq
        %v2725 = vshrl.u32 %v2724, 7
        %v2726 = vsub.s32 4, %v2725
        %v2727 = vrot.slane %v2706, %v2726
        %v2728 = vlaneseq
        %v2729 = vshrl.u32 %v2728, 7
        %v2730 = vsub.s32 5, %v2729
        %v2731 = vrot.slane %v2706, %v2730
        %v2732 = vlaneseq
        %v2733 = vshrl.u32 %v2732, 7
        %v2734 = vsub.s32 6, %v2733
        %v2735 = vrot.slane %v2706, %v2734
        %v2871 = vunpack.c.l.b16 %v2578
        %v2872 = vunpack.c.h.b16 %v2578
        %v2873 = vunpack.c.l.b16 %v2579
        %v2874 = vunpack.c.h.b16 %v2579
        %v2875 = vunpack.c.l.b16 %v2580
        %v2876 = vunpack.c.h.b16 %v2580
        %v2877 = vunpack.c.l.b16 %v2581
        %v2878 = vunpack.c.l.b16 %v2582
        %v2879 = vunpack.c.h.b16 %v2582
        %v2880 = vunpack.c.l.b16 %v2583
        %v2881 = vunpack.c.h.b16 %v2583
        %v2882 = vunpack.c.l.b16 %v2584
        %v2883 = vunpack.c.h.b16 %v2584
        %v2884 = vunpack.c.l.b16 %v2585
        %v2885 = vunpack.c.l.b16 %v2586
        %v2886 = vunpack.c.h.b16 %v2586
        %v2887 = vunpack.c.l.b16 %v2587
        %v2888 = vunpack.c.h.b16 %v2587
        %v2889 = vunpack.c.l.b16 %v2588
        %v2890 = vunpack.c.h.b16 %v2588
        %v2891 = vunpack.c.l.b16 %v2589
        %v2892 = vunpack.c.l.b16 %v2590
        %v2893 = vunpack.c.h.b16 %v2590
        %v2894 = vunpack.c.l.b16 %v2591
        %v2895 = vunpack.c.h.b16 %v2591
        %v2896 = vunpack.c.l.b16 %v2592
        %v2897 = vunpack.c.h.b16 %v2592
        %v2898 = vunpack.c.l.b16 %v2593
        %v2899 = vunpack.c.l.b16 %v2594
        %v2900 = vunpack.c.h.b16 %v2594
        %v2901 = vunpack.c.l.b16 %v2595
        %v2902 = vunpack.c.h.b16 %v2595
        %v2903 = vunpack.c.l.b16 %v2596
        %v2904 = vunpack.c.h.b16 %v2596
        %v2905 = vunpack.c.l.b16 %v2597
        %v2906 = vunpack.c.l.b16 %v2598
        %v2907 = vunpack.c.h.b16 %v2598
        %v2908 = vunpack.c.l.b16 %v2599
        %v2909 = vunpack.c.h.b16 %v2599
        %v2910 = vunpack.c.l.b16 %v2600
        %v2911 = vunpack.c.h.b16 %v2600
        %v2912 = vunpack.c.l.b16 %v2601
        %v2913 = vunpack.c.l.b16 %v2602
        %v2914 = vunpack.c.h.b16 %v2602
        %v2915 = vunpack.c.l.b16 %v2603
        %v2916 = vunpack.c.h.b16 %v2603
        %v2917 = vunpack.c.l.b16 %v2604
        %v2918 = vunpack.c.h.b16 %v2604
        %v2919 = vunpack.c.l.b16 %v2605
        %v2920 = vunpack.c.l.b16 %v2606
        %v2921 = vunpack.c.h.b16 %v2606
        %v2922 = vunpack.c.l.b16 %v2607
        %v2923 = vunpack.c.h.b16 %v2607
        %v2924 = vunpack.c.l.b16 %v2608
        %v2925 = vunpack.c.h.b16 %v2608
        %v2926 = vunpack.c.l.b16 %v2609
        %v2927 = vunpack.c.l.b16 %v2610
        %v2928 = vunpack.c.h.b16 %v2610
        %v2929 = vunpack.c.l.b16 %v2611
        %v2930 = vunpack.c.h.b16 %v2611
        %v2931 = vunpack.c.l.b16 %v2612
        %v2932 = vunpack.c.h.b16 %v2612
        %v2933 = vunpack.c.l.b16 %v2613
        %v2934 = vunpack.c.l.b16 %v2614
        %v2935 = vunpack.c.h.b16 %v2614
        %v2936 = vunpack.c.l.b16 %v2615
        %v2937 = vunpack.c.h.b16 %v2615
        %v2938 = vunpack.c.l.b16 %v2616
        %v2939 = vunpack.c.h.b16 %v2616
        %v2940 = vunpack.c.l.b16 %v2617
        %v2941 = vunpack.c.l.b16 %v2618
        %v2942 = vunpack.c.h.b16 %v2618
        %v2943 = vunpack.c.l.b16 %v2619
        %v2944 = vunpack.c.h.b16 %v2619
        %v2945 = vunpack.c.l.b16 %v2620
        %v2946 = vunpack.c.h.b16 %v2620
        %v2947 = vunpack.c.l.b16 %v2621
        %v2948 = vunpack.c.l.b16 %v2622
        %v2949 = vunpack.c.h.b16 %v2622
        %v2950 = vunpack.c.l.b16 %v2623
        %v2951 = vunpack.c.h.b16 %v2623
        %v2952 = vunpack.c.l.b16 %v2624
        %v2953 = vunpack.c.h.b16 %v2624
        %v2954 = vunpack.c.l.b16 %v2625
        %v2955 = vunpack.c.l.b16 %v2626
        %v2956 = vunpack.c.h.b16 %v2626
        %v2957 = vunpack.c.l.b16 %v2627
        %v2958 = vunpack.c.h.b16 %v2627
        %v2959 = vunpack.c.l.b16 %v2628
        %v2960 = vunpack.c.h.b16 %v2628
        %v2961 = vunpack.c.l.b16 %v2629
        %v2962 = vunpack.c.l.b16 %v2630
        %v2963 = vunpack.c.h.b16 %v2630
        %v2964 = vunpack.c.l.b16 %v2631
        %v2965 = vunpack.c.h.b16 %v2631
        %v2966 = vunpack.c.l.b16 %v2632
        %v2967 = vunpack.c.h.b16 %v2632
        %v2968 = vunpack.c.l.b16 %v2633
        %v2969 = vunpack.c.l.b16 %v2634
        %v2970 = vunpack.c.h.b16 %v2634
        %v2971 = vunpack.c.l.b16 %v2635
        %v2972 = vunpack.c.h.b16 %v2635
        %v2973 = vunpack.c.l.b16 %v2636
        %v2974 = vunpack.c.h.b16 %v2636
        %v2975 = vunpack.c.l.b16 %v2637
        %v2976 = vunpack.c.l.b16 %v2638
        %v2977 = vunpack.c.h.b16 %v2638
        %v2978 = vunpack.c.l.b16 %v2639
        %v2979 = vunpack.c.h.b16 %v2639
        %v2980 = vunpack.c.l.b16 %v2640
        %v2981 = vunpack.c.h.b16 %v2640
        %v2982 = vunpack.c.l.b16 %v2641
        %v2983 = vunpack.c.l.b16 %v2642
        %v2984 = vunpack.c.h.b16 %v2642
        %v2985 = vunpack.c.l.b16 %v2643
        %v2986 = vunpack.c.h.b16 %v2643
        %v2987 = vunpack.c.l.b16 %v2644
        %v2988 = vunpack.c.h.b16 %v2644
        %v2989 = vunpack.c.l.b16 %v2645
        %v2990 = vunpack.c.l.b16 %v2646
        %v2991 = vunpack.c.h.b16 %v2646
        %v2992 = vunpack.c.l.b16 %v2647
        %v2993 = vunpack.c.h.b16 %v2647
        %v2994 = vunpack.c.l.b16 %v2648
        %v2995 = vunpack.c.h.b16 %v2648
        %v2996 = vunpack.c.l.b16 %v2649
        %v2997 = vunpack.c.l.b16 %v2650
        %v2998 = vunpack.c.h.b16 %v2650
        %v2999 = vunpack.c.l.b16 %v2651
        %v3000 = vunpack.c.h.b16 %v2651
        %v3001 = vunpack.c.l.b16 %v2652
        %v3002 = vunpack.c.h.b16 %v2652
        %v3003 = vunpack.c.l.b16 %v2653
        %v3004 = vunpack.c.l.b16 %v2654
        %v3005 = vunpack.c.h.b16 %v2654
        %v3006 = vunpack.c.l.b16 %v2655
        %v3007 = vunpack.c.h.b16 %v2655
        %v3008 = vunpack.c.l.b16 %v2656
        %v3009 = vunpack.c.h.b16 %v2656
        %v3010 = vunpack.c.l.b16 %v2657
        %v3011 = vunpack.c.l.b16 %v2658
        %v3012 = vunpack.c.h.b16 %v2658
        %v3013 = vunpack.c.l.b16 %v2659
        %v3014 = vunpack.c.h.b16 %v2659
        %v3015 = vunpack.c.l.b16 %v2660
        %v3016 = vunpack.c.h.b16 %v2660
        %v3017 = vunpack.c.l.b16 %v2661
        %v3018 = vunpack.c.l.b16 %v2662
        %v3019 = vunpack.c.h.b16 %v2662
        %v3020 = vunpack.c.l.b16 %v2663
        %v3021 = vunpack.c.h.b16 %v2663
        %v3022 = vunpack.c.l.b16 %v2664
        %v3023 = vunpack.c.h.b16 %v2664
        %v3024 = vunpack.c.l.b16 %v2665
        %v3025 = vunpack.c.l.b16 %v2666
        %v3026 = vunpack.c.h.b16 %v2666
        %v3027 = vunpack.c.l.b16 %v2667
        %v3028 = vunpack.c.h.b16 %v2667
        %v3029 = vunpack.c.l.b16 %v2668
        %v3030 = vunpack.c.h.b16 %v2668
        %v3031 = vunpack.c.l.b16 %v2669
        %v3032 = vunpack.c.l.b16 %v2670
        %v3033 = vunpack.c.h.b16 %v2670
        %v3034 = vunpack.c.l.b16 %v2671
        %v3035 = vunpack.c.h.b16 %v2671
        %v3036 = vunpack.c.l.b16 %v2672
        %v3037 = vunpack.c.h.b16 %v2672
        %v3038 = vunpack.c.l.b16 %v2673
        %v3039 = vunpack.c.l.b16 %v2674
        %v3040 = vunpack.c.h.b16 %v2674
        %v3041 = vunpack.c.l.b16 %v2675
        %v3042 = vunpack.c.h.b16 %v2675
        %v3043 = vunpack.c.l.b16 %v2676
        %v3044 = vunpack.c.h.b16 %v2676
        %v3045 = vunpack.c.l.b16 %v2677
        %v3046 = vunpack.c.l.b16 %v2678
        %v3047 = vunpack.c.h.b16 %v2678
        %v3048 = vunpack.c.l.b16 %v2679
        %v3049 = vunpack.c.h.b16 %v2679
        %v3050 = vunpack.c.l.b16 %v2680
        %v3051 = vunpack.c.h.b16 %v2680
        %v3052 = vunpack.c.l.b16 %v2681
        %v3053 = vunpack.c.l.b16 %v2682
        %v3054 = vunpack.c.h.b16 %v2682
        %v3055 = vunpack.c.l.b16 %v2683
        %v3056 = vunpack.c.h.b16 %v2683
        %v3057 = vunpack.c.l.b16 %v2684
        %v3058 = vunpack.c.h.b16 %v2684
        %v3059 = vunpack.c.l.b16 %v2685
        %v3060 = vunpack.c.l.b16 %v2686
        %v3061 = vunpack.c.h.b16 %v2686
        %v3062 = vunpack.c.l.b16 %v2687
        %v3063 = vunpack.c.h.b16 %v2687
        %v3064 = vunpack.c.l.b16 %v2688
        %v3065 = vunpack.c.h.b16 %v2688
        %v3066 = vunpack.c.l.b16 %v2689
        %v3067 = vunpack.c.l.b16 %v2690
        %v3068 = vunpack.c.h.b16 %v2690
        %v3069 = vunpack.c.l.b16 %v2691
        %v3070 = vunpack.c.h.b16 %v2691
        %v3071 = vunpack.c.l.b16 %v2692
        %v3072 = vunpack.c.h.b16 %v2692
        %v3073 = vunpack.c.l.b16 %v2693
        %v3074 = vunpack.c.l.b16 %v2694
        %v3075 = vunpack.c.h.b16 %v2694
        %v3076 = vunpack.c.l.b16 %v2695
        %v3077 = vunpack.c.h.b16 %v2695
        %v3078 = vunpack.c.l.b16 %v2696
        %v3079 = vunpack.c.h.b16 %v2696
        %v3080 = vunpack.c.l.b16 %v2697
        %v3081 = vunpack.c.l.b16 %v2698
        %v3082 = vunpack.c.h.b16 %v2698
        %v3083 = vunpack.c.l.b16 %v2699
        %v3084 = vunpack.c.h.b16 %v2699
        %v3085 = vunpack.c.l.b16 %v2700
        %v3086 = vunpack.c.h.b16 %v2700
        %v3087 = vunpack.c.l.b16 %v2701
        %v3088 = vunpack.c.l.b16 %v2702
        %v3089 = vunpack.c.h.b16 %v2702
        %v3090 = vunpack.c.l.b16 %v2703
        %v3091 = vunpack.c.h.b16 %v2703
        %v3092 = vunpack.c.l.b16 %v2704
        %v3093 = vunpack.c.h.b16 %v2704
        %v3094 = vunpack.c.l.b16 %v2705
        %v3095 = vpack.c.b16 %v2878, %v2871
        %v3096 = vpack.c.b16 %v2879, %v2872
        %v3097 = vpack.c.b16 %v2880, %v2873
        %v3098 = vpack.c.b16 %v2881, %v2874
        %v3099 = vpack.c.b16 %v2882, %v2875
        %v3100 = vpack.c.b16 %v2883, %v2876
        %v3101 = vpack.c.b16 %v2884, %v2877
        %v3102 = vpack.c.b16 %v2892, %v2885
        %v3103 = vpack.c.b16 %v2893, %v2886
        %v3104 = vpack.c.b16 %v2894, %v2887
        %v3105 = vpack.c.b16 %v2895, %v2888
        %v3106 = vpack.c.b16 %v2896, %v2889
        %v3107 = vpack.c.b16 %v2897, %v2890
        %v3108 = vpack.c.b16 %v2898, %v2891
        %v3109 = vpack.c.b16 %v2906, %v2899
        %v3110 = vpack.c.b16 %v2907, %v2900
        %v3111 = vpack.c.b16 %v2908, %v2901
        %v3112 = vpack.c.b16 %v2909, %v2902
        %v3113 = vpack.c.b16 %v2910, %v2903
        %v3114 = vpack.c.b16 %v2911, %v2904
        %v3115 = vpack.c.b16 %v2912, %v2905
        %v3116 = vpack.c.b16 %v2920, %v2913
        %v3117 = vpack.c.b16 %v2921, %v2914
        %v3118 = vpack.c.b16 %v2922, %v2915
        %v3119 = vpack.c.b16 %v2923, %v2916
        %v3120 = vpack.c.b16 %v2924, %v2917
        %v3121 = vpack.c.b16 %v2925, %v2918
        %v3122 = vpack.c.b16 %v2926, %v2919
        %v3123 = vpack.c.b16 %v2934, %v2927
        %v3124 = vpack.c.b16 %v2935, %v2928
        %v3125 = vpack.c.b16 %v2936, %v2929
        %v3126 = vpack.c.b16 %v2937, %v2930
        %v3127 = vpack.c.b16 %v2938, %v2931
        %v3128 = vpack.c.b16 %v2939, %v2932
        %v3129 = vpack.c.b16 %v2940, %v2933
        %v3130 = vpack.c.b16 %v2948, %v2941
        %v3131 = vpack.c.b16 %v2949, %v2942
        %v3132 = vpack.c.b16 %v2950, %v2943
        %v3133 = vpack.c.b16 %v2951, %v2944
        %v3134 = vpack.c.b16 %v2952, %v2945
        %v3135 = vpack.c.b16 %v2953, %v2946
        %v3136 = vpack.c.b16 %v2954, %v2947
        %v3137 = vpack.c.b16 %v2962, %v2955
        %v3138 = vpack.c.b16 %v2963, %v2956
        %v3139 = vpack.c.b16 %v2964, %v2957
        %v3140 = vpack.c.b16 %v2965, %v2958
        %v3141 = vpack.c.b16 %v2966, %v2959
        %v3142 = vpack.c.b16 %v2967, %v2960
        %v3143 = vpack.c.b16 %v2968, %v2961
        %v3144 = vpack.c.b16 %v2976, %v2969
        %v3145 = vpack.c.b16 %v2977, %v2970
        %v3146 = vpack.c.b16 %v2978, %v2971
        %v3147 = vpack.c.b16 %v2979, %v2972
        %v3148 = vpack.c.b16 %v2980, %v2973
        %v3149 = vpack.c.b16 %v2981, %v2974
        %v3150 = vpack.c.b16 %v2982, %v2975
        %v3151 = vpack.c.b16 %v2990, %v2983
        %v3152 = vpack.c.b16 %v2991, %v2984
        %v3153 = vpack.c.b16 %v2992, %v2985
        %v3154 = vpack.c.b16 %v2993, %v2986
        %v3155 = vpack.c.b16 %v2994, %v2987
        %v3156 = vpack.c.b16 %v2995, %v2988
        %v3157 = vpack.c.b16 %v2996, %v2989
        %v3158 = vpack.c.b16 %v3004, %v2997
        %v3159 = vpack.c.b16 %v3005, %v2998
        %v3160 = vpack.c.b16 %v3006, %v2999
        %v3161 = vpack.c.b16 %v3007, %v3000
        %v3162 = vpack.c.b16 %v3008, %v3001
        %v3163 = vpack.c.b16 %v3009, %v3002
        %v3164 = vpack.c.b16 %v3010, %v3003
        %v3165 = vpack.c.b16 %v3018, %v3011
        %v3166 = vpack.c.b16 %v3019, %v3012
        %v3167 = vpack.c.b16 %v3020, %v3013
        %v3168 = vpack.c.b16 %v3021, %v3014
        %v3169 = vpack.c.b16 %v3022, %v3015
        %v3170 = vpack.c.b16 %v3023, %v3016
        %v3171 = vpack.c.b16 %v3024, %v3017
        %v3172 = vpack.c.b16 %v3032, %v3025
        %v3173 = vpack.c.b16 %v3033, %v3026
        %v3174 = vpack.c.b16 %v3034, %v3027
        %v3175 = vpack.c.b16 %v3035, %v3028
        %v3176 = vpack.c.b16 %v3036, %v3029
        %v3177 = vpack.c.b16 %v3037, %v3030
        %v3178 = vpack.c.b16 %v3038, %v3031
        %v3179 = vpack.c.b16 %v3046, %v3039
        %v3180 = vpack.c.b16 %v3047, %v3040
        %v3181 = vpack.c.b16 %v3048, %v3041
        %v3182 = vpack.c.b16 %v3049, %v3042
        %v3183 = vpack.c.b16 %v3050, %v3043
        %v3184 = vpack.c.b16 %v3051, %v3044
        %v3185 = vpack.c.b16 %v3052, %v3045
        %v3186 = vpack.c.b16 %v3060, %v3053
        %v3187 = vpack.c.b16 %v3061, %v3054
        %v3188 = vpack.c.b16 %v3062, %v3055
        %v3189 = vpack.c.b16 %v3063, %v3056
        %v3190 = vpack.c.b16 %v3064, %v3057
        %v3191 = vpack.c.b16 %v3065, %v3058
        %v3192 = vpack.c.b16 %v3066, %v3059
        %v3193 = vpack.c.b16 %v3074, %v3067
        %v3194 = vpack.c.b16 %v3075, %v3068
        %v3195 = vpack.c.b16 %v3076, %v3069
        %v3196 = vpack.c.b16 %v3077, %v3070
        %v3197 = vpack.c.b16 %v3078, %v3071
        %v3198 = vpack.c.b16 %v3079, %v3072
        %v3199 = vpack.c.b16 %v3080, %v3073
        %v3200 = vpack.c.b16 %v3088, %v3081
        %v3201 = vpack.c.b16 %v3089, %v3082
        %v3202 = vpack.c.b16 %v3090, %v3083
        %v3203 = vpack.c.b16 %v3091, %v3084
        %v3204 = vpack.c.b16 %v3092, %v3085
        %v3205 = vpack.c.b16 %v3093, %v3086
        %v3206 = vpack.c.b16 %v3094, %v3087
        %3319 = vmatprep.subr.bf16.mxu0 %v3096
        %3320 = vmatpush1.bf16.msra.mxu0 %v3095
        %3321 = vmatprep.subr.bf16.mxu0 %v3103
        %3322 = vmatpush1.bf16.msra.mxu0 %v3102
        %3323 = vmatprep.subr.bf16.mxu0 %v3110
        %3324 = vmatpush1.bf16.msra.mxu0 %v3109
        %3325 = vmatprep.subr.bf16.mxu0 %v3117
        %3326 = vmatpush1.bf16.msra.mxu0 %v3116
        %3327 = vmatprep.subr.bf16.mxu0 %v3124
        %3328 = vmatpush1.bf16.msra.mxu0 %v3123
        %3329 = vmatprep.subr.bf16.mxu0 %v3131
        %3330 = vmatpush1.bf16.msra.mxu0 %v3130
        %3331 = vmatprep.subr.bf16.mxu0 %v3138
        %3332 = vmatpush1.bf16.msra.mxu0 %v3137
        %3333 = vmatprep.subr.bf16.mxu0 %v3145
        %3334 = vmatpush1.bf16.msra.mxu0 %v3144
        %3335 = vmatprep.subr.bf16.mxu0 %v3152
        %3336 = vmatpush1.bf16.msra.mxu0 %v3151
        %3337 = vmatprep.subr.bf16.mxu0 %v3159
        %3338 = vmatpush1.bf16.msra.mxu0 %v3158
        %3339 = vmatprep.subr.bf16.mxu0 %v3166
        %3340 = vmatpush1.bf16.msra.mxu0 %v3165
        %3341 = vmatprep.subr.bf16.mxu0 %v3173
        %3342 = vmatpush1.bf16.msra.mxu0 %v3172
        %3343 = vmatprep.subr.bf16.mxu0 %v3180
        %3344 = vmatpush1.bf16.msra.mxu0 %v3179
        %3345 = vmatprep.subr.bf16.mxu0 %v3187
        %3346 = vmatpush1.bf16.msra.mxu0 %v3186
        %3347 = vmatprep.subr.bf16.mxu0 %v3194
        %3348 = vmatpush1.bf16.msra.mxu0 %v3193
        %3349 = vmatprep.subr.bf16.mxu0 %v3201
        %3350 = vmatpush1.bf16.msra.mxu0 %v3200
        %3351 = vmatprep.mubr.bf16.mxu0 %v2563
        %3352 = vmatmul.mubr.bf16.gmra.mrb[0].mxu0 %v2562
        %v3353 = vpop.f32.mrb[0].mxu0
        %v3354 = vadd.f32 %v2711, %v3353
        %v3355 = vpop.f32.mrb[0].mxu0
        %v3356 = vadd.f32 %v2715, %v3355
        %v3357 = vpop.f32.mrb[0].mxu0
        %v3358 = vadd.f32 %v2711, %v3357
        %v3359 = vpop.f32.mrb[0].mxu0
        %v3360 = vadd.f32 %v2715, %v3359
        %3361 = vmatprep.mubr.bf16.mxu0 %v2565
        %3362 = vmatmul.mubr.bf16.gmra.mrb[0].mxu0 %v2564
        %v3363 = vpop.f32.mrb[0].mxu0
        %v3364 = vadd.f32 %v2711, %v3363
        %v3365 = vpop.f32.mrb[0].mxu0
        %v3366 = vadd.f32 %v2715, %v3365
        %v3367 = vpop.f32.mrb[0].mxu0
        %v3368 = vadd.f32 %v2711, %v3367
        %v3369 = vpop.f32.mrb[0].mxu0
        %v3370 = vadd.f32 %v2715, %v3369
        %3371 = vmatprep.mubr.bf16.mxu0 %v2567
        %3372 = vmatmul.mubr.bf16.gmra.mrb[0].mxu0 %v2566
        %v3373 = vpop.f32.mrb[0].mxu0
        %v3374 = vadd.f32 %v2711, %v3373
        %v3375 = vpop.f32.mrb[0].mxu0
        %v3376 = vadd.f32 %v2715, %v3375
        %v3377 = vpop.f32.mrb[0].mxu0
        %v3378 = vadd.f32 %v2711, %v3377
        %v3379 = vpop.f32.mrb[0].mxu0
        %v3380 = vadd.f32 %v2715, %v3379
        %3381 = vmatprep.mubr.bf16.mxu0 %v2569
        %3382 = vmatmul.mubr.bf16.gmra.mrb[0].mxu0 %v2568
        %v3383 = vpop.f32.mrb[0].mxu0
        %v3384 = vadd.f32 %v2711, %v3383
        %v3385 = vpop.f32.mrb[0].mxu0
        %v3386 = vadd.f32 %v2715, %v3385
        %v3387 = vpop.f32.mrb[0].mxu0
        %v3388 = vadd.f32 %v2711, %v3387
        %v3389 = vpop.f32.mrb[0].mxu0
        %v3390 = vadd.f32 %v2715, %v3389
        %3391 = vmatprep.mubr.bf16.mxu0 %v2571
        %3392 = vmatmul.mubr.bf16.gmra.mrb[0].mxu0 %v2570
        %v3393 = vpop.f32.mrb[0].mxu0
        %v3394 = vadd.f32 %v2711, %v3393
        %v3395 = vpop.f32.mrb[0].mxu0
        %v3396 = vadd.f32 %v2715, %v3395
        %v3397 = vpop.f32.mrb[0].mxu0
        %v3398 = vadd.f32 %v2711, %v3397
        %v3399 = vpop.f32.mrb[0].mxu0
        %v3400 = vadd.f32 %v2715, %v3399
        %3401 = vmatprep.mubr.bf16.mxu0 %v2573
        %3402 = vmatmul.mubr.bf16.gmra.mrb[0].mxu0 %v2572
        %v3403 = vpop.f32.mrb[0].mxu0
        %v3404 = vadd.f32 %v2711, %v3403
        %v3405 = vpop.f32.mrb[0].mxu0
        %v3406 = vadd.f32 %v2715, %v3405
        %v3407 = vpop.f32.mrb[0].mxu0
        %v3408 = vadd.f32 %v2711, %v3407
        %v3409 = vpop.f32.mrb[0].mxu0
        %v3410 = vadd.f32 %v2715, %v3409
        %3411 = vmatprep.mubr.bf16.mxu0 %v2575
        %3412 = vmatmul.mubr.bf16.gmra.mrb[0].mxu0 %v2574
        %v3413 = vpop.f32.mrb[0].mxu0
        %v3414 = vadd.f32 %v2711, %v3413
        %v3415 = vpop.f32.mrb[0].mxu0
        %v3416 = vadd.f32 %v2715, %v3415
        %v3417 = vpop.f32.mrb[0].mxu0
        %v3418 = vadd.f32 %v2711, %v3417
        %v3419 = vpop.f32.mrb[0].mxu0
        %v3420 = vadd.f32 %v2715, %v3419
        %3421 = vmatprep.mubr.bf16.mxu0 %v2577
        %3422 = vmatmul.mubr.bf16.gmra.mrb[0].mxu0 %v2576
        %v3423 = vpop.f32.mrb[0].mxu0
        %v3424 = vadd.f32 %v2711, %v3423
        %v3425 = vpop.f32.mrb[0].mxu0
        %v3426 = vadd.f32 %v2715, %v3425
        %v3427 = vpop.f32.mrb[0].mxu0
        %v3428 = vadd.f32 %v2711, %v3427
        %v3429 = vpop.f32.mrb[0].mxu0
        %v3430 = vadd.f32 %v2715, %v3429
        %3431 = vdwg.mxu0
        %3432 = vmatprep.subr.bf16.mxu0 %v3098
        %3433 = vmatpush1.bf16.msra.mxu0 %v3097
        %3434 = vmatprep.subr.bf16.mxu0 %v3105
        %3435 = vmatpush1.bf16.msra.mxu0 %v3104
        %3436 = vmatprep.subr.bf16.mxu0 %v3112
        %3437 = vmatpush1.bf16.msra.mxu0 %v3111
        %3438 = vmatprep.subr.bf16.mxu0 %v3119
        %3439 = vmatpush1.bf16.msra.mxu0 %v3118
        %3440 = vmatprep.subr.bf16.mxu0 %v3126
        %3441 = vmatpush1.bf16.msra.mxu0 %v3125
        %3442 = vmatprep.subr.bf16.mxu0 %v3133
        %3443 = vmatpush1.bf16.msra.mxu0 %v3132
        %3444 = vmatprep.subr.bf16.mxu0 %v3140
        %3445 = vmatpush1.bf16.msra.mxu0 %v3139
        %3446 = vmatprep.subr.bf16.mxu0 %v3147
        %3447 = vmatpush1.bf16.msra.mxu0 %v3146
        %3448 = vmatprep.subr.bf16.mxu0 %v3154
        %3449 = vmatpush1.bf16.msra.mxu0 %v3153
        %3450 = vmatprep.subr.bf16.mxu0 %v3161
        %3451 = vmatpush1.bf16.msra.mxu0 %v3160
        %3452 = vmatprep.subr.bf16.mxu0 %v3168
        %3453 = vmatpush1.bf16.msra.mxu0 %v3167
        %3454 = vmatprep.subr.bf16.mxu0 %v3175
        %3455 = vmatpush1.bf16.msra.mxu0 %v3174
        %3456 = vmatprep.subr.bf16.mxu0 %v3182
        %3457 = vmatpush1.bf16.msra.mxu0 %v3181
        %3458 = vmatprep.subr.bf16.mxu0 %v3189
        %3459 = vmatpush1.bf16.msra.mxu0 %v3188
        %3460 = vmatprep.subr.bf16.mxu0 %v3196
        %3461 = vmatpush1.bf16.msra.mxu0 %v3195
        %3462 = vmatprep.subr.bf16.mxu0 %v3203
        %3463 = vmatpush1.bf16.msra.mxu0 %v3202
        %3464 = vmatprep.mubr.bf16.mxu0 %v2563
        %3465 = vmatmul.mubr.bf16.gmra.mrb[0].mxu0 %v2562
        %v3466 = vpop.f32.mrb[0].mxu0
        %v3467 = vadd.f32 %v2719, %v3466
        %v3468 = vpop.f32.mrb[0].mxu0
        %v3469 = vadd.f32 %v2723, %v3468
        %v3470 = vpop.f32.mrb[0].mxu0
        %v3471 = vadd.f32 %v2719, %v3470
        %v3472 = vpop.f32.mrb[0].mxu0
        %v3473 = vadd.f32 %v2723, %v3472
        %3474 = vmatprep.mubr.bf16.mxu0 %v2565
        %3475 = vmatmul.mubr.bf16.gmra.mrb[0].mxu0 %v2564
        %v3476 = vpop.f32.mrb[0].mxu0
        %v3477 = vadd.f32 %v2719, %v3476
        %v3478 = vpop.f32.mrb[0].mxu0
        %v3479 = vadd.f32 %v2723, %v3478
        %v3480 = vpop.f32.mrb[0].mxu0
        %v3481 = vadd.f32 %v2719, %v3480
        %v3482 = vpop.f32.mrb[0].mxu0
        %v3483 = vadd.f32 %v2723, %v3482
        %3484 = vmatprep.mubr.bf16.mxu0 %v2567
        %3485 = vmatmul.mubr.bf16.gmra.mrb[0].mxu0 %v2566
        %v3486 = vpop.f32.mrb[0].mxu0
        %v3487 = vadd.f32 %v2719, %v3486
        %v3488 = vpop.f32.mrb[0].mxu0
        %v3489 = vadd.f32 %v2723, %v3488
        %v3490 = vpop.f32.mrb[0].mxu0
        %v3491 = vadd.f32 %v2719, %v3490
        %v3492 = vpop.f32.mrb[0].mxu0
        %v3493 = vadd.f32 %v2723, %v3492
        %3494 = vmatprep.mubr.bf16.mxu0 %v2569
        %3495 = vmatmul.mubr.bf16.gmra.mrb[0].mxu0 %v2568
        %v3496 = vpop.f32.mrb[0].mxu0
        %v3497 = vadd.f32 %v2719, %v3496
        %v3498 = vpop.f32.mrb[0].mxu0
        %v3499 = vadd.f32 %v2723, %v3498
        %v3500 = vpop.f32.mrb[0].mxu0
        %v3501 = vadd.f32 %v2719, %v3500
        %v3502 = vpop.f32.mrb[0].mxu0
        %v3503 = vadd.f32 %v2723, %v3502
        %3504 = vmatprep.mubr.bf16.mxu0 %v2571
        %3505 = vmatmul.mubr.bf16.gmra.mrb[0].mxu0 %v2570
        %v3506 = vpop.f32.mrb[0].mxu0
        %v3507 = vadd.f32 %v2719, %v3506
        %v3508 = vpop.f32.mrb[0].mxu0
        %v3509 = vadd.f32 %v2723, %v3508
        %v3510 = vpop.f32.mrb[0].mxu0
        %v3511 = vadd.f32 %v2719, %v3510
        %v3512 = vpop.f32.mrb[0].mxu0
        %v3513 = vadd.f32 %v2723, %v3512
        %3514 = vmatprep.mubr.bf16.mxu0 %v2573
        %3515 = vmatmul.mubr.bf16.gmra.mrb[0].mxu0 %v2572
        %v3516 = vpop.f32.mrb[0].mxu0
        %v3517 = vadd.f32 %v2719, %v3516
        %v3518 = vpop.f32.mrb[0].mxu0
        %v3519 = vadd.f32 %v2723, %v3518
        %v3520 = vpop.f32.mrb[0].mxu0
        %v3521 = vadd.f32 %v2719, %v3520
        %v3522 = vpop.f32.mrb[0].mxu0
        %v3523 = vadd.f32 %v2723, %v3522
        %3524 = vmatprep.mubr.bf16.mxu0 %v2575
        %3525 = vmatmul.mubr.bf16.gmra.mrb[0].mxu0 %v2574
        %v3526 = vpop.f32.mrb[0].mxu0
        %v3527 = vadd.f32 %v2719, %v3526
        %v3528 = vpop.f32.mrb[0].mxu0
        %v3529 = vadd.f32 %v2723, %v3528
        %v3530 = vpop.f32.mrb[0].mxu0
        %v3531 = vadd.f32 %v2719, %v3530
        %v3532 = vpop.f32.mrb[0].mxu0
        %v3533 = vadd.f32 %v2723, %v3532
        %3534 = vmatprep.mubr.bf16.mxu0 %v2577
        %3535 = vmatmul.mubr.bf16.gmra.mrb[0].mxu0 %v2576
        %v3536 = vpop.f32.mrb[0].mxu0
        %v3537 = vadd.f32 %v2719, %v3536
        %v3538 = vpop.f32.mrb[0].mxu0
        %v3539 = vadd.f32 %v2723, %v3538
        %v3540 = vpop.f32.mrb[0].mxu0
        %v3541 = vadd.f32 %v2719, %v3540
        %v3542 = vpop.f32.mrb[0].mxu0
        %v3543 = vadd.f32 %v2723, %v3542
        %3544 = vdwg.mxu0
        %3545 = vmatprep.subr.bf16.mxu0 %v3100
        %3546 = vmatpush1.bf16.msra.mxu0 %v3099
        %3547 = vmatprep.subr.bf16.mxu0 %v3107
        %3548 = vmatpush1.bf16.msra.mxu0 %v3106
        %3549 = vmatprep.subr.bf16.mxu0 %v3114
        %3550 = vmatpush1.bf16.msra.mxu0 %v3113
        %3551 = vmatprep.subr.bf16.mxu0 %v3121
        %3552 = vmatpush1.bf16.msra.mxu0 %v3120
        %3553 = vmatprep.subr.bf16.mxu0 %v3128
        %3554 = vmatpush1.bf16.msra.mxu0 %v3127
        %3555 = vmatprep.subr.bf16.mxu0 %v3135
        %3556 = vmatpush1.bf16.msra.mxu0 %v3134
        %3557 = vmatprep.subr.bf16.mxu0 %v3142
        %3558 = vmatpush1.bf16.msra.mxu0 %v3141
        %3559 = vmatprep.subr.bf16.mxu0 %v3149
        %3560 = vmatpush1.bf16.msra.mxu0 %v3148
        %3561 = vmatprep.subr.bf16.mxu0 %v3156
        %3562 = vmatpush1.bf16.msra.mxu0 %v3155
        %3563 = vmatprep.subr.bf16.mxu0 %v3163
        %3564 = vmatpush1.bf16.msra.mxu0 %v3162
        %3565 = vmatprep.subr.bf16.mxu0 %v3170
        %3566 = vmatpush1.bf16.msra.mxu0 %v3169
        %3567 = vmatprep.subr.bf16.mxu0 %v3177
        %3568 = vmatpush1.bf16.msra.mxu0 %v3176
        %3569 = vmatprep.subr.bf16.mxu0 %v3184
        %3570 = vmatpush1.bf16.msra.mxu0 %v3183
        %3571 = vmatprep.subr.bf16.mxu0 %v3191
        %3572 = vmatpush1.bf16.msra.mxu0 %v3190
        %3573 = vmatprep.subr.bf16.mxu0 %v3198
        %3574 = vmatpush1.bf16.msra.mxu0 %v3197
        %3575 = vmatprep.subr.bf16.mxu0 %v3205
        %3576 = vmatpush1.bf16.msra.mxu0 %v3204
        %3577 = vmatprep.mubr.bf16.mxu0 %v2563
        %3578 = vmatmul.mubr.bf16.gmra.mrb[0].mxu0 %v2562
        %v3579 = vpop.f32.mrb[0].mxu0
        %v3580 = vadd.f32 %v2727, %v3579
        %v3581 = vpop.f32.mrb[0].mxu0
        %v3582 = vadd.f32 %v2731, %v3581
        %v3583 = vpop.f32.mrb[0].mxu0
        %v3584 = vadd.f32 %v2727, %v3583
        %v3585 = vpop.f32.mrb[0].mxu0
        %v3586 = vadd.f32 %v2731, %v3585
        %3587 = vmatprep.mubr.bf16.mxu0 %v2565
        %3588 = vmatmul.mubr.bf16.gmra.mrb[0].mxu0 %v2564
        %v3589 = vpop.f32.mrb[0].mxu0
        %v3590 = vadd.f32 %v2727, %v3589
        %v3591 = vpop.f32.mrb[0].mxu0
        %v3592 = vadd.f32 %v2731, %v3591
        %v3593 = vpop.f32.mrb[0].mxu0
        %v3594 = vadd.f32 %v2727, %v3593
        %v3595 = vpop.f32.mrb[0].mxu0
        %v3596 = vadd.f32 %v2731, %v3595
        %3597 = vmatprep.mubr.bf16.mxu0 %v2567
        %3598 = vmatmul.mubr.bf16.gmra.mrb[0].mxu0 %v2566
        %v3599 = vpop.f32.mrb[0].mxu0
        %v3600 = vadd.f32 %v2727, %v3599
        %v3601 = vpop.f32.mrb[0].mxu0
        %v3602 = vadd.f32 %v2731, %v3601
        %v3603 = vpop.f32.mrb[0].mxu0
        %v3604 = vadd.f32 %v2727, %v3603
        %v3605 = vpop.f32.mrb[0].mxu0
        %v3606 = vadd.f32 %v2731, %v3605
        %3607 = vmatprep.mubr.bf16.mxu0 %v2569
        %3608 = vmatmul.mubr.bf16.gmra.mrb[0].mxu0 %v2568
        %v3609 = vpop.f32.mrb[0].mxu0
        %v3610 = vadd.f32 %v2727, %v3609
        %v3611 = vpop.f32.mrb[0].mxu0
        %v3612 = vadd.f32 %v2731, %v3611
        %v3613 = vpop.f32.mrb[0].mxu0
        %v3614 = vadd.f32 %v2727, %v3613
        %v3615 = vpop.f32.mrb[0].mxu0
        %v3616 = vadd.f32 %v2731, %v3615
        %3617 = vmatprep.mubr.bf16.mxu0 %v2571
        %3618 = vmatmul.mubr.bf16.gmra.mrb[0].mxu0 %v2570
        %v3619 = vpop.f32.mrb[0].mxu0
        %v3620 = vadd.f32 %v2727, %v3619
        %v3621 = vpop.f32.mrb[0].mxu0
        %v3622 = vadd.f32 %v2731, %v3621
        %v3623 = vpop.f32.mrb[0].mxu0
        %v3624 = vadd.f32 %v2727, %v3623
        %v3625 = vpop.f32.mrb[0].mxu0
        %v3626 = vadd.f32 %v2731, %v3625
        %3627 = vmatprep.mubr.bf16.mxu0 %v2573
        %3628 = vmatmul.mubr.bf16.gmra.mrb[0].mxu0 %v2572
        %v3629 = vpop.f32.mrb[0].mxu0
        %v3630 = vadd.f32 %v2727, %v3629
        %v3631 = vpop.f32.mrb[0].mxu0
        %v3632 = vadd.f32 %v2731, %v3631
        %v3633 = vpop.f32.mrb[0].mxu0
        %v3634 = vadd.f32 %v2727, %v3633
        %v3635 = vpop.f32.mrb[0].mxu0
        %v3636 = vadd.f32 %v2731, %v3635
        %3637 = vmatprep.mubr.bf16.mxu0 %v2575
        %3638 = vmatmul.mubr.bf16.gmra.mrb[0].mxu0 %v2574
        %v3639 = vpop.f32.mrb[0].mxu0
        %v3640 = vadd.f32 %v2727, %v3639
        %v3641 = vpop.f32.mrb[0].mxu0
        %v3642 = vadd.f32 %v2731, %v3641
        %v3643 = vpop.f32.mrb[0].mxu0
        %v3644 = vadd.f32 %v2727, %v3643
        %v3645 = vpop.f32.mrb[0].mxu0
        %v3646 = vadd.f32 %v2731, %v3645
        %3647 = vmatprep.mubr.bf16.mxu0 %v2577
        %3648 = vmatmul.mubr.bf16.gmra.mrb[0].mxu0 %v2576
        %v3649 = vpop.f32.mrb[0].mxu0
        %v3650 = vadd.f32 %v2727, %v3649
        %v3651 = vpop.f32.mrb[0].mxu0
        %v3652 = vadd.f32 %v2731, %v3651
        %v3653 = vpop.f32.mrb[0].mxu0
        %v3654 = vadd.f32 %v2727, %v3653
        %v3655 = vpop.f32.mrb[0].mxu0
        %v3656 = vadd.f32 %v2731, %v3655
        %3657 = vdwg.mxu0
        %3658 = vmatprep.subr.bf16.mxu0 0
        %3659 = vmatpush1.bf16.msra.mxu0 %v3101
        %3660 = vmatprep.subr.bf16.mxu0 0
        %3661 = vmatpush1.bf16.msra.mxu0 %v3108
        %3662 = vmatprep.subr.bf16.mxu0 0
        %3663 = vmatpush1.bf16.msra.mxu0 %v3115
        %3664 = vmatprep.subr.bf16.mxu0 0
        %3665 = vmatpush1.bf16.msra.mxu0 %v3122
        %3666 = vmatprep.subr.bf16.mxu0 0
        %3667 = vmatpush1.bf16.msra.mxu0 %v3129
        %3668 = vmatprep.subr.bf16.mxu0 0
        %3669 = vmatpush1.bf16.msra.mxu0 %v3136
        %3670 = vmatprep.subr.bf16.mxu0 0
        %3671 = vmatpush1.bf16.msra.mxu0 %v3143
        %3672 = vmatprep.subr.bf16.mxu0 0
        %3673 = vmatpush1.bf16.msra.mxu0 %v3150
        %3674 = vmatprep.subr.bf16.mxu0 0
        %3675 = vmatpush1.bf16.msra.mxu0 %v3157
        %3676 = vmatprep.subr.bf16.mxu0 0
        %3677 = vmatpush1.bf16.msra.mxu0 %v3164
        %3678 = vmatprep.subr.bf16.mxu0 0
        %3679 = vmatpush1.bf16.msra.mxu0 %v3171
        %3680 = vmatprep.subr.bf16.mxu0 0
        %3681 = vmatpush1.bf16.msra.mxu0 %v3178
        %3682 = vmatprep.subr.bf16.mxu0 0
        %3683 = vmatpush1.bf16.msra.mxu0 %v3185
        %3684 = vmatprep.subr.bf16.mxu0 0
        %3685 = vmatpush1.bf16.msra.mxu0 %v3192
        %3686 = vmatprep.subr.bf16.mxu0 0
        %3687 = vmatpush1.bf16.msra.mxu0 %v3199
        %3688 = vmatprep.subr.bf16.mxu0 0
        %3689 = vmatpush1.bf16.msra.mxu0 %v3206
        %3690 = vmatprep.mubr.bf16.mxu0 %v2563
        %3691 = vmatmul.mubr.bf16.gmra.mrb[0].mxu0 %v2562
        %v3692 = vpop.f32.mrb[0].mxu0
        %v3693 = vadd.f32 %v2735, %v3692
        %v3694 = vpop.f32.mrb[0].mxu0
        %v3695 = vpop.f32.mrb[0].mxu0
        %v3696 = vadd.f32 %v2735, %v3695
        %v3697 = vpop.f32.mrb[0].mxu0
        %3698 = vmatprep.mubr.bf16.mxu0 %v2565
        %3699 = vmatmul.mubr.bf16.gmra.mrb[0].mxu0 %v2564
        %v3700 = vpop.f32.mrb[0].mxu0
        %v3701 = vadd.f32 %v2735, %v3700
        %v3702 = vpop.f32.mrb[0].mxu0
        %v3703 = vpop.f32.mrb[0].mxu0
        %v3704 = vadd.f32 %v2735, %v3703
        %v3705 = vpop.f32.mrb[0].mxu0
        %3706 = vmatprep.mubr.bf16.mxu0 %v2567
        %3707 = vmatmul.mubr.bf16.gmra.mrb[0].mxu0 %v2566
        %v3708 = vpop.f32.mrb[0].mxu0
        %v3709 = vadd.f32 %v2735, %v3708
        %v3710 = vpop.f32.mrb[0].mxu0
        %v3711 = vpop.f32.mrb[0].mxu0
        %v3712 = vadd.f32 %v2735, %v3711
        %v3713 = vpop.f32.mrb[0].mxu0
        %3714 = vmatprep.mubr.bf16.mxu0 %v2569
        %3715 = vmatmul.mubr.bf16.gmra.mrb[0].mxu0 %v2568
        %v3716 = vpop.f32.mrb[0].mxu0
        %v3717 = vadd.f32 %v2735, %v3716
        %v3718 = vpop.f32.mrb[0].mxu0
        %v3719 = vpop.f32.mrb[0].mxu0
        %v3720 = vadd.f32 %v2735, %v3719
        %v3721 = vpop.f32.mrb[0].mxu0
        %3722 = vmatprep.mubr.bf16.mxu0 %v2571
        %3723 = vmatmul.mubr.bf16.gmra.mrb[0].mxu0 %v2570
        %v3724 = vpop.f32.mrb[0].mxu0
        %v3725 = vadd.f32 %v2735, %v3724
        %v3726 = vpop.f32.mrb[0].mxu0
        %v3727 = vpop.f32.mrb[0].mxu0
        %v3728 = vadd.f32 %v2735, %v3727
        %v3729 = vpop.f32.mrb[0].mxu0
        %3730 = vmatprep.mubr.bf16.mxu0 %v2573
        %3731 = vmatmul.mubr.bf16.gmra.mrb[0].mxu0 %v2572
        %v3732 = vpop.f32.mrb[0].mxu0
        %v3733 = vadd.f32 %v2735, %v3732
        %v3734 = vpop.f32.mrb[0].mxu0
        %v3735 = vpop.f32.mrb[0].mxu0
        %v3736 = vadd.f32 %v2735, %v3735
        %v3737 = vpop.f32.mrb[0].mxu0
        %3738 = vmatprep.mubr.bf16.mxu0 %v2575
        %3739 = vmatmul.mubr.bf16.gmra.mrb[0].mxu0 %v2574
        %v3740 = vpop.f32.mrb[0].mxu0
        %v3741 = vadd.f32 %v2735, %v3740
        %v3742 = vpop.f32.mrb[0].mxu0
        %v3743 = vpop.f32.mrb[0].mxu0
        %v3744 = vadd.f32 %v2735, %v3743
        %v3745 = vpop.f32.mrb[0].mxu0
        %3746 = vmatprep.mubr.bf16.mxu0 %v2577
        %3747 = vmatmul.mubr.bf16.gmra.mrb[0].mxu0 %v2576
        %v3748 = vpop.f32.mrb[0].mxu0
        %v3749 = vadd.f32 %v2735, %v3748
        %v3750 = vpop.f32.mrb[0].mxu0
        %v3751 = vpop.f32.mrb[0].mxu0
        %v3752 = vadd.f32 %v2735, %v3751
        %v3753 = vpop.f32.mrb[0].mxu0
        %3754 = vdwg.mxu0
        %v3755 = vxor.u32 %v3354, 2147483648
        %v3756 = vxor.u32 %v3356, 2147483648
        %v3757 = vxor.u32 %v3467, 2147483648
        %v3758 = vxor.u32 %v3469, 2147483648
        %v3759 = vxor.u32 %v3580, 2147483648
        %v3760 = vxor.u32 %v3582, 2147483648
        %v3761 = vxor.u32 %v3693, 2147483648
        %v3762 = vxor.u32 %v3358, 2147483648
        %v3763 = vxor.u32 %v3360, 2147483648
        %v3764 = vxor.u32 %v3471, 2147483648
        %v3765 = vxor.u32 %v3473, 2147483648
        %v3766 = vxor.u32 %v3584, 2147483648
        %v3767 = vxor.u32 %v3586, 2147483648
        %v3768 = vxor.u32 %v3696, 2147483648
        %v3769 = vxor.u32 %v3364, 2147483648
        %v3770 = vxor.u32 %v3366, 2147483648
        %v3771 = vxor.u32 %v3477, 2147483648
        %v3772 = vxor.u32 %v3479, 2147483648
        %v3773 = vxor.u32 %v3590, 2147483648
        %v3774 = vxor.u32 %v3592, 2147483648
        %v3775 = vxor.u32 %v3701, 2147483648
        %v3776 = vxor.u32 %v3368, 2147483648
        %v3777 = vxor.u32 %v3370, 2147483648
        %v3778 = vxor.u32 %v3481, 2147483648
        %v3779 = vxor.u32 %v3483, 2147483648
        %v3780 = vxor.u32 %v3594, 2147483648
        %v3781 = vxor.u32 %v3596, 2147483648
        %v3782 = vxor.u32 %v3704, 2147483648
        %v3783 = vxor.u32 %v3374, 2147483648
        %v3784 = vxor.u32 %v3376, 2147483648
        %v3785 = vxor.u32 %v3487, 2147483648
        %v3786 = vxor.u32 %v3489, 2147483648
        %v3787 = vxor.u32 %v3600, 2147483648
        %v3788 = vxor.u32 %v3602, 2147483648
        %v3789 = vxor.u32 %v3709, 2147483648
        %v3790 = vxor.u32 %v3378, 2147483648
        %v3791 = vxor.u32 %v3380, 2147483648
        %v3792 = vxor.u32 %v3491, 2147483648
        %v3793 = vxor.u32 %v3493, 2147483648
        %v3794 = vxor.u32 %v3604, 2147483648
        %v3795 = vxor.u32 %v3606, 2147483648
        %v3796 = vxor.u32 %v3712, 2147483648
        %v3797 = vxor.u32 %v3384, 2147483648
        %v3798 = vxor.u32 %v3386, 2147483648
        %v3799 = vxor.u32 %v3497, 2147483648
        %v3800 = vxor.u32 %v3499, 2147483648
        %v3801 = vxor.u32 %v3610, 2147483648
        %v3802 = vxor.u32 %v3612, 2147483648
        %v3803 = vxor.u32 %v3717, 2147483648
        %v3804 = vxor.u32 %v3388, 2147483648
        %v3805 = vxor.u32 %v3390, 2147483648
        %v3806 = vxor.u32 %v3501, 2147483648
        %v3807 = vxor.u32 %v3503, 2147483648
        %v3808 = vxor.u32 %v3614, 2147483648
        %v3809 = vxor.u32 %v3616, 2147483648
        %v3810 = vxor.u32 %v3720, 2147483648
        %v3811 = vxor.u32 %v3394, 2147483648
        %v3812 = vxor.u32 %v3396, 2147483648
        %v3813 = vxor.u32 %v3507, 2147483648
        %v3814 = vxor.u32 %v3509, 2147483648
        %v3815 = vxor.u32 %v3620, 2147483648
        %v3816 = vxor.u32 %v3622, 2147483648
        %v3817 = vxor.u32 %v3725, 2147483648
        %v3818 = vxor.u32 %v3398, 2147483648
        %v3819 = vxor.u32 %v3400, 2147483648
        %v3820 = vxor.u32 %v3511, 2147483648
        %v3821 = vxor.u32 %v3513, 2147483648
        %v3822 = vxor.u32 %v3624, 2147483648
        %v3823 = vxor.u32 %v3626, 2147483648
        %v3824 = vxor.u32 %v3728, 2147483648
        %v3825 = vxor.u32 %v3404, 2147483648
        %v3826 = vxor.u32 %v3406, 2147483648
        %v3827 = vxor.u32 %v3517, 2147483648
        %v3828 = vxor.u32 %v3519, 2147483648
        %v3829 = vxor.u32 %v3630, 2147483648
        %v3830 = vxor.u32 %v3632, 2147483648
        %v3831 = vxor.u32 %v3733, 2147483648
        %v3832 = vxor.u32 %v3408, 2147483648
        %v3833 = vxor.u32 %v3410, 2147483648
        %v3834 = vxor.u32 %v3521, 2147483648
        %v3835 = vxor.u32 %v3523, 2147483648
        %v3836 = vxor.u32 %v3634, 2147483648
        %v3837 = vxor.u32 %v3636, 2147483648
        %v3838 = vxor.u32 %v3736, 2147483648
        %v3839 = vxor.u32 %v3414, 2147483648
        %v3840 = vxor.u32 %v3416, 2147483648
        %v3841 = vxor.u32 %v3527, 2147483648
        %v3842 = vxor.u32 %v3529, 2147483648
        %v3843 = vxor.u32 %v3640, 2147483648
        %v3844 = vxor.u32 %v3642, 2147483648
        %v3845 = vxor.u32 %v3741, 2147483648
        %v3846 = vxor.u32 %v3418, 2147483648
        %v3847 = vxor.u32 %v3420, 2147483648
        %v3848 = vxor.u32 %v3531, 2147483648
        %v3849 = vxor.u32 %v3533, 2147483648
        %v3850 = vxor.u32 %v3644, 2147483648
        %v3851 = vxor.u32 %v3646, 2147483648
        %v3852 = vxor.u32 %v3744, 2147483648
        %v3853 = vxor.u32 %v3424, 2147483648
        %v3854 = vxor.u32 %v3426, 2147483648
        %v3855 = vxor.u32 %v3537, 2147483648
        %v3856 = vxor.u32 %v3539, 2147483648
        %v3857 = vxor.u32 %v3650, 2147483648
        %v3858 = vxor.u32 %v3652, 2147483648
        %v3859 = vxor.u32 %v3749, 2147483648
        %v3860 = vxor.u32 %v3428, 2147483648
        %v3861 = vxor.u32 %v3430, 2147483648
        %v3862 = vxor.u32 %v3541, 2147483648
        %v3863 = vxor.u32 %v3543, 2147483648
        %v3864 = vxor.u32 %v3654, 2147483648
        %v3865 = vxor.u32 %v3656, 2147483648
        %v3866 = vxor.u32 %v3752, 2147483648
        %v3867 = vmul.f32 %v3755, 1.442695
        %v3868 = vpow.pop %v3867
        %v3869 = vmul.f32 %v3756, 1.442695
        %v3870 = vpow.pop %v3869
        %v3871 = vmul.f32 %v3757, 1.442695
        %v3872 = vpow.pop %v3871
        %v3873 = vmul.f32 %v3758, 1.442695
        %v3874 = vpow.pop %v3873
        %v3875 = vmul.f32 %v3759, 1.442695
        %v3876 = vpow.pop %v3875
        %v3877 = vmul.f32 %v3760, 1.442695
        %v3878 = vpow.pop %v3877
        %v3879 = vmul.f32 %v3761, 1.442695
        %v3880 = vpow.pop %v3879
        %v3881 = vmul.f32 %v3762, 1.442695
        %v3882 = vpow.pop %v3881
        %v3883 = vmul.f32 %v3763, 1.442695
        %v3884 = vpow.pop %v3883
        %v3885 = vmul.f32 %v3764, 1.442695
        %v3886 = vpow.pop %v3885
        %v3887 = vmul.f32 %v3765, 1.442695
        %v3888 = vpow.pop %v3887
        %v3889 = vmul.f32 %v3766, 1.442695
        %v3890 = vpow.pop %v3889
        %v3891 = vmul.f32 %v3767, 1.442695
        %v3892 = vpow.pop %v3891
        %v3893 = vmul.f32 %v3768, 1.442695
        %v3894 = vpow.pop %v3893
        %v3895 = vmul.f32 %v3769, 1.442695
        %v3896 = vpow.pop %v3895
        %v3897 = vmul.f32 %v3770, 1.442695
        %v3898 = vpow.pop %v3897
        %v3899 = vmul.f32 %v3771, 1.442695
        %v3900 = vpow.pop %v3899
        %v3901 = vmul.f32 %v3772, 1.442695
        %v3902 = vpow.pop %v3901
        %v3903 = vmul.f32 %v3773, 1.442695
        %v3904 = vpow.pop %v3903
        %v3905 = vmul.f32 %v3774, 1.442695
        %v3906 = vpow.pop %v3905
        %v3907 = vmul.f32 %v3775, 1.442695
        %v3908 = vpow.pop %v3907
        %v3909 = vmul.f32 %v3776, 1.442695
        %v3910 = vpow.pop %v3909
        %v3911 = vmul.f32 %v3777, 1.442695
        %v3912 = vpow.pop %v3911
        %v3913 = vmul.f32 %v3778, 1.442695
        %v3914 = vpow.pop %v3913
        %v3915 = vmul.f32 %v3779, 1.442695
        %v3916 = vpow.pop %v3915
        %v3917 = vmul.f32 %v3780, 1.442695
        %v3918 = vpow.pop %v3917
        %v3919 = vmul.f32 %v3781, 1.442695
        %v3920 = vpow.pop %v3919
        %v3921 = vmul.f32 %v3782, 1.442695
        %v3922 = vpow.pop %v3921
        %v3923 = vmul.f32 %v3783, 1.442695
        %v3924 = vpow.pop %v3923
        %v3925 = vmul.f32 %v3784, 1.442695
        %v3926 = vpow.pop %v3925
        %v3927 = vmul.f32 %v3785, 1.442695
        %v3928 = vpow.pop %v3927
        %v3929 = vmul.f32 %v3786, 1.442695
        %v3930 = vpow.pop %v3929
        %v3931 = vmul.f32 %v3787, 1.442695
        %v3932 = vpow.pop %v3931
        %v3933 = vmul.f32 %v3788, 1.442695
        %v3934 = vpow.pop %v3933
        %v3935 = vmul.f32 %v3789, 1.442695
        %v3936 = vpow.pop %v3935
        %v3937 = vmul.f32 %v3790, 1.442695
        %v3938 = vpow.pop %v3937
        %v3939 = vmul.f32 %v3791, 1.442695
        %v3940 = vpow.pop %v3939
        %v3941 = vmul.f32 %v3792, 1.442695
        %v3942 = vpow.pop %v3941
        %v3943 = vmul.f32 %v3793, 1.442695
        %v3944 = vpow.pop %v3943
        %v3945 = vmul.f32 %v3794, 1.442695
        %v3946 = vpow.pop %v3945
        %v3947 = vmul.f32 %v3795, 1.442695
        %v3948 = vpow.pop %v3947
        %v3949 = vmul.f32 %v3796, 1.442695
        %v3950 = vpow.pop %v3949
        %v3951 = vmul.f32 %v3797, 1.442695
        %v3952 = vpow.pop %v3951
        %v3953 = vmul.f32 %v3798, 1.442695
        %v3954 = vpow.pop %v3953
        %v3955 = vmul.f32 %v3799, 1.442695
        %v3956 = vpow.pop %v3955
        %v3957 = vmul.f32 %v3800, 1.442695
        %v3958 = vpow.pop %v3957
        %v3959 = vmul.f32 %v3801, 1.442695
        %v3960 = vpow.pop %v3959
        %v3961 = vmul.f32 %v3802, 1.442695
        %v3962 = vpow.pop %v3961
        %v3963 = vmul.f32 %v3803, 1.442695
        %v3964 = vpow.pop %v3963
        %v3965 = vmul.f32 %v3804, 1.442695
        %v3966 = vpow.pop %v3965
        %v3967 = vmul.f32 %v3805, 1.442695
        %v3968 = vpow.pop %v3967
        %v3969 = vmul.f32 %v3806, 1.442695
        %v3970 = vpow.pop %v3969
        %v3971 = vmul.f32 %v3807, 1.442695
        %v3972 = vpow.pop %v3971
        %v3973 = vmul.f32 %v3808, 1.442695
        %v3974 = vpow.pop %v3973
        %v3975 = vmul.f32 %v3809, 1.442695
        %v3976 = vpow.pop %v3975
        %v3977 = vmul.f32 %v3810, 1.442695
        %v3978 = vpow.pop %v3977
        %v3979 = vmul.f32 %v3811, 1.442695
        %v3980 = vpow.pop %v3979
        %v3981 = vmul.f32 %v3812, 1.442695
        %v3982 = vpow.pop %v3981
        %v3983 = vmul.f32 %v3813, 1.442695
        %v3984 = vpow.pop %v3983
        %v3985 = vmul.f32 %v3814, 1.442695
        %v3986 = vpow.pop %v3985
        %v3987 = vmul.f32 %v3815, 1.442695
        %v3988 = vpow.pop %v3987
        %v3989 = vmul.f32 %v3816, 1.442695
        %v3990 = vpow.pop %v3989
        %v3991 = vmul.f32 %v3817, 1.442695
        %v3992 = vpow.pop %v3991
        %v3993 = vmul.f32 %v3818, 1.442695
        %v3994 = vpow.pop %v3993
        %v3995 = vmul.f32 %v3819, 1.442695
        %v3996 = vpow.pop %v3995
        %v3997 = vmul.f32 %v3820, 1.442695
        %v3998 = vpow.pop %v3997
        %v3999 = vmul.f32 %v3821, 1.442695
        %v4000 = vpow.pop %v3999
        %v4001 = vmul.f32 %v3822, 1.442695
        %v4002 = vpow.pop %v4001
        %v4003 = vmul.f32 %v3823, 1.442695
        %v4004 = vpow.pop %v4003
        %v4005 = vmul.f32 %v3824, 1.442695
        %v4006 = vpow.pop %v4005
        %v4007 = vmul.f32 %v3825, 1.442695
        %v4008 = vpow.pop %v4007
        %v4009 = vmul.f32 %v3826, 1.442695
        %v4010 = vpow.pop %v4009
        %v4011 = vmul.f32 %v3827, 1.442695
        %v4012 = vpow.pop %v4011
        %v4013 = vmul.f32 %v3828, 1.442695
        %v4014 = vpow.pop %v4013
        %v4015 = vmul.f32 %v3829, 1.442695
        %v4016 = vpow.pop %v4015
        %v4017 = vmul.f32 %v3830, 1.442695
        %v4018 = vpow.pop %v4017
        %v4019 = vmul.f32 %v3831, 1.442695
        %v4020 = vpow.pop %v4019
        %v4021 = vmul.f32 %v3832, 1.442695
        %v4022 = vpow.pop %v4021
        %v4023 = vmul.f32 %v3833, 1.442695
        %v4024 = vpow.pop %v4023
        %v4025 = vmul.f32 %v3834, 1.442695
        %v4026 = vpow.pop %v4025
        %v4027 = vmul.f32 %v3835, 1.442695
        %v4028 = vpow.pop %v4027
        %v4029 = vmul.f32 %v3836, 1.442695
        %v4030 = vpow.pop %v4029
        %v4031 = vmul.f32 %v3837, 1.442695
        %v4032 = vpow.pop %v4031
        %v4033 = vmul.f32 %v3838, 1.442695
        %v4034 = vpow.pop %v4033
        %v4035 = vmul.f32 %v3839, 1.442695
        %v4036 = vpow.pop %v4035
        %v4037 = vmul.f32 %v3840, 1.442695
        %v4038 = vpow.pop %v4037
        %v4039 = vmul.f32 %v3841, 1.442695
        %v4040 = vpow.pop %v4039
        %v4041 = vmul.f32 %v3842, 1.442695
        %v4042 = vpow.pop %v4041
        %v4043 = vmul.f32 %v3843, 1.442695
        %v4044 = vpow.pop %v4043
        %v4045 = vmul.f32 %v3844, 1.442695
        %v4046 = vpow.pop %v4045
        %v4047 = vmul.f32 %v3845, 1.442695
        %v4048 = vpow.pop %v4047
        %v4049 = vmul.f32 %v3846, 1.442695
        %v4050 = vpow.pop %v4049
        %v4051 = vmul.f32 %v3847, 1.442695
        %v4052 = vpow.pop %v4051
        %v4053 = vmul.f32 %v3848, 1.442695
        %v4054 = vpow.pop %v4053
        %v4055 = vmul.f32 %v3849, 1.442695
        %v4056 = vpow.pop %v4055
        %v4057 = vmul.f32 %v3850, 1.442695
        %v4058 = vpow.pop %v4057
        %v4059 = vmul.f32 %v3851, 1.442695
        %v4060 = vpow.pop %v4059
        %v4061 = vmul.f32 %v3852, 1.442695
        %v4062 = vpow.pop %v4061
        %v4063 = vmul.f32 %v3853, 1.442695
        %v4064 = vpow.pop %v4063
        %v4065 = vmul.f32 %v3854, 1.442695
        %v4066 = vpow.pop %v4065
        %v4067 = vmul.f32 %v3855, 1.442695
        %v4068 = vpow.pop %v4067
        %v4069 = vmul.f32 %v3856, 1.442695
        %v4070 = vpow.pop %v4069
        %v4071 = vmul.f32 %v3857, 1.442695
        %v4072 = vpow.pop %v4071
        %v4073 = vmul.f32 %v3858, 1.442695
        %v4074 = vpow.pop %v4073
        %v4075 = vmul.f32 %v3859, 1.442695
        %v4076 = vpow.pop %v4075
        %v4077 = vmul.f32 %v3860, 1.442695
        %v4078 = vpow.pop %v4077
        %v4079 = vmul.f32 %v3861, 1.442695
        %v4080 = vpow.pop %v4079
        %v4081 = vmul.f32 %v3862, 1.442695
        %v4082 = vpow.pop %v4081
        %v4083 = vmul.f32 %v3863, 1.442695
        %v4084 = vpow.pop %v4083
        %v4085 = vmul.f32 %v3864, 1.442695
        %v4086 = vpow.pop %v4085
        %v4087 = vmul.f32 %v3865, 1.442695
        %v4088 = vpow.pop %v4087
        %v4089 = vmul.f32 %v3866, 1.442695
        %v4090 = vpow.pop %v4089
        %v4091 = vadd.f32 %v3868, 1.0
        %v4092 = vadd.f32 %v3870, 1.0
        %v4093 = vadd.f32 %v3872, 1.0
        %v4094 = vadd.f32 %v3874, 1.0
        %v4095 = vadd.f32 %v3876, 1.0
        %v4096 = vadd.f32 %v3878, 1.0
        %v4097 = vadd.f32 %v3880, 1.0
        %v4098 = vadd.f32 %v3882, 1.0
        %v4099 = vadd.f32 %v3884, 1.0
        %v4100 = vadd.f32 %v3886, 1.0
        %v4101 = vadd.f32 %v3888, 1.0
        %v4102 = vadd.f32 %v3890, 1.0
        %v4103 = vadd.f32 %v3892, 1.0
        %v4104 = vadd.f32 %v3894, 1.0
        %v4105 = vadd.f32 %v3896, 1.0
        %v4106 = vadd.f32 %v3898, 1.0
        %v4107 = vadd.f32 %v3900, 1.0
        %v4108 = vadd.f32 %v3902, 1.0
        %v4109 = vadd.f32 %v3904, 1.0
        %v4110 = vadd.f32 %v3906, 1.0
        %v4111 = vadd.f32 %v3908, 1.0
        %v4112 = vadd.f32 %v3910, 1.0
        %v4113 = vadd.f32 %v3912, 1.0
        %v4114 = vadd.f32 %v3914, 1.0
        %v4115 = vadd.f32 %v3916, 1.0
        %v4116 = vadd.f32 %v3918, 1.0
        %v4117 = vadd.f32 %v3920, 1.0
        %v4118 = vadd.f32 %v3922, 1.0
        %v4119 = vadd.f32 %v3924, 1.0
        %v4120 = vadd.f32 %v3926, 1.0
        %v4121 = vadd.f32 %v3928, 1.0
        %v4122 = vadd.f32 %v3930, 1.0
        %v4123 = vadd.f32 %v3932, 1.0
        %v4124 = vadd.f32 %v3934, 1.0
        %v4125 = vadd.f32 %v3936, 1.0
        %v4126 = vadd.f32 %v3938, 1.0
        %v4127 = vadd.f32 %v3940, 1.0
        %v4128 = vadd.f32 %v3942, 1.0
        %v4129 = vadd.f32 %v3944, 1.0
        %v4130 = vadd.f32 %v3946, 1.0
        %v4131 = vadd.f32 %v3948, 1.0
        %v4132 = vadd.f32 %v3950, 1.0
        %v4133 = vadd.f32 %v3952, 1.0
        %v4134 = vadd.f32 %v3954, 1.0
        %v4135 = vadd.f32 %v3956, 1.0
        %v4136 = vadd.f32 %v3958, 1.0
        %v4137 = vadd.f32 %v3960, 1.0
        %v4138 = vadd.f32 %v3962, 1.0
        %v4139 = vadd.f32 %v3964, 1.0
        %v4140 = vadd.f32 %v3966, 1.0
        %v4141 = vadd.f32 %v3968, 1.0
        %v4142 = vadd.f32 %v3970, 1.0
        %v4143 = vadd.f32 %v3972, 1.0
        %v4144 = vadd.f32 %v3974, 1.0
        %v4145 = vadd.f32 %v3976, 1.0
        %v4146 = vadd.f32 %v3978, 1.0
        %v4147 = vadd.f32 %v3980, 1.0
        %v4148 = vadd.f32 %v3982, 1.0
        %v4149 = vadd.f32 %v3984, 1.0
        %v4150 = vadd.f32 %v3986, 1.0
        %v4151 = vadd.f32 %v3988, 1.0
        %v4152 = vadd.f32 %v3990, 1.0
        %v4153 = vadd.f32 %v3992, 1.0
        %v4154 = vadd.f32 %v3994, 1.0
        %v4155 = vadd.f32 %v3996, 1.0
        %v4156 = vadd.f32 %v3998, 1.0
        %v4157 = vadd.f32 %v4000, 1.0
        %v4158 = vadd.f32 %v4002, 1.0
        %v4159 = vadd.f32 %v4004, 1.0
        %v4160 = vadd.f32 %v4006, 1.0
        %v4161 = vadd.f32 %v4008, 1.0
        %v4162 = vadd.f32 %v4010, 1.0
        %v4163 = vadd.f32 %v4012, 1.0
        %v4164 = vadd.f32 %v4014, 1.0
        %v4165 = vadd.f32 %v4016, 1.0
        %v4166 = vadd.f32 %v4018, 1.0
        %v4167 = vadd.f32 %v4020, 1.0
        %v4168 = vadd.f32 %v4022, 1.0
        %v4169 = vadd.f32 %v4024, 1.0
        %v4170 = vadd.f32 %v4026, 1.0
        %v4171 = vadd.f32 %v4028, 1.0
        %v4172 = vadd.f32 %v4030, 1.0
        %v4173 = vadd.f32 %v4032, 1.0
        %v4174 = vadd.f32 %v4034, 1.0
        %v4175 = vadd.f32 %v4036, 1.0
        %v4176 = vadd.f32 %v4038, 1.0
        %v4177 = vadd.f32 %v4040, 1.0
        %v4178 = vadd.f32 %v4042, 1.0
        %v4179 = vadd.f32 %v4044, 1.0
        %v4180 = vadd.f32 %v4046, 1.0
        %v4181 = vadd.f32 %v4048, 1.0
        %v4182 = vadd.f32 %v4050, 1.0
        %v4183 = vadd.f32 %v4052, 1.0
        %v4184 = vadd.f32 %v4054, 1.0
        %v4185 = vadd.f32 %v4056, 1.0
        %v4186 = vadd.f32 %v4058, 1.0
        %v4187 = vadd.f32 %v4060, 1.0
        %v4188 = vadd.f32 %v4062, 1.0
        %v4189 = vadd.f32 %v4064, 1.0
        %v4190 = vadd.f32 %v4066, 1.0
        %v4191 = vadd.f32 %v4068, 1.0
        %v4192 = vadd.f32 %v4070, 1.0
        %v4193 = vadd.f32 %v4072, 1.0
        %v4194 = vadd.f32 %v4074, 1.0
        %v4195 = vadd.f32 %v4076, 1.0
        %v4196 = vadd.f32 %v4078, 1.0
        %v4197 = vadd.f32 %v4080, 1.0
        %v4198 = vadd.f32 %v4082, 1.0
        %v4199 = vadd.f32 %v4084, 1.0
        %v4200 = vadd.f32 %v4086, 1.0
        %v4201 = vadd.f32 %v4088, 1.0
        %v4202 = vadd.f32 %v4090, 1.0
        %v4203 = vrcp.pop %v4091
        %v4204 = vmul.f32 1.0, %v4203
        %v4205 = vrcp.pop %v4092
        %v4206 = vmul.f32 1.0, %v4205
        %v4207 = vrcp.pop %v4093
        %v4208 = vmul.f32 1.0, %v4207
        %v4209 = vrcp.pop %v4094
        %v4210 = vmul.f32 1.0, %v4209
        %v4211 = vrcp.pop %v4095
        %v4212 = vmul.f32 1.0, %v4211
        %v4213 = vrcp.pop %v4096
        %v4214 = vmul.f32 1.0, %v4213
        %v4215 = vrcp.pop %v4097
        %v4216 = vmul.f32 1.0, %v4215
        %v4217 = vrcp.pop %v4098
        %v4218 = vmul.f32 1.0, %v4217
        %v4219 = vrcp.pop %v4099
        %v4220 = vmul.f32 1.0, %v4219
        %v4221 = vrcp.pop %v4100
        %v4222 = vmul.f32 1.0, %v4221
        %v4223 = vrcp.pop %v4101
        %v4224 = vmul.f32 1.0, %v4223
        %v4225 = vrcp.pop %v4102
        %v4226 = vmul.f32 1.0, %v4225
        %v4227 = vrcp.pop %v4103
        %v4228 = vmul.f32 1.0, %v4227
        %v4229 = vrcp.pop %v4104
        %v4230 = vmul.f32 1.0, %v4229
        %v4231 = vrcp.pop %v4105
        %v4232 = vmul.f32 1.0, %v4231
        %v4233 = vrcp.pop %v4106
        %v4234 = vmul.f32 1.0, %v4233
        %v4235 = vrcp.pop %v4107
        %v4236 = vmul.f32 1.0, %v4235
        %v4237 = vrcp.pop %v4108
        %v4238 = vmul.f32 1.0, %v4237
        %v4239 = vrcp.pop %v4109
        %v4240 = vmul.f32 1.0, %v4239
        %v4241 = vrcp.pop %v4110
        %v4242 = vmul.f32 1.0, %v4241
        %v4243 = vrcp.pop %v4111
        %v4244 = vmul.f32 1.0, %v4243
        %v4245 = vrcp.pop %v4112
        %v4246 = vmul.f32 1.0, %v4245
        %v4247 = vrcp.pop %v4113
        %v4248 = vmul.f32 1.0, %v4247
        %v4249 = vrcp.pop %v4114
        %v4250 = vmul.f32 1.0, %v4249
        %v4251 = vrcp.pop %v4115
        %v4252 = vmul.f32 1.0, %v4251
        %v4253 = vrcp.pop %v4116
        %v4254 = vmul.f32 1.0, %v4253
        %v4255 = vrcp.pop %v4117
        %v4256 = vmul.f32 1.0, %v4255
        %v4257 = vrcp.pop %v4118
        %v4258 = vmul.f32 1.0, %v4257
        %v4259 = vrcp.pop %v4119
        %v4260 = vmul.f32 1.0, %v4259
        %v4261 = vrcp.pop %v4120
        %v4262 = vmul.f32 1.0, %v4261
        %v4263 = vrcp.pop %v4121
        %v4264 = vmul.f32 1.0, %v4263
        %v4265 = vrcp.pop %v4122
        %v4266 = vmul.f32 1.0, %v4265
        %v4267 = vrcp.pop %v4123
        %v4268 = vmul.f32 1.0, %v4267
        %v4269 = vrcp.pop %v4124
        %v4270 = vmul.f32 1.0, %v4269
        %v4271 = vrcp.pop %v4125
        %v4272 = vmul.f32 1.0, %v4271
        %v4273 = vrcp.pop %v4126
        %v4274 = vmul.f32 1.0, %v4273
        %v4275 = vrcp.pop %v4127
        %v4276 = vmul.f32 1.0, %v4275
        %v4277 = vrcp.pop %v4128
        %v4278 = vmul.f32 1.0, %v4277
        %v4279 = vrcp.pop %v4129
        %v4280 = vmul.f32 1.0, %v4279
        %v4281 = vrcp.pop %v4130
        %v4282 = vmul.f32 1.0, %v4281
        %v4283 = vrcp.pop %v4131
        %v4284 = vmul.f32 1.0, %v4283
        %v4285 = vrcp.pop %v4132
        %v4286 = vmul.f32 1.0, %v4285
        %v4287 = vrcp.pop %v4133
        %v4288 = vmul.f32 1.0, %v4287
        %v4289 = vrcp.pop %v4134
        %v4290 = vmul.f32 1.0, %v4289
        %v4291 = vrcp.pop %v4135
        %v4292 = vmul.f32 1.0, %v4291
        %v4293 = vrcp.pop %v4136
        %v4294 = vmul.f32 1.0, %v4293
        %v4295 = vrcp.pop %v4137
        %v4296 = vmul.f32 1.0, %v4295
        %v4297 = vrcp.pop %v4138
        %v4298 = vmul.f32 1.0, %v4297
        %v4299 = vrcp.pop %v4139
        %v4300 = vmul.f32 1.0, %v4299
        %v4301 = vrcp.pop %v4140
        %v4302 = vmul.f32 1.0, %v4301
        %v4303 = vrcp.pop %v4141
        %v4304 = vmul.f32 1.0, %v4303
        %v4305 = vrcp.pop %v4142
        %v4306 = vmul.f32 1.0, %v4305
        %v4307 = vrcp.pop %v4143
        %v4308 = vmul.f32 1.0, %v4307
        %v4309 = vrcp.pop %v4144
        %v4310 = vmul.f32 1.0, %v4309
        %v4311 = vrcp.pop %v4145
        %v4312 = vmul.f32 1.0, %v4311
        %v4313 = vrcp.pop %v4146
        %v4314 = vmul.f32 1.0, %v4313
        %v4315 = vrcp.pop %v4147
        %v4316 = vmul.f32 1.0, %v4315
        %v4317 = vrcp.pop %v4148
        %v4318 = vmul.f32 1.0, %v4317
        %v4319 = vrcp.pop %v4149
        %v4320 = vmul.f32 1.0, %v4319
        %v4321 = vrcp.pop %v4150
        %v4322 = vmul.f32 1.0, %v4321
        %v4323 = vrcp.pop %v4151
        %v4324 = vmul.f32 1.0, %v4323
        %v4325 = vrcp.pop %v4152
        %v4326 = vmul.f32 1.0, %v4325
        %v4327 = vrcp.pop %v4153
        %v4328 = vmul.f32 1.0, %v4327
        %v4329 = vrcp.pop %v4154
        %v4330 = vmul.f32 1.0, %v4329
        %v4331 = vrcp.pop %v4155
        %v4332 = vmul.f32 1.0, %v4331
        %v4333 = vrcp.pop %v4156
        %v4334 = vmul.f32 1.0, %v4333
        %v4335 = vrcp.pop %v4157
        %v4336 = vmul.f32 1.0, %v4335
        %v4337 = vrcp.pop %v4158
        %v4338 = vmul.f32 1.0, %v4337
        %v4339 = vrcp.pop %v4159
        %v4340 = vmul.f32 1.0, %v4339
        %v4341 = vrcp.pop %v4160
        %v4342 = vmul.f32 1.0, %v4341
        %v4343 = vrcp.pop %v4161
        %v4344 = vmul.f32 1.0, %v4343
        %v4345 = vrcp.pop %v4162
        %v4346 = vmul.f32 1.0, %v4345
        %v4347 = vrcp.pop %v4163
        %v4348 = vmul.f32 1.0, %v4347
        %v4349 = vrcp.pop %v4164
        %v4350 = vmul.f32 1.0, %v4349
        %v4351 = vrcp.pop %v4165
        %v4352 = vmul.f32 1.0, %v4351
        %v4353 = vrcp.pop %v4166
        %v4354 = vmul.f32 1.0, %v4353
        %v4355 = vrcp.pop %v4167
        %v4356 = vmul.f32 1.0, %v4355
        %v4357 = vrcp.pop %v4168
        %v4358 = vmul.f32 1.0, %v4357
        %v4359 = vrcp.pop %v4169
        %v4360 = vmul.f32 1.0, %v4359
        %v4361 = vrcp.pop %v4170
        %v4362 = vmul.f32 1.0, %v4361
        %v4363 = vrcp.pop %v4171
        %v4364 = vmul.f32 1.0, %v4363
        %v4365 = vrcp.pop %v4172
        %v4366 = vmul.f32 1.0, %v4365
        %v4367 = vrcp.pop %v4173
        %v4368 = vmul.f32 1.0, %v4367
        %v4369 = vrcp.pop %v4174
        %v4370 = vmul.f32 1.0, %v4369
        %v4371 = vrcp.pop %v4175
        %v4372 = vmul.f32 1.0, %v4371
        %v4373 = vrcp.pop %v4176
        %v4374 = vmul.f32 1.0, %v4373
        %v4375 = vrcp.pop %v4177
        %v4376 = vmul.f32 1.0, %v4375
        %v4377 = vrcp.pop %v4178
        %v4378 = vmul.f32 1.0, %v4377
        %v4379 = vrcp.pop %v4179
        %v4380 = vmul.f32 1.0, %v4379
        %v4381 = vrcp.pop %v4180
        %v4382 = vmul.f32 1.0, %v4381
        %v4383 = vrcp.pop %v4181
        %v4384 = vmul.f32 1.0, %v4383
        %v4385 = vrcp.pop %v4182
        %v4386 = vmul.f32 1.0, %v4385
        %v4387 = vrcp.pop %v4183
        %v4388 = vmul.f32 1.0, %v4387
        %v4389 = vrcp.pop %v4184
        %v4390 = vmul.f32 1.0, %v4389
        %v4391 = vrcp.pop %v4185
        %v4392 = vmul.f32 1.0, %v4391
        %v4393 = vrcp.pop %v4186
        %v4394 = vmul.f32 1.0, %v4393
        %v4395 = vrcp.pop %v4187
        %v4396 = vmul.f32 1.0, %v4395
        %v4397 = vrcp.pop %v4188
        %v4398 = vmul.f32 1.0, %v4397
        %v4399 = vrcp.pop %v4189
        %v4400 = vmul.f32 1.0, %v4399
        %v4401 = vrcp.pop %v4190
        %v4402 = vmul.f32 1.0, %v4401
        %v4403 = vrcp.pop %v4191
        %v4404 = vmul.f32 1.0, %v4403
        %v4405 = vrcp.pop %v4192
        %v4406 = vmul.f32 1.0, %v4405
        %v4407 = vrcp.pop %v4193
        %v4408 = vmul.f32 1.0, %v4407
        %v4409 = vrcp.pop %v4194
        %v4410 = vmul.f32 1.0, %v4409
        %v4411 = vrcp.pop %v4195
        %v4412 = vmul.f32 1.0, %v4411
        %v4413 = vrcp.pop %v4196
        %v4414 = vmul.f32 1.0, %v4413
        %v4415 = vrcp.pop %v4197
        %v4416 = vmul.f32 1.0, %v4415
        %v4417 = vrcp.pop %v4198
        %v4418 = vmul.f32 1.0, %v4417
        %v4419 = vrcp.pop %v4199
        %v4420 = vmul.f32 1.0, %v4419
        %v4421 = vrcp.pop %v4200
        %v4422 = vmul.f32 1.0, %v4421
        %v4423 = vrcp.pop %v4201
        %v4424 = vmul.f32 1.0, %v4423
        %v4425 = vrcp.pop %v4202
        %v4426 = vmul.f32 1.0, %v4425
        %4427 = vst [vmem:[%s514] sm:$0xff] %v4204
        %4428 = vst [vmem:[%s514 + $0x8] sm:$0xff] %v4206
        %4429 = vst [vmem:[%s514 + $0x10] sm:$0xff] %v4208
        %4430 = vst [vmem:[%s514 + $0x18] sm:$0xff] %v4210
        %4431 = vst [vmem:[%s514 + $0x20] sm:$0xff] %v4212
        %4432 = vst [vmem:[%s514 + $0x28] sm:$0xff] %v4214
        %4433 = vst [vmem:[%s514 + $0x30] sm:$0xff] %v4216
        %4434 = vst [vmem:[%s514 + $0x38] sm:$0xff] %v4218
        %4435 = vst [vmem:[%s514 + $0x40] sm:$0xff] %v4220
        %4436 = vst [vmem:[%s514 + $0x48] sm:$0xff] %v4222
        %4437 = vst [vmem:[%s514 + $0x50] sm:$0xff] %v4224
        %4438 = vst [vmem:[%s514 + $0x58] sm:$0xff] %v4226
        %4439 = vst [vmem:[%s514 + $0x60] sm:$0xff] %v4228
        %4440 = vst [vmem:[%s514 + $0x68] sm:$0xff] %v4230
        %4441 = vst [vmem:[%s514 + $0x70] sm:$0xff] %v4232
        %4442 = vst [vmem:[%s514 + $0x78] sm:$0xff] %v4234
        %4443 = vst [vmem:[%s514 + $0x80] sm:$0xff] %v4236
        %4444 = vst [vmem:[%s514 + $0x88] sm:$0xff] %v4238
        %4445 = vst [vmem:[%s514 + $0x90] sm:$0xff] %v4240
        %4446 = vst [vmem:[%s514 + $0x98] sm:$0xff] %v4242
        %4447 = vst [vmem:[%s514 + $0xa0] sm:$0xff] %v4244
        %4448 = vst [vmem:[%s514 + $0xa8] sm:$0xff] %v4246
        %4449 = vst [vmem:[%s514 + $0xb0] sm:$0xff] %v4248
        %4450 = vst [vmem:[%s514 + $0xb8] sm:$0xff] %v4250
        %4451 = vst [vmem:[%s514 + $0xc0] sm:$0xff] %v4252
        %4452 = vst [vmem:[%s514 + $0xc8] sm:$0xff] %v4254
        %4453 = vst [vmem:[%s514 + $0xd0] sm:$0xff] %v4256
        %4454 = vst [vmem:[%s514 + $0xd8] sm:$0xff] %v4258
        %4455 = vst [vmem:[%s514 + $0xe0] sm:$0xff] %v4260
        %4456 = vst [vmem:[%s514 + $0xe8] sm:$0xff] %v4262
        %4457 = vst [vmem:[%s514 + $0xf0] sm:$0xff] %v4264
        %4458 = vst [vmem:[%s514 + $0xf8] sm:$0xff] %v4266
        %4459 = vst [vmem:[%s514 + $0x100] sm:$0xff] %v4268
        %4460 = vst [vmem:[%s514 + $0x108] sm:$0xff] %v4270
        %4461 = vst [vmem:[%s514 + $0x110] sm:$0xff] %v4272
        %4462 = vst [vmem:[%s514 + $0x118] sm:$0xff] %v4274
        %4463 = vst [vmem:[%s514 + $0x120] sm:$0xff] %v4276
        %4464 = vst [vmem:[%s514 + $0x128] sm:$0xff] %v4278
        %4465 = vst [vmem:[%s514 + $0x130] sm:$0xff] %v4280
        %4466 = vst [vmem:[%s514 + $0x138] sm:$0xff] %v4282
        %4467 = vst [vmem:[%s514 + $0x140] sm:$0xff] %v4284
        %4468 = vst [vmem:[%s514 + $0x148] sm:$0xff] %v4286
        %4469 = vst [vmem:[%s514 + $0x150] sm:$0xff] %v4288
        %4470 = vst [vmem:[%s514 + $0x158] sm:$0xff] %v4290
        %4471 = vst [vmem:[%s514 + $0x160] sm:$0xff] %v4292
        %4472 = vst [vmem:[%s514 + $0x168] sm:$0xff] %v4294
        %4473 = vst [vmem:[%s514 + $0x170] sm:$0xff] %v4296
        %4474 = vst [vmem:[%s514 + $0x178] sm:$0xff] %v4298
        %4475 = vst [vmem:[%s514 + $0x180] sm:$0xff] %v4300
        %4476 = vst [vmem:[%s514 + $0x188] sm:$0xff] %v4302
        %4477 = vst [vmem:[%s514 + $0x190] sm:$0xff] %v4304
        %4478 = vst [vmem:[%s514 + $0x198] sm:$0xff] %v4306
        %4479 = vst [vmem:[%s514 + $0x1a0] sm:$0xff] %v4308
        %4480 = vst [vmem:[%s514 + $0x1a8] sm:$0xff] %v4310
        %4481 = vst [vmem:[%s514 + $0x1b0] sm:$0xff] %v4312
        %4482 = vst [vmem:[%s514 + $0x1b8] sm:$0xff] %v4314
        %4483 = vst [vmem:[%s514 + $0x1c0] sm:$0xff] %v4316
        %4484 = vst [vmem:[%s514 + $0x1c8] sm:$0xff] %v4318
        %4485 = vst [vmem:[%s514 + $0x1d0] sm:$0xff] %v4320
        %4486 = vst [vmem:[%s514 + $0x1d8] sm:$0xff] %v4322
        %4487 = vst [vmem:[%s514 + $0x1e0] sm:$0xff] %v4324
        %4488 = vst [vmem:[%s514 + $0x1e8] sm:$0xff] %v4326
        %4489 = vst [vmem:[%s514 + $0x1f0] sm:$0xff] %v4328
        %4490 = vst [vmem:[%s514 + $0x1f8] sm:$0xff] %v4330
        %4491 = vst [vmem:[%s514 + $0x200] sm:$0xff] %v4332
        %4492 = vst [vmem:[%s514 + $0x208] sm:$0xff] %v4334
        %4493 = vst [vmem:[%s514 + $0x210] sm:$0xff] %v4336
        %4494 = vst [vmem:[%s514 + $0x218] sm:$0xff] %v4338
        %4495 = vst [vmem:[%s514 + $0x220] sm:$0xff] %v4340
        %4496 = vst [vmem:[%s514 + $0x228] sm:$0xff] %v4342
        %4497 = vst [vmem:[%s514 + $0x230] sm:$0xff] %v4344
        %4498 = vst [vmem:[%s514 + $0x238] sm:$0xff] %v4346
        %4499 = vst [vmem:[%s514 + $0x240] sm:$0xff] %v4348
        %4500 = vst [vmem:[%s514 + $0x248] sm:$0xff] %v4350
        %4501 = vst [vmem:[%s514 + $0x250] sm:$0xff] %v4352
        %4502 = vst [vmem:[%s514 + $0x258] sm:$0xff] %v4354
        %4503 = vst [vmem:[%s514 + $0x260] sm:$0xff] %v4356
        %4504 = vst [vmem:[%s514 + $0x268] sm:$0xff] %v4358
        %4505 = vst [vmem:[%s514 + $0x270] sm:$0xff] %v4360
        %4506 = vst [vmem:[%s514 + $0x278] sm:$0xff] %v4362
        %4507 = vst [vmem:[%s514 + $0x280] sm:$0xff] %v4364
        %4508 = vst [vmem:[%s514 + $0x288] sm:$0xff] %v4366
        %4509 = vst [vmem:[%s514 + $0x290] sm:$0xff] %v4368
        %4510 = vst [vmem:[%s514 + $0x298] sm:$0xff] %v4370
        %4511 = vst [vmem:[%s514 + $0x2a0] sm:$0xff] %v4372
        %4512 = vst [vmem:[%s514 + $0x2a8] sm:$0xff] %v4374
        %4513 = vst [vmem:[%s514 + $0x2b0] sm:$0xff] %v4376
        %4514 = vst [vmem:[%s514 + $0x2b8] sm:$0xff] %v4378
        %4515 = vst [vmem:[%s514 + $0x2c0] sm:$0xff] %v4380
        %4516 = vst [vmem:[%s514 + $0x2c8] sm:$0xff] %v4382
        %4517 = vst [vmem:[%s514 + $0x2d0] sm:$0xff] %v4384
        %4518 = vst [vmem:[%s514 + $0x2d8] sm:$0xff] %v4386
        %4519 = vst [vmem:[%s514 + $0x2e0] sm:$0xff] %v4388
        %4520 = vst [vmem:[%s514 + $0x2e8] sm:$0xff] %v4390
        %4521 = vst [vmem:[%s514 + $0x2f0] sm:$0xff] %v4392
        %4522 = vst [vmem:[%s514 + $0x2f8] sm:$0xff] %v4394
        %4523 = vst [vmem:[%s514 + $0x300] sm:$0xff] %v4396
        %4524 = vst [vmem:[%s514 + $0x308] sm:$0xff] %v4398
        %4525 = vst [vmem:[%s514 + $0x310] sm:$0xff] %v4400
        %4526 = vst [vmem:[%s514 + $0x318] sm:$0xff] %v4402
        %4527 = vst [vmem:[%s514 + $0x320] sm:$0xff] %v4404
        %4528 = vst [vmem:[%s514 + $0x328] sm:$0xff] %v4406
        %4529 = vst [vmem:[%s514 + $0x330] sm:$0xff] %v4408
        %4530 = vst [vmem:[%s514 + $0x338] sm:$0xff] %v4410
        %4531 = vst [vmem:[%s514 + $0x340] sm:$0xff] %v4412
        %4532 = vst [vmem:[%s514 + $0x348] sm:$0xff] %v4414
        %4533 = vst [vmem:[%s514 + $0x350] sm:$0xff] %v4416
        %4534 = vst [vmem:[%s514 + $0x358] sm:$0xff] %v4418
        %4535 = vst [vmem:[%s514 + $0x360] sm:$0xff] %v4420
        %4536 = vst [vmem:[%s514 + $0x368] sm:$0xff] %v4422
        %4537 = vst [vmem:[%s514 + $0x370] sm:$0xff] %v4424
        %4538 = vst [vmem:[%s514 + $0x378] sm:$0xff] %v4426
        %s4539 = sand.u32 %s265, 1
        %s4540 = scalar_lea.sflag [#allocation4], %s4539
        %s4541 = sand.u32 %s265, 1
        %s4542 = smul.addr %s4541, 128
        %s4543 = scalar_lea.vmem [#allocation13], %s4542
        %s4544 = sand.u32 %s291, 1
        %s4545 = scalar_lea.sflag [#allocation15], %s4544
        %s4546 = sand.u32 %s291, 1
        %s4547 = smul.addr %s4546, 896
        %s4548 = scalar_lea.vmem [#allocation14], %s4547
        // Predicated region
        $region85: #{tpu_custom_call.1} parent=59 // pred_check
          %p4549 = pneg %p275
        $region86: #{tpu_custom_call.1} parent=59 // pred_check_branch
          %4551 = sbr.rel (%p4549) target = $region88
        $region87: #{tpu_custom_call.1} parent=59 // pred_region
          %s4552 = smul.u32 16, %s37
          %s4554 = ssub.s32 2048, 2048
          %4555 = vsyncadd %s4540, %s4554
          %s4556 = smul.addr %s4552, 128
          %s4557 = scalar_lea.hbm %s10, %s4556
          %s4558 = sshll.u32 %s4543, 4
          %s4559 = int_to_ptr.vmem [resolvable:$true] %s4558
          %4564 = dma.vmem_to_hbm [thread:$0]  %s4559, 2048, %s4557, %s4540, 128, 128, 8
        $region88: #{tpu_custom_call.1} parent=59 // pred_fallthru
          _
        // Predicated region
        $region89: #{tpu_custom_call.1} parent=59 // pred_check
          %p4565 = pneg %p301
        $region90: #{tpu_custom_call.1} parent=59 // pred_check_branch
          %4567 = sbr.rel (%p4565) target = $region92
        $region91: #{tpu_custom_call.1} parent=59 // pred_region
          %s4568 = smul.u32 16, %s37
          %s4570 = ssub.s32 14336, 14336
          %4571 = vsyncadd %s4545, %s4570
          %s4572 = smul.addr %s4568, 7
          %s4573 = smul.addr %s4572, 128
          %s4574 = scalar_lea.hbm %s11, %s4573
          %s4575 = sshll.u32 %s4548, 4
          %s4576 = int_to_ptr.vmem [resolvable:$true] %s4575
          %4581 = dma.vmem_to_hbm [thread:$0]  %s4576, 14336, %s4574, %s4545, 896, 896, 56
        $region92: #{tpu_custom_call.1} parent=59 // pred_fallthru
          _
      $region60: #{tpu_custom_call.1} parent=5 // pred_fallthru
        _
      %p4582 = scmp.le.s32.totalorder 2, %s32
      // Predicated region
      $region93: #{tpu_custom_call.1} parent=5 // pred_check
        %p4583 = pneg %p4582
      $region94: #{tpu_custom_call.1} parent=5 // pred_check_branch
        %4585 = sbr.rel (%p4583) target = $region96
      $region95: #{tpu_custom_call.1} parent=5 // pred_region
        %s4586 = ssub.s32 %s32, 2
        // Predicated region
        $region97: #{tpu_custom_call.1} parent=95 // pred_check
          %p4587 = pneg %p281
        $region98: #{tpu_custom_call.1} parent=95 // pred_check_branch
          %4589 = sbr.rel (%p4587) target = $region100
        $region99: #{tpu_custom_call.1} parent=95 // pred_region
          %s4590 = sand.u32 %s266, 1
          %s4591 = scalar_lea.sflag [#allocation4], %s4590
          %s4592 = sand.u32 %s266, 1
          %s4593 = smul.addr %s4592, 128
          %s4594 = scalar_lea.vmem [#allocation13], %s4593
          %4595 = dma.done %s4591, 2048
        $region100: #{tpu_custom_call.1} parent=95 // pred_fallthru
          _
        // Predicated region
        $region101: #{tpu_custom_call.1} parent=95 // pred_check
          %p4596 = pneg %p307
        $region102: #{tpu_custom_call.1} parent=95 // pred_check_branch
          %4598 = sbr.rel (%p4596) target = $region104
        $region103: #{tpu_custom_call.1} parent=95 // pred_region
          %s4599 = sand.u32 %s292, 1
          %s4600 = scalar_lea.sflag [#allocation15], %s4599
          %s4601 = sand.u32 %s292, 1
          %s4602 = smul.addr %s4601, 896
          %s4603 = scalar_lea.vmem [#allocation14], %s4602
          %4604 = dma.done %s4600, 14336
        $region104: #{tpu_custom_call.1} parent=95 // pred_fallthru
          _
      $region96: #{tpu_custom_call.1} parent=5 // pred_fallthru
        _
    $region6: #{tpu_custom_call.1} parent=1 // loop_footer
      %s36 = sadd.s32 1, %s32
    $region7: #{tpu_custom_call.1} parent=1 // loop_footer_branch
      %31 = sbr.rel target = $region3
    $region8: #{tpu_custom_call.1} parent=1 // loop_exit
      _
    %4605 = vsyncpa [#allocation3], 1
    %s4606 = scalar_lea.sflag [#allocation3], 1
    %4607 = vsyncpa %s4606, 1
    %4608 = vsyncpa [#allocation6], 1
    %s4609 = scalar_lea.sflag [#allocation6], 1
    %4610 = vsyncpa %s4609, 1
    %4611 = vsyncpa [#allocation9], 1
    %4612 = vsyncpa [#allocation12], 1
    %4613 = vsyncpa [#allocation4], 1
    %s4614 = scalar_lea.sflag [#allocation4], 1
    %4615 = vsyncpa %s4614, 1
    %4616 = vsyncpa [#allocation15], 1
    %s4617 = scalar_lea.sflag [#allocation15], 1
    %4618 = vsyncpa %s4617, 1

</llo_original>
